<compile_context>
chip_gen: v7x
topology: tpu7x:2x2x1
jax: 0.10.0
libtpu: 0.0.40
codegen_flags: <defaults>
</compile_context>

<pallas_src>
import functools

import numpy as np

import jax
import jax.numpy as jnp
from jax import lax
from jax.experimental import pallas as pl
from jax.experimental.pallas import tpu as pltpu


def _round_up(x, m):
    return (x + m - 1) // m * m


@functools.lru_cache(maxsize=None)
def _vmem_limit_bytes():
    # Per-generation scoped-VMEM budget: v5e/v6e have 128 MiB physical VMEM -> ~96 MiB;
    # v7x has 64 MiB -> ~44 MiB; conservative fallback if detection fails.
    try:
        kind = jax.devices()[0].device_kind.lower()
    except Exception:
        return 48 * 1024 * 1024
    if "v5" in kind or "v6" in kind:
        return 96 * 1024 * 1024
    return 44 * 1024 * 1024


# ----------------------------------------------------------------------------
# Fused per-layer edge kernel:
#   in-VMEM source gather -> edge-MLP -> block message -> one-hot MXU scatter-mean
#   -> fused node update (W-linear + mix-linear + add + ReLU) on the last grid step.
# Grid: edge tiles (reduction into the resident output -> "arbitrary").
# ----------------------------------------------------------------------------
def _edge_layer_kernel(*refs, act, has_w):
    if has_w:
        (src_ref, dst_ref, ea_ref, h_ref,
         w1_ref, b1_ref, w2_ref, b2_ref, bexp_ref, sel_ref,
         invdeg_ref, ww_ref, wb_ref, mw_ref, mb_ref, o_ref) = refs
    else:
        (src_ref, dst_ref, ea_ref, h_ref,
         w1_ref, b1_ref, w2_ref, b2_ref, bexp_ref, sel_ref,
         invdeg_ref, mw_ref, mb_ref, o_ref) = refs
        ww_ref = wb_ref = None

    step = pl.program_id(0)
    nsteps = pl.num_programs(0)
    edge_tile = ea_ref.shape[0]
    n_pad = h_ref.shape[0]

    @pl.when(step == 0)
    def _():
        o_ref[...] = jnp.zeros_like(o_ref)

    h = h_ref[...]                                               # (n_pad, d_in) resident

    # In-VMEM gather of source-node features: one-hot (edge_tile, n_pad) MXU matmul.
    # Padded edges carry src == n_pad, so their one-hot row is all zero -> xs row = 0.
    gat = (lax.broadcasted_iota(jnp.int32, (edge_tile, n_pad), 1)
           == src_ref[...]).astype(jnp.float32)                  # (TE, n_pad)
    xs = jnp.dot(gat, h, preferred_element_type=jnp.float32)     # (TE, d_in)

    # Fused edge-MLP + per-edge block-kernel message (all MXU, f32 accumulate).
    e1 = jnp.dot(ea_ref[...], w1_ref[...], preferred_element_type=jnp.float32) + b1_ref[...]
    e1 = jnp.maximum(e1, 0.0)                                    # ReLU
    k = jnp.dot(e1, w2_ref[...], preferred_element_type=jnp.float32) + b2_ref[...]
    # broadcast gathered (c, i) features to the (c, o, i) flattening in VMEM
    xs_exp = jnp.dot(xs, bexp_ref[...], preferred_element_type=jnp.float32)
    # elementwise product + sum over block-input index i -> (TE, d_out)
    msg = jnp.dot(k * xs_exp, sel_ref[...], preferred_element_type=jnp.float32)

    # Vectorized scatter-add over destination nodes: one-hot (n_pad, edge_tile) MXU
    # matmul accumulated directly into the resident output (no separate scratch).
    # Padded edges carry dst == n_pad -> their one-hot column is all zero.
    sca = (lax.broadcasted_iota(jnp.int32, (n_pad, edge_tile), 0)
           == dst_ref[...]).astype(jnp.float32)                  # (n_pad, TE)
    o_ref[...] += jnp.dot(sca, msg, preferred_element_type=jnp.float32)

    @pl.when(step == nsteps - 1)
    def _():
        z = o_ref[...] * invdeg_ref[...]                         # scatter-mean finalize
        mz = jnp.dot(z, mw_ref[...], preferred_element_type=jnp.float32) + mb_ref[...]
        if has_w:
            wx = jnp.dot(h, ww_ref[...], preferred_element_type=jnp.float32) + wb_ref[...]
        else:
            wx = h
        y = wx + mz
        if act:
            y = jnp.maximum(y, 0.0)
        o_ref[...] = y                                           # fused node update


def edge_layer(src_col, dst_row, ea_p, h, inv_deg, cp, w_lin, mix, *,
               d_out, edge_tile, act):
    e_pad, edge_dim = ea_p.shape
    n_pad, d_in = h.shape
    neurons = cp["w1"].shape[1]
    cbobi = cp["w2"].shape[1]
    grid = (e_pad // edge_tile,)
    has_w = w_lin is not None

    in_specs = [
        pl.BlockSpec((edge_tile, 1), lambda i: (i, 0)),           # src (column)
        pl.BlockSpec((1, edge_tile), lambda i: (0, i)),           # dst (row)
        pl.BlockSpec((edge_tile, edge_dim), lambda i: (i, 0)),    # edge attrs
        pl.BlockSpec((n_pad, d_in), lambda i: (0, 0)),            # node feats (resident)
        pl.BlockSpec((edge_dim, neurons), lambda i: (0, 0)),      # edge-MLP w1
        pl.BlockSpec((1, neurons), lambda i: (0, 0)),             # edge-MLP b1
        pl.BlockSpec((neurons, cbobi), lambda i: (0, 0)),         # edge-MLP w2
        pl.BlockSpec((1, cbobi), lambda i: (0, 0)),               # edge-MLP b2
        pl.BlockSpec((d_in, cbobi), lambda i: (0, 0)),            # block expand const
        pl.BlockSpec((cbobi, d_out), lambda i: (0, 0)),           # block select const
        pl.BlockSpec((n_pad, 1), lambda i: (0, 0)),               # 1/deg (resident)
    ]
    args = [src_col, dst_row, ea_p, h,
            cp["w1"], cp["b1"].reshape(1, -1),
            cp["w2"], cp["b2"].reshape(1, -1),
            cp["bexp"], cp["sel"], inv_deg]
    if has_w:
        ww, wb = w_lin
        in_specs += [pl.BlockSpec((d_in, d_out), lambda i: (0, 0)),
                     pl.BlockSpec((1, d_out), lambda i: (0, 0))]
        args += [ww, wb.reshape(1, -1)]
    mw, mb = mix
    in_specs += [pl.BlockSpec((d_out, d_out), lambda i: (0, 0)),
                 pl.BlockSpec((1, d_out), lambda i: (0, 0))]
    args += [mw, mb.reshape(1, -1)]

    kernel = functools.partial(_edge_layer_kernel, act=act, has_w=has_w)
    return pl.pallas_call(
        kernel,
        out_shape=jax.ShapeDtypeStruct((n_pad, d_out), jnp.float32),
        grid=grid,
        in_specs=in_specs,
        out_specs=pl.BlockSpec((n_pad, d_out), lambda i: (0, 0)),
        # Edge axis reduces into one shared resident output -> "arbitrary".
        # TODO(synk): on v7x, add a leading core-parallel axis with per-core partial
        # accumulators + combine to use the second TensorCore.
        compiler_params=pltpu.CompilerParams(
            dimension_semantics=("arbitrary",),
            vmem_limit_bytes=_vmem_limit_bytes(),
        ),
    )(*args)


# ----------------------------------------------------------------------------
# Lift linear (gridded over node row tiles, weights resident).
# ----------------------------------------------------------------------------
def _linear_kernel(x_ref, w_ref, b_ref, o_ref, *, act):
    y = jnp.dot(x_ref[...], w_ref[...], preferred_element_type=jnp.float32) + b_ref[...]
    if act:
        y = jnp.maximum(y, 0.0)
    o_ref[...] = y


def pallas_linear(x, w, b, act=False, row_tile=512):
    n, d_in = x.shape
    d_out = w.shape[1]
    tn = min(row_tile, n)
    assert n % tn == 0
    return pl.pallas_call(
        functools.partial(_linear_kernel, act=act),
        out_shape=jax.ShapeDtypeStruct((n, d_out), jnp.float32),
        grid=(n // tn,),
        in_specs=[
            pl.BlockSpec((tn, d_in), lambda i: (i, 0)),
            pl.BlockSpec((d_in, d_out), lambda i: (0, 0)),
            pl.BlockSpec((1, d_out), lambda i: (0, 0)),
        ],
        out_specs=pl.BlockSpec((tn, d_out), lambda i: (i, 0)),
        compiler_params=pltpu.CompilerParams(
            dimension_semantics=("parallel",),
            vmem_limit_bytes=_vmem_limit_bytes()),
    )(x, w, b.reshape(1, -1))


# ----------------------------------------------------------------------------
# Fused PatchGNP head: proj linear + masked global-mean-pool (node-tiled, tiny
# resident (G, v_dim) accumulator) + 2-layer MLP on the last grid step.
# ----------------------------------------------------------------------------
def _pool_head_kernel(batch_ref, wvec_ref, h_ref, pw_ref, pb_ref,
                      h1w_ref, h1b_ref, h2w_ref, h2b_ref, o_ref, acc_ref):
    step = pl.program_id(0)
    nsteps = pl.num_programs(0)
    node_tile = h_ref.shape[0]
    num_graphs = acc_ref.shape[0]

    @pl.when(step == 0)
    def _():
        acc_ref[...] = jnp.zeros_like(acc_ref)

    proj = jnp.dot(h_ref[...], pw_ref[...], preferred_element_type=jnp.float32) + pb_ref[...]
    # (G, node_tile) per-graph one-hot weighted by mask/count -> weighted segment sum.
    onehot = (lax.broadcasted_iota(jnp.int32, (num_graphs, node_tile), 0)
              == batch_ref[...]).astype(jnp.float32) * wvec_ref[...]
    acc_ref[...] += jnp.dot(onehot, proj, preferred_element_type=jnp.float32)

    @pl.when(step == nsteps - 1)
    def _():
        hh = jnp.dot(acc_ref[...], h1w_ref[...], preferred_element_type=jnp.float32) + h1b_ref[...]
        hh = jnp.maximum(hh, 0.0)
        o_ref[...] = jnp.dot(hh, h2w_ref[...], preferred_element_type=jnp.float32) + h2b_ref[...]


def pool_head(batch_row, wvec, h, pw, pb, h1w, h1b, h2w, h2b, *, num_graphs, node_tile):
    n_pad, d_last = h.shape
    v_dim = pw.shape[1]
    hid = h1w.shape[1]
    out_dim = h2w.shape[1]
    assert n_pad % node_tile == 0
    return pl.pallas_call(
        _pool_head_kernel,
        out_shape=jax.ShapeDtypeStruct((num_graphs, out_dim), jnp.float32),
        grid=(n_pad // node_tile,),
        in_specs=[
            pl.BlockSpec((1, node_tile), lambda i: (0, i)),        # batch ids
            pl.BlockSpec((1, node_tile), lambda i: (0, i)),        # mask/count weights
            pl.BlockSpec((node_tile, d_last), lambda i: (i, 0)),   # node feats tile
            pl.BlockSpec((d_last, v_dim), lambda i: (0, 0)),       # proj w
            pl.BlockSpec((1, v_dim), lambda i: (0, 0)),            # proj b
            pl.BlockSpec((v_dim, hid), lambda i: (0, 0)),          # head1 w
            pl.BlockSpec((1, hid), lambda i: (0, 0)),              # head1 b
            pl.BlockSpec((hid, out_dim), lambda i: (0, 0)),        # head2 w
            pl.BlockSpec((1, out_dim), lambda i: (0, 0)),          # head2 b
        ],
        out_specs=pl.BlockSpec((num_graphs, out_dim), lambda i: (0, 0)),
        scratch_shapes=[pltpu.VMEM((num_graphs, v_dim), jnp.float32)],
        compiler_params=pltpu.CompilerParams(
            dimension_semantics=("arbitrary",),
            vmem_limit_bytes=_vmem_limit_bytes()),
    )(batch_row, wvec, h, pw, pb.reshape(1, -1),
      h1w, h1b.reshape(1, -1), h2w, h2b.reshape(1, -1))


# ----------------------------------------------------------------------------
# Parameter init (deterministic, mimics nn.Linear default init)
# ----------------------------------------------------------------------------
def init_linear(key, d_in, d_out):
    kw, kb = jax.random.split(key)
    bound = 1.0 / float(d_in) ** 0.5
    w = jax.random.uniform(kw, (d_in, d_out), jnp.float32, -bound, bound)
    b = jax.random.uniform(kb, (d_out,), jnp.float32, -bound, bound)
    return w, b


def _make_block_constants(channels, bi, bo):
    # bexp expands (c, i) source features to the [c, o, i] flattening (broadcast over o)
    r = np.arange(channels * bi)
    q = np.arange(channels * bo * bi)
    rc, ri = r // bi, r % bi
    qc, qi = q // (bo * bi), q % bi
    bexp = ((rc[:, None] == qc[None, :]) & (ri[:, None] == qi[None, :])).astype(np.float32)
    # sel sums the elementwise product over i for each (c, o)
    sel = np.repeat(np.eye(channels * bo, dtype=np.float32), bi, axis=0)
    return jnp.asarray(bexp), jnp.asarray(sel)


def init_patch_gnp(key, node_dim, edge_dim, v_dim, out_dim, layers, channels, neurons):
    depth = len(layers) - 1
    keys = jax.random.split(key, 4 + 4 * depth)
    ki = iter(keys)
    params = {}
    # inner BlockGNP
    params["lift_w"], params["lift_b"] = init_linear(next(ki), node_dim, layers[0])
    params["proj_w"], params["proj_b"] = init_linear(next(ki), layers[-1], v_dim)
    # PatchGNP head MLP: Linear(v, 2v) -> ReLU -> Linear(2v, out)
    params["head1_w"], params["head1_b"] = init_linear(next(ki), v_dim, 2 * v_dim)
    params["head2_w"], params["head2_b"] = init_linear(next(ki), 2 * v_dim, out_dim)
    params["W"], params["mix"], params["convs"] = [], [], []
    for d_in, d_out in zip(layers[:-1], layers[1:]):
        params["W"].append(None if d_in == d_out else init_linear(next(ki), d_in, d_out))
        params["mix"].append(init_linear(next(ki), d_out, d_out))
        bi, bo = d_in // channels, d_out // channels
        w1, b1 = init_linear(next(ki), edge_dim, neurons)
        w2, b2 = init_linear(next(ki), neurons, channels * bo * bi)
        bexp, sel = _make_block_constants(channels, bi, bo)   # hoisted constants
        params["convs"].append({"w1": w1, "b1": b1, "w2": w2, "b2": b2,
                                "bexp": bexp, "sel": sel})
    return params


# ----------------------------------------------------------------------------
# PatchGNP forward (jit-ed; Pallas kernels inside)
# ----------------------------------------------------------------------------
@functools.partial(jax.jit, static_argnames=("layers", "channels", "num_graphs",
                                              "edge_tile_max", "node_tile_max"))
def patch_gnp_forward(params, x, edge_index, edge_attr, mask, batch, *,
                      layers, channels, num_graphs,
                      edge_tile_max=1024, node_tile_max=512):
    del channels  # block structure is baked into the precomputed bexp/sel constants
    n = x.shape[0]
    e = edge_attr.shape[0]
    depth = len(layers) - 1
    src, dst = edge_index[0].astype(jnp.int32), edge_index[1].astype(jnp.int32)

    # static tile / padding sizes (edge tiles lane-aligned to 128)
    node_tile = min(node_tile_max, _round_up(n, 8))
    n_pad = _round_up(n, node_tile)
    edge_tile = min(edge_tile_max, _round_up(e, 128))
    e_pad = _round_up(e, edge_tile)
    assert edge_tile % 128 == 0 or edge_tile == e_pad

    x_p = jnp.pad(x, ((0, n_pad - n), (0, 0)))
    # padded edges get an out-of-range index (n_pad) so they miss every one-hot row
    src_col = jnp.pad(src, (0, e_pad - e), constant_values=n_pad).reshape(e_pad, 1)
    dst_row = jnp.pad(dst, (0, e_pad - e), constant_values=n_pad).reshape(1, e_pad)
    ea_p = jnp.pad(edge_attr, ((0, e_pad - e), (0, 0)))

    # scatter-mean normalization (1/deg, clamped at 1), computed once and reused
    deg = jnp.zeros((n_pad,), jnp.float32).at[dst].add(1.0)
    inv_deg = (1.0 / jnp.maximum(deg, 1.0)).reshape(n_pad, 1)

    # ---- inner model (BlockGNP): lift -> fused (edge conv + node update) layers ----
    h = pallas_linear(x_p, params["lift_w"], params["lift_b"], act=False,
                      row_tile=node_tile)
    for i in range(depth):
        h = edge_layer(src_col, dst_row, ea_p, h, inv_deg,
                       params["convs"][i], params["W"][i], params["mix"][i],
                       d_out=layers[i + 1], edge_tile=edge_tile,
                       act=(i < depth - 1))

    # ---- PatchGNP head: proj + masked global mean pool + MLP (one fused kernel) ----
    batch_p = jnp.pad(batch.astype(jnp.int32), (0, n_pad - n))
    mask_f = jnp.pad(mask.astype(jnp.float32), (0, n_pad - n))
    cnt = jnp.zeros((num_graphs,), jnp.float32).at[batch].add(mask.astype(jnp.float32))
    wvec = (mask_f / jnp.maximum(cnt, 1.0)[batch_p]).reshape(1, n_pad)
    batch_row = batch_p.reshape(1, n_pad)

    # node tile for the (1, node_tile) index rows must be lane-aligned or full
    pool_tile = node_tile if (node_tile % 128 == 0 or node_tile == n_pad) else n_pad
    return pool_head(batch_row, wvec, h,
                     params["proj_w"], params["proj_b"],
                     params["head1_w"], params["head1_b"],
                     params["head2_w"], params["head2_b"],
                     num_graphs=num_graphs, node_tile=pool_tile)


# ----------------------------------------------------------------------------
# Pure-JAX reference (same math, no Pallas)
# ----------------------------------------------------------------------------
def _ref_forward(params, x, edge_index, edge_attr, mask, batch, *,
                 layers, channels, num_graphs):
    n = x.shape[0]
    src, dst = edge_index[0], edge_index[1]
    depth = len(layers) - 1
    h = x @ params["lift_w"] + params["lift_b"]
    for i in range(depth):
        d_in, d_out = layers[i], layers[i + 1]
        bi, bo = d_in // channels, d_out // channels
        cp = params["convs"][i]
        eh = jnp.maximum(edge_attr @ cp["w1"] + cp["b1"], 0.0)
        k = (eh @ cp["w2"] + cp["b2"]).reshape(-1, channels, bo, bi)
        xs = h[src].reshape(-1, channels, bi)
        msg = jnp.einsum("ecoi,eci->eco", k, xs).reshape(-1, channels * bo)
        z = jnp.zeros((n, d_out), jnp.float32).at[dst].add(msg)
        deg = jnp.zeros((n,), jnp.float32).at[dst].add(1.0)
        z = z / jnp.maximum(deg, 1.0)[:, None]
        mz = z @ params["mix"][i][0] + params["mix"][i][1]
        wx = h if params["W"][i] is None else h @ params["W"][i][0] + params["W"][i][1]
        h = wx + mz
        if i < depth - 1:
            h = jnp.maximum(h, 0.0)
    h = h @ params["proj_w"] + params["proj_b"]
    hm = h * mask[:, None].astype(jnp.float32)
    sums = jnp.zeros((num_graphs, h.shape[1]), jnp.float32).at[batch].add(hm)
    cnts = jnp.zeros((num_graphs,), jnp.float32).at[batch].add(mask.astype(jnp.float32))
    pooled = sums / jnp.maximum(cnts, 1.0)[:, None]
    hh = jnp.maximum(pooled @ params["head1_w"] + params["head1_b"], 0.0)
    return hh @ params["head2_w"] + params["head2_b"]


# ----------------------------------------------------------------------------
if __name__ == "__main__":
    key = jax.random.PRNGKey(0)
    k_param, k_x, k_e0, k_e1, k_ea, k_m = jax.random.split(key, 6)

    # model config (small, consistent with the module)
    node_dim, edge_dim = 8, 4
    layers = (16, 32, 32)          # inner BlockGNP widths; W[0]=Linear, W[1]=Identity
    channels, neurons = 4, 128     # neurons multiple of 128 (MXU-friendly lane width)
    v_dim, out_dim = 16, 8         # model.out_dim (v_dim) and PatchGNP out_dim
    num_graphs = 2
    n_per_graph, e_per_graph = 32, 128
    N, E = num_graphs * n_per_graph, num_graphs * e_per_graph

    params = init_patch_gnp(k_param, node_dim, edge_dim, v_dim, out_dim,
                            layers, channels, neurons)

    x = jax.random.normal(k_x, (N, node_dim), jnp.float32)
    # per-graph edge lists (no cross-graph edges), concatenated
    ei = [jax.random.randint(kg, (2, e_per_graph), g * n_per_graph,
                             (g + 1) * n_per_graph, dtype=jnp.int32)
          for g, kg in enumerate((k_e0, k_e1))]
    edge_index = jnp.concatenate(ei, axis=1)
    edge_attr = jax.random.normal(k_ea, (E, edge_dim), jnp.float32)
    batch = jnp.repeat(jnp.arange(num_graphs, dtype=jnp.int32), n_per_graph)
    mask = jax.random.bernoulli(k_m, 0.7, (N,))

    # small edge tile here on purpose so the multi-step accumulate grid is exercised;
    # use the 1024 default for production-sized graphs.
    out = patch_gnp_forward(params, x, edge_index, edge_attr, mask, batch,
                            layers=layers, channels=channels, num_graphs=num_graphs,
                            edge_tile_max=128, node_tile_max=512)
    out = jax.block_until_ready(out)
    assert out.shape == (num_graphs, out_dim)

    ref = _ref_forward(params, x, edge_index, edge_attr, mask, batch,
                       layers=layers, channels=channels, num_graphs=num_graphs)
    assert jnp.allclose(out, ref, rtol=1e-3, atol=1e-3), (
        "mismatch vs JAX reference: max abs diff = "
        f"{jnp.max(jnp.abs(out - ref))}")

    print("KERNEL_OK")
</pallas_src>

<mosaic_0001>
module attributes {stable_mosaic.version = 11 : i64} {
  func.func private @main(%arg0: i32) attributes {dimension_semantics = [#tpu.dimension_semantics<core_parallel>], iteration_bounds = array<i64: 2>, tpu.core_type = #tpu.core_type<sc_scalar_subcore>, window_params = []} {
    return
  }
}

module attributes {stable_mosaic.version = 11 : i64} {
  func.func private @main(%arg0: i32) attributes {dimension_semantics = [#tpu.dimension_semantics<core_parallel>], iteration_bounds = array<i64: 2>, tpu.core_type = #tpu.core_type<sc_scalar_subcore>, window_params = []} {
    return
  }
}

module attributes {stable_mosaic.version = 11 : i64} {
  func.func @_linear_kernel(%arg0: i32, %arg1: memref<64x8xf32, #tpu.memory_space<vmem>>, %arg2: memref<8x16xf32, #tpu.memory_space<vmem>>, %arg3: memref<1x16xf32, #tpu.memory_space<vmem>>, %arg4: memref<64x16xf32, #tpu.memory_space<vmem>>) attributes {dimension_semantics = [#tpu.dimension_semantics<parallel>], iteration_bounds = array<i64: 1>, scalar_prefetch = 0 : i64, scratch_operands = 0 : i64, tpu.core_type = #tpu.core_type<tc>, window_params = [{transform_indices = @transform_0, window_bounds = array<i64: 64, 8>}, {pipeline_mode = #tpu.pipeline_mode<synchronous>, transform_indices = @transform_1, window_bounds = array<i64: 8, 16>}, {pipeline_mode = #tpu.pipeline_mode<synchronous>, transform_indices = @transform_2, window_bounds = array<i64: 1, 16>}, {transform_indices = @transform_3, window_bounds = array<i64: 64, 16>}]} {
    %c0 = arith.constant 0 : index
    %c0_0 = arith.constant 0 : index
    %0 = vector.load %arg1[%c0, %c0_0] : memref<64x8xf32, #tpu.memory_space<vmem>>, vector<64x8xf32>
    %c0_1 = arith.constant 0 : index
    %c0_2 = arith.constant 0 : index
    %1 = vector.load %arg2[%c0_1, %c0_2] : memref<8x16xf32, #tpu.memory_space<vmem>>, vector<8x16xf32>
    %cst = arith.constant dense<0.000000e+00> : vector<64x16xf32>
    %2 = tpu.matmul %0, %1, %cst {dimension_numbers = #tpu.dot_dimension_numbers<[1], [0], [0], [1], [0, 0, 1, 1], [], []>} : vector<64x8xf32>, vector<8x16xf32>, vector<64x16xf32> -> vector<64x16xf32>
    %c0_3 = arith.constant 0 : index
    %c0_4 = arith.constant 0 : index
    %3 = vector.load %arg3[%c0_3, %c0_4] : memref<1x16xf32, #tpu.memory_space<vmem>>, vector<1x16xf32>
    %4 = vector.broadcast %3 : vector<1x16xf32> to vector<64x16xf32>
    %5 = arith.addf %2, %4 : vector<64x16xf32>
    %c0_5 = arith.constant 0 : index
    %c0_6 = arith.constant 0 : index
    %6 = vector.load %arg4[%c0_5, %c0_6] : memref<64x16xf32, #tpu.memory_space<vmem>>, vector<64x16xf32>
    tpu.vector_store %arg4[%c0_5, %c0_6], %5 {strides = array<i32>} : memref<64x16xf32, #tpu.memory_space<vmem>>, vector<64x16xf32>,
    return
  }
  func.func @transform_0(%arg0: i32) -> (i32, i32) {
    %c0_i32 = arith.constant 0 : i32
    %c0_i32_0 = arith.constant 0 : i32
    return %arg0, %c0_i32 : i32, i32
  }
  func.func @transform_1(%arg0: i32) -> (i32, i32) {
    %c0_i32 = arith.constant 0 : i32
    %c0_i32_0 = arith.constant 0 : i32
    %c0_i32_1 = arith.constant 0 : i32
    return %c0_i32, %c0_i32_0 : i32, i32
  }
  func.func @transform_2(%arg0: i32) -> (i32, i32) {
    %c0_i32 = arith.constant 0 : i32
    %c0_i32_0 = arith.constant 0 : i32
    %c0_i32_1 = arith.constant 0 : i32
    return %c0_i32, %c0_i32_0 : i32, i32
  }
  func.func @transform_3(%arg0: i32) -> (i32, i32) {
    %c0_i32 = arith.constant 0 : i32
    %c0_i32_0 = arith.constant 0 : i32
    return %arg0, %c0_i32 : i32, i32
  }
}

module attributes {stable_mosaic.version = 11 : i64} {
  func.func @_edge_layer_kernel(%arg0: i32, %arg1: memref<128x1xi32, #tpu.memory_space<vmem>>, %arg2: memref<1x128xi32, #tpu.memory_space<vmem>>, %arg3: memref<128x4xf32, #tpu.memory_space<vmem>>, %arg4: memref<64x16xf32, #tpu.memory_space<vmem>>, %arg5: memref<4x128xf32, #tpu.memory_space<vmem>>, %arg6: memref<1x128xf32, #tpu.memory_space<vmem>>, %arg7: memref<128x128xf32, #tpu.memory_space<vmem>>, %arg8: memref<1x128xf32, #tpu.memory_space<vmem>>, %arg9: memref<16x128xf32, #tpu.memory_space<vmem>>, %arg10: memref<128x32xf32, #tpu.memory_space<vmem>>, %arg11: memref<64x1xf32, #tpu.memory_space<vmem>>, %arg12: memref<16x32xf32, #tpu.memory_space<vmem>>, %arg13: memref<1x32xf32, #tpu.memory_space<vmem>>, %arg14: memref<32x32xf32, #tpu.memory_space<vmem>>, %arg15: memref<1x32xf32, #tpu.memory_space<vmem>>, %arg16: memref<64x32xf32, #tpu.memory_space<vmem>>) attributes {dimension_semantics = [#tpu.dimension_semantics<arbitrary>], iteration_bounds = array<i64: 2>, scalar_prefetch = 0 : i64, scratch_operands = 0 : i64, tpu.core_type = #tpu.core_type<tc>, window_params = [{transform_indices = @transform_0, window_bounds = array<i64: 128, 1>}, {transform_indices = @transform_1, window_bounds = array<i64: 1, 128>}, {transform_indices = @transform_2, window_bounds = array<i64: 128, 4>}, {pipeline_mode = #tpu.pipeline_mode<synchronous>, transform_indices = @transform_3, window_bounds = array<i64: 64, 16>}, {pipeline_mode = #tpu.pipeline_mode<synchronous>, transform_indices = @transform_4, window_bounds = array<i64: 4, 128>}, {pipeline_mode = #tpu.pipeline_mode<synchronous>, transform_indices = @transform_5, window_bounds = array<i64: 1, 128>}, {pipeline_mode = #tpu.pipeline_mode<synchronous>, transform_indices = @transform_6, window_bounds = array<i64: 128, 128>}, {pipeline_mode = #tpu.pipeline_mode<synchronous>, transform_indices = @transform_7, window_bounds = array<i64: 1, 128>}, {pipeline_mode = #tpu.pipeline_mode<synchronous>, transform_indices = @transform_8, window_bounds = array<i64: 16, 128>}, {pipeline_mode = #tpu.pipeline_mode<synchronous>, transform_indices = @transform_9, window_bounds = array<i64: 128, 32>}, {pipeline_mode = #tpu.pipeline_mode<synchronous>, transform_indices = @transform_10, window_bounds = array<i64: 64, 1>}, {pipeline_mode = #tpu.pipeline_mode<synchronous>, transform_indices = @transform_11, window_bounds = array<i64: 16, 32>}, {pipeline_mode = #tpu.pipeline_mode<synchronous>, transform_indices = @transform_12, window_bounds = array<i64: 1, 32>}, {pipeline_mode = #tpu.pipeline_mode<synchronous>, transform_indices = @transform_13, window_bounds = array<i64: 32, 32>}, {pipeline_mode = #tpu.pipeline_mode<synchronous>, transform_indices = @transform_14, window_bounds = array<i64: 1, 32>}, {pipeline_mode = #tpu.pipeline_mode<synchronous>, transform_indices = @transform_15, window_bounds = array<i64: 64, 32>}]} {
    %c0_i32 = arith.constant 0 : i32
    %0 = arith.cmpi eq, %arg0, %c0_i32 : i32
    %1 = arith.extui %0 : i1 to i32
    %c0_i32_0 = arith.constant 0 : i32
    %2 = arith.cmpi ne, %1, %c0_i32_0 : i32
    scf.if %2 {
      %cst_31 = arith.constant 0.000000e+00 : f32
      %42 = vector.broadcast %cst_31 : f32 to vector<64x32xf32>
      %c0_32 = arith.constant 0 : index
      %c0_33 = arith.constant 0 : index
      %43 = vector.load %arg16[%c0_32, %c0_33] : memref<64x32xf32, #tpu.memory_space<vmem>>, vector<64x32xf32>
      tpu.vector_store %arg16[%c0_32, %c0_33], %42 {strides = array<i32>} : memref<64x32xf32, #tpu.memory_space<vmem>>, vector<64x32xf32>,
    } else {
    }
    %c0 = arith.constant 0 : index
    %c0_1 = arith.constant 0 : index
    %3 = vector.load %arg4[%c0, %c0_1] : memref<64x16xf32, #tpu.memory_space<vmem>>, vector<64x16xf32>
    %4 = tpu.iota {dimensions = array<i32: 1>} : vector<128x64xi32>
    %c0_2 = arith.constant 0 : index
    %c0_3 = arith.constant 0 : index
    %5 = vector.load %arg1[%c0_2, %c0_3] : memref<128x1xi32, #tpu.memory_space<vmem>>, vector<128x1xi32>
    %6 = vector.broadcast %5 : vector<128x1xi32> to vector<128x64xi32>
    %7 = arith.cmpi eq, %4, %6 : vector<128x64xi32>
    %8 = arith.extui %7 : vector<128x64xi1> to vector<128x64xi32>
    %9 = arith.sitofp %8 : vector<128x64xi32> to vector<128x64xf32>
    %cst = arith.constant dense<0.000000e+00> : vector<128x16xf32>
    %10 = tpu.matmul %9, %3, %cst {dimension_numbers = #tpu.dot_dimension_numbers<[1], [0], [0], [1], [0, 0, 1, 1], [], []>} : vector<128x64xf32>, vector<64x16xf32>, vector<128x16xf32> -> vector<128x16xf32>
    %c0_4 = arith.constant 0 : index
    %c0_5 = arith.constant 0 : index
    %11 = vector.load %arg3[%c0_4, %c0_5] : memref<128x4xf32, #tpu.memory_space<vmem>>, vector<128x4xf32>
    %c0_6 = arith.constant 0 : index
    %c0_7 = arith.constant 0 : index
    %12 = vector.load %arg5[%c0_6, %c0_7] : memref<4x128xf32, #tpu.memory_space<vmem>>, vector<4x128xf32>
    %cst_8 = arith.constant dense<0.000000e+00> : vector<128x128xf32>
    %13 = tpu.matmul %11, %12, %cst_8 {dimension_numbers = #tpu.dot_dimension_numbers<[1], [0], [0], [1], [0, 0, 1, 1], [], []>} : vector<128x4xf32>, vector<4x128xf32>, vector<128x128xf32> -> vector<128x128xf32>
    %c0_9 = arith.constant 0 : index
    %c0_10 = arith.constant 0 : index
    %14 = vector.load %arg6[%c0_9, %c0_10] : memref<1x128xf32, #tpu.memory_space<vmem>>, vector<1x128xf32>
    %15 = vector.broadcast %14 : vector<1x128xf32> to vector<128x128xf32>
    %16 = arith.addf %13, %15 : vector<128x128xf32>
    %cst_11 = arith.constant 0.000000e+00 : f32
    %17 = vector.broadcast %cst_11 : f32 to vector<128x128xf32>
    %18 = arith.maximumf %16, %17 : vector<128x128xf32>
    %c0_12 = arith.constant 0 : index
    %c0_13 = arith.constant 0 : index
    %19 = vector.load %arg7[%c0_12, %c0_13] : memref<128x128xf32, #tpu.memory_space<vmem>>, vector<128x128xf32>
    %cst_14 = arith.constant dense<0.000000e+00> : vector<128x128xf32>
    %20 = tpu.matmul %18, %19, %cst_14 {dimension_numbers = #tpu.dot_dimension_numbers<[1], [0], [0], [1], [0, 0, 1, 1], [], []>} : vector<128x128xf32>, vector<128x128xf32>, vector<128x128xf32> -> vector<128x128xf32>
    %c0_15 = arith.constant 0 : index
    %c0_16 = arith.constant 0 : index
    %21 = vector.load %arg8[%c0_15, %c0_16] : memref<1x128xf32, #tpu.memory_space<vmem>>, vector<1x128xf32>
    %22 = vector.broadcast %21 : vector<1x128xf32> to vector<128x128xf32>
    %23 = arith.addf %20, %22 : vector<128x128xf32>
    %c0_17 = arith.constant 0 : index
    %c0_18 = arith.constant 0 : index
    %24 = vector.load %arg9[%c0_17, %c0_18] : memref<16x128xf32, #tpu.memory_space<vmem>>, vector<16x128xf32>
    %cst_19 = arith.constant dense<0.000000e+00> : vector<128x128xf32>
    %25 = tpu.matmul %10, %24, %cst_19 {dimension_numbers = #tpu.dot_dimension_numbers<[1], [0], [0], [1], [0, 0, 1, 1], [], []>} : vector<128x16xf32>, vector<16x128xf32>, vector<128x128xf32> -> vector<128x128xf32>
    %26 = arith.mulf %23, %25 : vector<128x128xf32>
    %c0_20 = arith.constant 0 : index
    %c0_21 = arith.constant 0 : index
    %27 = vector.load %arg10[%c0_20, %c0_21] : memref<128x32xf32, #tpu.memory_space<vmem>>, vector<128x32xf32>
    %cst_22 = arith.constant dense<0.000000e+00> : vector<128x32xf32>
    %28 = tpu.matmul %26, %27, %cst_22 {dimension_numbers = #tpu.dot_dimension_numbers<[1], [0], [0], [1], [0, 0, 1, 1], [], []>} : vector<128x128xf32>, vector<128x32xf32>, vector<128x32xf32> -> vector<128x32xf32>
    %29 = tpu.iota {dimensions = array<i32: 0>} : vector<64x128xi32>
    %c0_23 = arith.constant 0 : index
    %c0_24 = arith.constant 0 : index
    %30 = vector.load %arg2[%c0_23, %c0_24] : memref<1x128xi32, #tpu.memory_space<vmem>>, vector<1x128xi32>
    %31 = vector.broadcast %30 : vector<1x128xi32> to vector<64x128xi32>
    %32 = arith.cmpi eq, %29, %31 : vector<64x128xi32>
    %33 = arith.extui %32 : vector<64x128xi1> to vector<64x128xi32>
    %34 = arith.sitofp %33 : vector<64x128xi32> to vector<64x128xf32>
    %c0_25 = arith.constant 0 : index
    %c0_26 = arith.constant 0 : index
    %35 = vector.load %arg16[%c0_25, %c0_26] : memref<64x32xf32, #tpu.memory_space<vmem>>, vector<64x32xf32>
    %cst_27 = arith.constant dense<0.000000e+00> : vector<64x32xf32>
    %36 = tpu.matmul %34, %28, %cst_27 {dimension_numbers = #tpu.dot_dimension_numbers<[1], [0], [0], [1], [0, 0, 1, 1], [], []>} : vector<64x128xf32>, vector<128x32xf32>, vector<64x32xf32> -> vector<64x32xf32>
    %37 = arith.addf %35, %36 : vector<64x32xf32>
    %c0_28 = arith.constant 0 : index
    %c0_29 = arith.constant 0 : index
    %38 = vector.load %arg16[%c0_28, %c0_29] : memref<64x32xf32, #tpu.memory_space<vmem>>, vector<64x32xf32>
    tpu.vector_store %arg16[%c0_28, %c0_29], %37 {strides = array<i32>} : memref<64x32xf32, #tpu.memory_space<vmem>>, vector<64x32xf32>,
    %c1_i32 = arith.constant 1 : i32
    %39 = arith.cmpi eq, %arg0, %c1_i32 : i32
    %40 = arith.extui %39 : i1 to i32
    %c0_i32_30 = arith.constant 0 : i32
    %41 = arith.cmpi ne, %40, %c0_i32_30 : i32
    scf.if %41 {
      %c0_31 = arith.constant 0 : index
      %c0_32 = arith.constant 0 : index
      %42 = vector.load %arg16[%c0_31, %c0_32] : memref<64x32xf32, #tpu.memory_space<vmem>>, vector<64x32xf32>
      %c0_33 = arith.constant 0 : index
      %c0_34 = arith.constant 0 : index
      %43 = vector.load %arg11[%c0_33, %c0_34] : memref<64x1xf32, #tpu.memory_space<vmem>>, vector<64x1xf32>
      %44 = vector.broadcast %43 : vector<64x1xf32> to vector<64x32xf32>
      %45 = arith.mulf %42, %44 : vector<64x32xf32>
      %c0_35 = arith.constant 0 : index
      %c0_36 = arith.constant 0 : index
      %46 = vector.load %arg14[%c0_35, %c0_36] : memref<32x32xf32, #tpu.memory_space<vmem>>, vector<32x32xf32>
      %cst_37 = arith.constant dense<0.000000e+00> : vector<64x32xf32>
      %47 = tpu.matmul %45, %46, %cst_37 {dimension_numbers = #tpu.dot_dimension_numbers<[1], [0], [0], [1], [0, 0, 1, 1], [], []>} : vector<64x32xf32>, vector<32x32xf32>, vector<64x32xf32> -> vector<64x32xf32>
      %c0_38 = arith.constant 0 : index
      %c0_39 = arith.constant 0 : index
      %48 = vector.load %arg15[%c0_38, %c0_39] : memref<1x32xf32, #tpu.memory_space<vmem>>, vector<1x32xf32>
      %49 = vector.broadcast %48 : vector<1x32xf32> to vector<64x32xf32>
      %50 = arith.addf %47, %49 : vector<64x32xf32>
      %c0_40 = arith.constant 0 : index
      %c0_41 = arith.constant 0 : index
      %51 = vector.load %arg12[%c0_40, %c0_41] : memref<16x32xf32, #tpu.memory_space<vmem>>, vector<16x32xf32>
      %cst_42 = arith.constant dense<0.000000e+00> : vector<64x32xf32>
      %52 = tpu.matmul %3, %51, %cst_42 {dimension_numbers = #tpu.dot_dimension_numbers<[1], [0], [0], [1], [0, 0, 1, 1], [], []>} : vector<64x16xf32>, vector<16x32xf32>, vector<64x32xf32> -> vector<64x32xf32>
      %c0_43 = arith.constant 0 : index
      %c0_44 = arith.constant 0 : index
      %53 = vector.load %arg13[%c0_43, %c0_44] : memref<1x32xf32, #tpu.memory_space<vmem>>, vector<1x32xf32>
      %54 = vector.broadcast %53 : vector<1x32xf32> to vector<64x32xf32>
      %55 = arith.addf %52, %54 : vector<64x32xf32>
      %56 = arith.addf %55, %50 : vector<64x32xf32>
      %cst_45 = arith.constant 0.000000e+00 : f32
      %57 = vector.broadcast %cst_45 : f32 to vector<64x32xf32>
      %58 = arith.maximumf %56, %57 : vector<64x32xf32>
      %c0_46 = arith.constant 0 : index
      %c0_47 = arith.constant 0 : index
      %59 = vector.load %arg16[%c0_46, %c0_47] : memref<64x32xf32, #tpu.memory_space<vmem>>, vector<64x32xf32>
      tpu.vector_store %arg16[%c0_46, %c0_47], %58 {strides = array<i32>} : memref<64x32xf32, #tpu.memory_space<vmem>>, vector<64x32xf32>,
    } else {
    }
    return
  }
  func.func @transform_0(%arg0: i32) -> (i32, i32) {
    %c0_i32 = arith.constant 0 : i32
    %c0_i32_0 = arith.constant 0 : i32
    return %arg0, %c0_i32 : i32, i32
  }
  func.func @transform_1(%arg0: i32) -> (i32, i32) {
    %c0_i32 = arith.constant 0 : i32
    %c0_i32_0 = arith.constant 0 : i32
    return %c0_i32, %arg0 : i32, i32
  }
  func.func @transform_2(%arg0: i32) -> (i32, i32) {
    %c0_i32 = arith.constant 0 : i32
    %c0_i32_0 = arith.constant 0 : i32
    return %arg0, %c0_i32 : i32, i32
  }
  func.func @transform_3(%arg0: i32) -> (i32, i32) {
    %c0_i32 = arith.constant 0 : i32
    %c0_i32_0 = arith.constant 0 : i32
    %c0_i32_1 = arith.constant 0 : i32
    return %c0_i32, %c0_i32_0 : i32, i32
  }
  func.func @transform_4(%arg0: i32) -> (i32, i32) {
    %c0_i32 = arith.constant 0 : i32
    %c0_i32_0 = arith.constant 0 : i32
    %c0_i32_1 = arith.constant 0 : i32
    return %c0_i32, %c0_i32_0 : i32, i32
  }
  func.func @transform_5(%arg0: i32) -> (i32, i32) {
    %c0_i32 = arith.constant 0 : i32
    %c0_i32_0 = arith.constant 0 : i32
    %c0_i32_1 = arith.constant 0 : i32
    return %c0_i32, %c0_i32_0 : i32, i32
  }
  func.func @transform_6(%arg0: i32) -> (i32, i32) {
    %c0_i32 = arith.constant 0 : i32
    %c0_i32_0 = arith.constant 0 : i32
    %c0_i32_1 = arith.constant 0 : i32
    return %c0_i32, %c0_i32_0 : i32, i32
  }
  func.func @transform_7(%arg0: i32) -> (i32, i32) {
    %c0_i32 = arith.constant 0 : i32
    %c0_i32_0 = arith.constant 0 : i32
    %c0_i32_1 = arith.constant 0 : i32
    return %c0_i32, %c0_i32_0 : i32, i32
  }
  func.func @transform_8(%arg0: i32) -> (i32, i32) {
    %c0_i32 = arith.constant 0 : i32
    %c0_i32_0 = arith.constant 0 : i32
    %c0_i32_1 = arith.constant 0 : i32
    return %c0_i32, %c0_i32_0 : i32, i32
  }
  func.func @transform_9(%arg0: i32) -> (i32, i32) {
    %c0_i32 = arith.constant 0 : i32
    %c0_i32_0 = arith.constant 0 : i32
    %c0_i32_1 = arith.constant 0 : i32
    return %c0_i32, %c0_i32_0 : i32, i32
  }
  func.func @transform_10(%arg0: i32) -> (i32, i32) {
    %c0_i32 = arith.constant 0 : i32
    %c0_i32_0 = arith.constant 0 : i32
    %c0_i32_1 = arith.constant 0 : i32
    return %c0_i32, %c0_i32_0 : i32, i32
  }
  func.func @transform_11(%arg0: i32) -> (i32, i32) {
    %c0_i32 = arith.constant 0 : i32
    %c0_i32_0 = arith.constant 0 : i32
    %c0_i32_1 = arith.constant 0 : i32
    return %c0_i32, %c0_i32_0 : i32, i32
  }
  func.func @transform_12(%arg0: i32) -> (i32, i32) {
    %c0_i32 = arith.constant 0 : i32
    %c0_i32_0 = arith.constant 0 : i32
    %c0_i32_1 = arith.constant 0 : i32
    return %c0_i32, %c0_i32_0 : i32, i32
  }
  func.func @transform_13(%arg0: i32) -> (i32, i32) {
    %c0_i32 = arith.constant 0 : i32
    %c0_i32_0 = arith.constant 0 : i32
    %c0_i32_1 = arith.constant 0 : i32
    return %c0_i32, %c0_i32_0 : i32, i32
  }
  func.func @transform_14(%arg0: i32) -> (i32, i32) {
    %c0_i32 = arith.constant 0 : i32
    %c0_i32_0 = arith.constant 0 : i32
    %c0_i32_1 = arith.constant 0 : i32
    return %c0_i32, %c0_i32_0 : i32, i32
  }
  func.func @transform_15(%arg0: i32) -> (i32, i32) {
    %c0_i32 = arith.constant 0 : i32
    %c0_i32_0 = arith.constant 0 : i32
    %c0_i32_1 = arith.constant 0 : i32
    return %c0_i32, %c0_i32_0 : i32, i32
  }
}

module attributes {stable_mosaic.version = 11 : i64} {
  func.func @_edge_layer_kernel(%arg0: i32, %arg1: memref<128x1xi32, #tpu.memory_space<vmem>>, %arg2: memref<1x128xi32, #tpu.memory_space<vmem>>, %arg3: memref<128x4xf32, #tpu.memory_space<vmem>>, %arg4: memref<64x32xf32, #tpu.memory_space<vmem>>, %arg5: memref<4x128xf32, #tpu.memory_space<vmem>>, %arg6: memref<1x128xf32, #tpu.memory_space<vmem>>, %arg7: memref<128x256xf32, #tpu.memory_space<vmem>>, %arg8: memref<1x256xf32, #tpu.memory_space<vmem>>, %arg9: memref<32x256xf32, #tpu.memory_space<vmem>>, %arg10: memref<256x32xf32, #tpu.memory_space<vmem>>, %arg11: memref<64x1xf32, #tpu.memory_space<vmem>>, %arg12: memref<32x32xf32, #tpu.memory_space<vmem>>, %arg13: memref<1x32xf32, #tpu.memory_space<vmem>>, %arg14: memref<64x32xf32, #tpu.memory_space<vmem>>) attributes {dimension_semantics = [#tpu.dimension_semantics<arbitrary>], iteration_bounds = array<i64: 2>, scalar_prefetch = 0 : i64, scratch_operands = 0 : i64, tpu.core_type = #tpu.core_type<tc>, window_params = [{transform_indices = @transform_0, window_bounds = array<i64: 128, 1>}, {transform_indices = @transform_1, window_bounds = array<i64: 1, 128>}, {transform_indices = @transform_2, window_bounds = array<i64: 128, 4>}, {pipeline_mode = #tpu.pipeline_mode<synchronous>, transform_indices = @transform_3, window_bounds = array<i64: 64, 32>}, {pipeline_mode = #tpu.pipeline_mode<synchronous>, transform_indices = @transform_4, window_bounds = array<i64: 4, 128>}, {pipeline_mode = #tpu.pipeline_mode<synchronous>, transform_indices = @transform_5, window_bounds = array<i64: 1, 128>}, {pipeline_mode = #tpu.pipeline_mode<synchronous>, transform_indices = @transform_6, window_bounds = array<i64: 128, 256>}, {pipeline_mode = #tpu.pipeline_mode<synchronous>, transform_indices = @transform_7, window_bounds = array<i64: 1, 256>}, {pipeline_mode = #tpu.pipeline_mode<synchronous>, transform_indices = @transform_8, window_bounds = array<i64: 32, 256>}, {pipeline_mode = #tpu.pipeline_mode<synchronous>, transform_indices = @transform_9, window_bounds = array<i64: 256, 32>}, {pipeline_mode = #tpu.pipeline_mode<synchronous>, transform_indices = @transform_10, window_bounds = array<i64: 64, 1>}, {pipeline_mode = #tpu.pipeline_mode<synchronous>, transform_indices = @transform_11, window_bounds = array<i64: 32, 32>}, {pipeline_mode = #tpu.pipeline_mode<synchronous>, transform_indices = @transform_12, window_bounds = array<i64: 1, 32>}, {pipeline_mode = #tpu.pipeline_mode<synchronous>, transform_indices = @transform_13, window_bounds = array<i64: 64, 32>}]} {
    %c0_i32 = arith.constant 0 : i32
    %0 = arith.cmpi eq, %arg0, %c0_i32 : i32
    %1 = arith.extui %0 : i1 to i32
    %c0_i32_0 = arith.constant 0 : i32
    %2 = arith.cmpi ne, %1, %c0_i32_0 : i32
    scf.if %2 {
      %cst_31 = arith.constant 0.000000e+00 : f32
      %42 = vector.broadcast %cst_31 : f32 to vector<64x32xf32>
      %c0_32 = arith.constant 0 : index
      %c0_33 = arith.constant 0 : index
      %43 = vector.load %arg14[%c0_32, %c0_33] : memref<64x32xf32, #tpu.memory_space<vmem>>, vector<64x32xf32>
      tpu.vector_store %arg14[%c0_32, %c0_33], %42 {strides = array<i32>} : memref<64x32xf32, #tpu.memory_space<vmem>>, vector<64x32xf32>,
    } else {
    }
    %c0 = arith.constant 0 : index
    %c0_1 = arith.constant 0 : index
    %3 = vector.load %arg4[%c0, %c0_1] : memref<64x32xf32, #tpu.memory_space<vmem>>, vector<64x32xf32>
    %4 = tpu.iota {dimensions = array<i32: 1>} : vector<128x64xi32>
    %c0_2 = arith.constant 0 : index
    %c0_3 = arith.constant 0 : index
    %5 = vector.load %arg1[%c0_2, %c0_3] : memref<128x1xi32, #tpu.memory_space<vmem>>, vector<128x1xi32>
    %6 = vector.broadcast %5 : vector<128x1xi32> to vector<128x64xi32>
    %7 = arith.cmpi eq, %4, %6 : vector<128x64xi32>
    %8 = arith.extui %7 : vector<128x64xi1> to vector<128x64xi32>
    %9 = arith.sitofp %8 : vector<128x64xi32> to vector<128x64xf32>
    %cst = arith.constant dense<0.000000e+00> : vector<128x32xf32>
    %10 = tpu.matmul %9, %3, %cst {dimension_numbers = #tpu.dot_dimension_numbers<[1], [0], [0], [1], [0, 0, 1, 1], [], []>} : vector<128x64xf32>, vector<64x32xf32>, vector<128x32xf32> -> vector<128x32xf32>
    %c0_4 = arith.constant 0 : index
    %c0_5 = arith.constant 0 : index
    %11 = vector.load %arg3[%c0_4, %c0_5] : memref<128x4xf32, #tpu.memory_space<vmem>>, vector<128x4xf32>
    %c0_6 = arith.constant 0 : index
    %c0_7 = arith.constant 0 : index
    %12 = vector.load %arg5[%c0_6, %c0_7] : memref<4x128xf32, #tpu.memory_space<vmem>>, vector<4x128xf32>
    %cst_8 = arith.constant dense<0.000000e+00> : vector<128x128xf32>
    %13 = tpu.matmul %11, %12, %cst_8 {dimension_numbers = #tpu.dot_dimension_numbers<[1], [0], [0], [1], [0, 0, 1, 1], [], []>} : vector<128x4xf32>, vector<4x128xf32>, vector<128x128xf32> -> vector<128x128xf32>
    %c0_9 = arith.constant 0 : index
    %c0_10 = arith.constant 0 : index
    %14 = vector.load %arg6[%c0_9, %c0_10] : memref<1x128xf32, #tpu.memory_space<vmem>>, vector<1x128xf32>
    %15 = vector.broadcast %14 : vector<1x128xf32> to vector<128x128xf32>
    %16 = arith.addf %13, %15 : vector<128x128xf32>
    %cst_11 = arith.constant 0.000000e+00 : f32
    %17 = vector.broadcast %cst_11 : f32 to vector<128x128xf32>
    %18 = arith.maximumf %16, %17 : vector<128x128xf32>
    %c0_12 = arith.constant 0 : index
    %c0_13 = arith.constant 0 : index
    %19 = vector.load %arg7[%c0_12, %c0_13] : memref<128x256xf32, #tpu.memory_space<vmem>>, vector<128x256xf32>
    %cst_14 = arith.constant dense<0.000000e+00> : vector<128x256xf32>
    %20 = tpu.matmul %18, %19, %cst_14 {dimension_numbers = #tpu.dot_dimension_numbers<[1], [0], [0], [1], [0, 0, 1, 1], [], []>} : vector<128x128xf32>, vector<128x256xf32>, vector<128x256xf32> -> vector<128x256xf32>
    %c0_15 = arith.constant 0 : index
    %c0_16 = arith.constant 0 : index
    %21 = vector.load %arg8[%c0_15, %c0_16] : memref<1x256xf32, #tpu.memory_space<vmem>>, vector<1x256xf32>
    %22 = vector.broadcast %21 : vector<1x256xf32> to vector<128x256xf32>
    %23 = arith.addf %20, %22 : vector<128x256xf32>
    %c0_17 = arith.constant 0 : index
    %c0_18 = arith.constant 0 : index
    %24 = vector.load %arg9[%c0_17, %c0_18] : memref<32x256xf32, #tpu.memory_space<vmem>>, vector<32x256xf32>
    %cst_19 = arith.constant dense<0.000000e+00> : vector<128x256xf32>
    %25 = tpu.matmul %10, %24, %cst_19 {dimension_numbers = #tpu.dot_dimension_numbers<[1], [0], [0], [1], [0, 0, 1, 1], [], []>} : vector<128x32xf32>, vector<32x256xf32>, vector<128x256xf32> -> vector<128x256xf32>
    %26 = arith.mulf %23, %25 : vector<128x256xf32>
    %c0_20 = arith.constant 0 : index
    %c0_21 = arith.constant 0 : index
    %27 = vector.load %arg10[%c0_20, %c0_21] : memref<256x32xf32, #tpu.memory_space<vmem>>, vector<256x32xf32>
    %cst_22 = arith.constant dense<0.000000e+00> : vector<128x32xf32>
    %28 = tpu.matmul %26, %27, %cst_22 {dimension_numbers = #tpu.dot_dimension_numbers<[1], [0], [0], [1], [0, 0, 1, 1], [], []>} : vector<128x256xf32>, vector<256x32xf32>, vector<128x32xf32> -> vector<128x32xf32>
    %29 = tpu.iota {dimensions = array<i32: 0>} : vector<64x128xi32>
    %c0_23 = arith.constant 0 : index
    %c0_24 = arith.constant 0 : index
    %30 = vector.load %arg2[%c0_23, %c0_24] : memref<1x128xi32, #tpu.memory_space<vmem>>, vector<1x128xi32>
    %31 = vector.broadcast %30 : vector<1x128xi32> to vector<64x128xi32>
    %32 = arith.cmpi eq, %29, %31 : vector<64x128xi32>
    %33 = arith.extui %32 : vector<64x128xi1> to vector<64x128xi32>
    %34 = arith.sitofp %33 : vector<64x128xi32> to vector<64x128xf32>
    %c0_25 = arith.constant 0 : index
    %c0_26 = arith.constant 0 : index
    %35 = vector.load %arg14[%c0_25, %c0_26] : memref<64x32xf32, #tpu.memory_space<vmem>>, vector<64x32xf32>
    %cst_27 = arith.constant dense<0.000000e+00> : vector<64x32xf32>
    %36 = tpu.matmul %34, %28, %cst_27 {dimension_numbers = #tpu.dot_dimension_numbers<[1], [0], [0], [1], [0, 0, 1, 1], [], []>} : vector<64x128xf32>, vector<128x32xf32>, vector<64x32xf32> -> vector<64x32xf32>
    %37 = arith.addf %35, %36 : vector<64x32xf32>
    %c0_28 = arith.constant 0 : index
    %c0_29 = arith.constant 0 : index
    %38 = vector.load %arg14[%c0_28, %c0_29] : memref<64x32xf32, #tpu.memory_space<vmem>>, vector<64x32xf32>
    tpu.vector_store %arg14[%c0_28, %c0_29], %37 {strides = array<i32>} : memref<64x32xf32, #tpu.memory_space<vmem>>, vector<64x32xf32>,
    %c1_i32 = arith.constant 1 : i32
    %39 = arith.cmpi eq, %arg0, %c1_i32 : i32
    %40 = arith.extui %39 : i1 to i32
    %c0_i32_30 = arith.constant 0 : i32
    %41 = arith.cmpi ne, %40, %c0_i32_30 : i32
    scf.if %41 {
      %c0_31 = arith.constant 0 : index
      %c0_32 = arith.constant 0 : index
      %42 = vector.load %arg14[%c0_31, %c0_32] : memref<64x32xf32, #tpu.memory_space<vmem>>, vector<64x32xf32>
      %c0_33 = arith.constant 0 : index
      %c0_34 = arith.constant 0 : index
      %43 = vector.load %arg11[%c0_33, %c0_34] : memref<64x1xf32, #tpu.memory_space<vmem>>, vector<64x1xf32>
      %44 = vector.broadcast %43 : vector<64x1xf32> to vector<64x32xf32>
      %45 = arith.mulf %42, %44 : vector<64x32xf32>
      %c0_35 = arith.constant 0 : index
      %c0_36 = arith.constant 0 : index
      %46 = vector.load %arg12[%c0_35, %c0_36] : memref<32x32xf32, #tpu.memory_space<vmem>>, vector<32x32xf32>
      %cst_37 = arith.constant dense<0.000000e+00> : vector<64x32xf32>
      %47 = tpu.matmul %45, %46, %cst_37 {dimension_numbers = #tpu.dot_dimension_numbers<[1], [0], [0], [1], [0, 0, 1, 1], [], []>} : vector<64x32xf32>, vector<32x32xf32>, vector<64x32xf32> -> vector<64x32xf32>
      %c0_38 = arith.constant 0 : index
      %c0_39 = arith.constant 0 : index
      %48 = vector.load %arg13[%c0_38, %c0_39] : memref<1x32xf32, #tpu.memory_space<vmem>>, vector<1x32xf32>
      %49 = vector.broadcast %48 : vector<1x32xf32> to vector<64x32xf32>
      %50 = arith.addf %47, %49 : vector<64x32xf32>
      %51 = arith.addf %3, %50 : vector<64x32xf32>
      %c0_40 = arith.constant 0 : index
      %c0_41 = arith.constant 0 : index
      %52 = vector.load %arg14[%c0_40, %c0_41] : memref<64x32xf32, #tpu.memory_space<vmem>>, vector<64x32xf32>
      tpu.vector_store %arg14[%c0_40, %c0_41], %51 {strides = array<i32>} : memref<64x32xf32, #tpu.memory_space<vmem>>, vector<64x32xf32>,
    } else {
    }
    return
  }
  func.func @transform_0(%arg0: i32) -> (i32, i32) {
    %c0_i32 = arith.constant 0 : i32
    %c0_i32_0 = arith.constant 0 : i32
    return %arg0, %c0_i32 : i32, i32
  }
  func.func @transform_1(%arg0: i32) -> (i32, i32) {
    %c0_i32 = arith.constant 0 : i32
    %c0_i32_0 = arith.constant 0 : i32
    return %c0_i32, %arg0 : i32, i32
  }
  func.func @transform_2(%arg0: i32) -> (i32, i32) {
    %c0_i32 = arith.constant 0 : i32
    %c0_i32_0 = arith.constant 0 : i32
    return %arg0, %c0_i32 : i32, i32
  }
  func.func @transform_3(%arg0: i32) -> (i32, i32) {
    %c0_i32 = arith.constant 0 : i32
    %c0_i32_0 = arith.constant 0 : i32
    %c0_i32_1 = arith.constant 0 : i32
    return %c0_i32, %c0_i32_0 : i32, i32
  }
  func.func @transform_4(%arg0: i32) -> (i32, i32) {
    %c0_i32 = arith.constant 0 : i32
    %c0_i32_0 = arith.constant 0 : i32
    %c0_i32_1 = arith.constant 0 : i32
    return %c0_i32, %c0_i32_0 : i32, i32
  }
  func.func @transform_5(%arg0: i32) -> (i32, i32) {
    %c0_i32 = arith.constant 0 : i32
    %c0_i32_0 = arith.constant 0 : i32
    %c0_i32_1 = arith.constant 0 : i32
    return %c0_i32, %c0_i32_0 : i32, i32
  }
  func.func @transform_6(%arg0: i32) -> (i32, i32) {
    %c0_i32 = arith.constant 0 : i32
    %c0_i32_0 = arith.constant 0 : i32
    %c0_i32_1 = arith.constant 0 : i32
    return %c0_i32, %c0_i32_0 : i32, i32
  }
  func.func @transform_7(%arg0: i32) -> (i32, i32) {
    %c0_i32 = arith.constant 0 : i32
    %c0_i32_0 = arith.constant 0 : i32
    %c0_i32_1 = arith.constant 0 : i32
    return %c0_i32, %c0_i32_0 : i32, i32
  }
  func.func @transform_8(%arg0: i32) -> (i32, i32) {
    %c0_i32 = arith.constant 0 : i32
    %c0_i32_0 = arith.constant 0 : i32
    %c0_i32_1 = arith.constant 0 : i32
    return %c0_i32, %c0_i32_0 : i32, i32
  }
  func.func @transform_9(%arg0: i32) -> (i32, i32) {
    %c0_i32 = arith.constant 0 : i32
    %c0_i32_0 = arith.constant 0 : i32
    %c0_i32_1 = arith.constant 0 : i32
    return %c0_i32, %c0_i32_0 : i32, i32
  }
  func.func @transform_10(%arg0: i32) -> (i32, i32) {
    %c0_i32 = arith.constant 0 : i32
    %c0_i32_0 = arith.constant 0 : i32
    %c0_i32_1 = arith.constant 0 : i32
    return %c0_i32, %c0_i32_0 : i32, i32
  }
  func.func @transform_11(%arg0: i32) -> (i32, i32) {
    %c0_i32 = arith.constant 0 : i32
    %c0_i32_0 = arith.constant 0 : i32
    %c0_i32_1 = arith.constant 0 : i32
    return %c0_i32, %c0_i32_0 : i32, i32
  }
  func.func @transform_12(%arg0: i32) -> (i32, i32) {
    %c0_i32 = arith.constant 0 : i32
    %c0_i32_0 = arith.constant 0 : i32
    %c0_i32_1 = arith.constant 0 : i32
    return %c0_i32, %c0_i32_0 : i32, i32
  }
  func.func @transform_13(%arg0: i32) -> (i32, i32) {
    %c0_i32 = arith.constant 0 : i32
    %c0_i32_0 = arith.constant 0 : i32
    %c0_i32_1 = arith.constant 0 : i32
    return %c0_i32, %c0_i32_0 : i32, i32
  }
}

module attributes {stable_mosaic.version = 11 : i64} {
  func.func @_pool_head_kernel(%arg0: i32, %arg1: memref<1x64xi32, #tpu.memory_space<vmem>>, %arg2: memref<1x64xf32, #tpu.memory_space<vmem>>, %arg3: memref<64x32xf32, #tpu.memory_space<vmem>>, %arg4: memref<32x16xf32, #tpu.memory_space<vmem>>, %arg5: memref<1x16xf32, #tpu.memory_space<vmem>>, %arg6: memref<16x32xf32, #tpu.memory_space<vmem>>, %arg7: memref<1x32xf32, #tpu.memory_space<vmem>>, %arg8: memref<32x8xf32, #tpu.memory_space<vmem>>, %arg9: memref<1x8xf32, #tpu.memory_space<vmem>>, %arg10: memref<2x8xf32, #tpu.memory_space<vmem>>, %arg11: memref<2x16xf32, #tpu.memory_space<vmem>>) attributes {dimension_semantics = [#tpu.dimension_semantics<arbitrary>], iteration_bounds = array<i64: 1>, scalar_prefetch = 0 : i64, scratch_operands = 1 : i64, tpu.core_type = #tpu.core_type<tc>, window_params = [{transform_indices = @transform_0, window_bounds = array<i64: 1, 64>}, {transform_indices = @transform_1, window_bounds = array<i64: 1, 64>}, {transform_indices = @transform_2, window_bounds = array<i64: 64, 32>}, {pipeline_mode = #tpu.pipeline_mode<synchronous>, transform_indices = @transform_3, window_bounds = array<i64: 32, 16>}, {pipeline_mode = #tpu.pipeline_mode<synchronous>, transform_indices = @transform_4, window_bounds = array<i64: 1, 16>}, {pipeline_mode = #tpu.pipeline_mode<synchronous>, transform_indices = @transform_5, window_bounds = array<i64: 16, 32>}, {pipeline_mode = #tpu.pipeline_mode<synchronous>, transform_indices = @transform_6, window_bounds = array<i64: 1, 32>}, {pipeline_mode = #tpu.pipeline_mode<synchronous>, transform_indices = @transform_7, window_bounds = array<i64: 32, 8>}, {pipeline_mode = #tpu.pipeline_mode<synchronous>, transform_indices = @transform_8, window_bounds = array<i64: 1, 8>}, {pipeline_mode = #tpu.pipeline_mode<synchronous>, transform_indices = @transform_9, window_bounds = array<i64: 2, 8>}]} {
    %c0_i32 = arith.constant 0 : i32
    %0 = arith.cmpi eq, %arg0, %c0_i32 : i32
    %1 = arith.extui %0 : i1 to i32
    %c0_i32_0 = arith.constant 0 : i32
    %2 = arith.cmpi ne, %1, %c0_i32_0 : i32
    scf.if %2 {
      %cst_17 = arith.constant 0.000000e+00 : f32
      %25 = vector.broadcast %cst_17 : f32 to vector<2x16xf32>
      %c0_18 = arith.constant 0 : index
      %c0_19 = arith.constant 0 : index
      %26 = vector.load %arg11[%c0_18, %c0_19] : memref<2x16xf32, #tpu.memory_space<vmem>>, vector<2x16xf32>
      tpu.vector_store %arg11[%c0_18, %c0_19], %25 {strides = array<i32>} : memref<2x16xf32, #tpu.memory_space<vmem>>, vector<2x16xf32>,
    } else {
    }
    %c0 = arith.constant 0 : index
    %c0_1 = arith.constant 0 : index
    %3 = vector.load %arg3[%c0, %c0_1] : memref<64x32xf32, #tpu.memory_space<vmem>>, vector<64x32xf32>
    %c0_2 = arith.constant 0 : index
    %c0_3 = arith.constant 0 : index
    %4 = vector.load %arg4[%c0_2, %c0_3] : memref<32x16xf32, #tpu.memory_space<vmem>>, vector<32x16xf32>
    %cst = arith.constant dense<0.000000e+00> : vector<64x16xf32>
    %5 = tpu.matmul %3, %4, %cst {dimension_numbers = #tpu.dot_dimension_numbers<[1], [0], [0], [1], [0, 0, 1, 1], [], []>} : vector<64x32xf32>, vector<32x16xf32>, vector<64x16xf32> -> vector<64x16xf32>
    %c0_4 = arith.constant 0 : index
    %c0_5 = arith.constant 0 : index
    %6 = vector.load %arg5[%c0_4, %c0_5] : memref<1x16xf32, #tpu.memory_space<vmem>>, vector<1x16xf32>
    %7 = vector.broadcast %6 : vector<1x16xf32> to vector<64x16xf32>
    %8 = arith.addf %5, %7 : vector<64x16xf32>
    %9 = tpu.iota {dimensions = array<i32: 0>} : vector<2x64xi32>
    %c0_6 = arith.constant 0 : index
    %c0_7 = arith.constant 0 : index
    %10 = vector.load %arg1[%c0_6, %c0_7] : memref<1x64xi32, #tpu.memory_space<vmem>>, vector<1x64xi32>
    %11 = vector.broadcast %10 : vector<1x64xi32> to vector<2x64xi32>
    %12 = arith.cmpi eq, %9, %11 : vector<2x64xi32>
    %13 = arith.extui %12 : vector<2x64xi1> to vector<2x64xi32>
    %14 = arith.sitofp %13 : vector<2x64xi32> to vector<2x64xf32>
    %c0_8 = arith.constant 0 : index
    %c0_9 = arith.constant 0 : index
    %15 = vector.load %arg2[%c0_8, %c0_9] : memref<1x64xf32, #tpu.memory_space<vmem>>, vector<1x64xf32>
    %16 = vector.broadcast %15 : vector<1x64xf32> to vector<2x64xf32>
    %17 = arith.mulf %14, %16 : vector<2x64xf32>
    %c0_10 = arith.constant 0 : index
    %c0_11 = arith.constant 0 : index
    %18 = vector.load %arg11[%c0_10, %c0_11] : memref<2x16xf32, #tpu.memory_space<vmem>>, vector<2x16xf32>
    %cst_12 = arith.constant dense<0.000000e+00> : vector<2x16xf32>
    %19 = tpu.matmul %17, %8, %cst_12 {dimension_numbers = #tpu.dot_dimension_numbers<[1], [0], [0], [1], [0, 0, 1, 1], [], []>} : vector<2x64xf32>, vector<64x16xf32>, vector<2x16xf32> -> vector<2x16xf32>
    %20 = arith.addf %18, %19 : vector<2x16xf32>
    %c0_13 = arith.constant 0 : index
    %c0_14 = arith.constant 0 : index
    %21 = vector.load %arg11[%c0_13, %c0_14] : memref<2x16xf32, #tpu.memory_space<vmem>>, vector<2x16xf32>
    tpu.vector_store %arg11[%c0_13, %c0_14], %20 {strides = array<i32>} : memref<2x16xf32, #tpu.memory_space<vmem>>, vector<2x16xf32>,
    %c0_i32_15 = arith.constant 0 : i32
    %22 = arith.cmpi eq, %arg0, %c0_i32_15 : i32
    %23 = arith.extui %22 : i1 to i32
    %c0_i32_16 = arith.constant 0 : i32
    %24 = arith.cmpi ne, %23, %c0_i32_16 : i32
    scf.if %24 {
      %c0_17 = arith.constant 0 : index
      %c0_18 = arith.constant 0 : index
      %25 = vector.load %arg11[%c0_17, %c0_18] : memref<2x16xf32, #tpu.memory_space<vmem>>, vector<2x16xf32>
      %c0_19 = arith.constant 0 : index
      %c0_20 = arith.constant 0 : index
      %26 = vector.load %arg6[%c0_19, %c0_20] : memref<16x32xf32, #tpu.memory_space<vmem>>, vector<16x32xf32>
      %cst_21 = arith.constant dense<0.000000e+00> : vector<2x32xf32>
      %27 = tpu.matmul %25, %26, %cst_21 {dimension_numbers = #tpu.dot_dimension_numbers<[1], [0], [0], [1], [0, 0, 1, 1], [], []>} : vector<2x16xf32>, vector<16x32xf32>, vector<2x32xf32> -> vector<2x32xf32>
      %c0_22 = arith.constant 0 : index
      %c0_23 = arith.constant 0 : index
      %28 = vector.load %arg7[%c0_22, %c0_23] : memref<1x32xf32, #tpu.memory_space<vmem>>, vector<1x32xf32>
      %29 = vector.broadcast %28 : vector<1x32xf32> to vector<2x32xf32>
      %30 = arith.addf %27, %29 : vector<2x32xf32>
      %cst_24 = arith.constant 0.000000e+00 : f32
      %31 = vector.broadcast %cst_24 : f32 to vector<2x32xf32>
      %32 = arith.maximumf %30, %31 : vector<2x32xf32>
      %c0_25 = arith.constant 0 : index
      %c0_26 = arith.constant 0 : index
      %33 = vector.load %arg8[%c0_25, %c0_26] : memref<32x8xf32, #tpu.memory_space<vmem>>, vector<32x8xf32>
      %cst_27 = arith.constant dense<0.000000e+00> : vector<2x8xf32>
      %34 = tpu.matmul %32, %33, %cst_27 {dimension_numbers = #tpu.dot_dimension_numbers<[1], [0], [0], [1], [0, 0, 1, 1], [], []>} : vector<2x32xf32>, vector<32x8xf32>, vector<2x8xf32> -> vector<2x8xf32>
      %c0_28 = arith.constant 0 : index
      %c0_29 = arith.constant 0 : index
      %35 = vector.load %arg9[%c0_28, %c0_29] : memref<1x8xf32, #tpu.memory_space<vmem>>, vector<1x8xf32>
      %36 = vector.broadcast %35 : vector<1x8xf32> to vector<2x8xf32>
      %37 = arith.addf %34, %36 : vector<2x8xf32>
      %c0_30 = arith.constant 0 : index
      %c0_31 = arith.constant 0 : index
      %38 = vector.load %arg10[%c0_30, %c0_31] : memref<2x8xf32, #tpu.memory_space<vmem>>, vector<2x8xf32>
      tpu.vector_store %arg10[%c0_30, %c0_31], %37 {strides = array<i32>} : memref<2x8xf32, #tpu.memory_space<vmem>>, vector<2x8xf32>,
    } else {
    }
    return
  }
  func.func @transform_0(%arg0: i32) -> (i32, i32) {
    %c0_i32 = arith.constant 0 : i32
    %c0_i32_0 = arith.constant 0 : i32
    return %c0_i32, %arg0 : i32, i32
  }
  func.func @transform_1(%arg0: i32) -> (i32, i32) {
    %c0_i32 = arith.constant 0 : i32
    %c0_i32_0 = arith.constant 0 : i32
    return %c0_i32, %arg0 : i32, i32
  }
  func.func @transform_2(%arg0: i32) -> (i32, i32) {
    %c0_i32 = arith.constant 0 : i32
    %c0_i32_0 = arith.constant 0 : i32
    return %arg0, %c0_i32 : i32, i32
  }
  func.func @transform_3(%arg0: i32) -> (i32, i32) {
    %c0_i32 = arith.constant 0 : i32
    %c0_i32_0 = arith.constant 0 : i32
    %c0_i32_1 = arith.constant 0 : i32
    return %c0_i32, %c0_i32_0 : i32, i32
  }
  func.func @transform_4(%arg0: i32) -> (i32, i32) {
    %c0_i32 = arith.constant 0 : i32
    %c0_i32_0 = arith.constant 0 : i32
    %c0_i32_1 = arith.constant 0 : i32
    return %c0_i32, %c0_i32_0 : i32, i32
  }
  func.func @transform_5(%arg0: i32) -> (i32, i32) {
    %c0_i32 = arith.constant 0 : i32
    %c0_i32_0 = arith.constant 0 : i32
    %c0_i32_1 = arith.constant 0 : i32
    return %c0_i32, %c0_i32_0 : i32, i32
  }
  func.func @transform_6(%arg0: i32) -> (i32, i32) {
    %c0_i32 = arith.constant 0 : i32
    %c0_i32_0 = arith.constant 0 : i32
    %c0_i32_1 = arith.constant 0 : i32
    return %c0_i32, %c0_i32_0 : i32, i32
  }
  func.func @transform_7(%arg0: i32) -> (i32, i32) {
    %c0_i32 = arith.constant 0 : i32
    %c0_i32_0 = arith.constant 0 : i32
    %c0_i32_1 = arith.constant 0 : i32
    return %c0_i32, %c0_i32_0 : i32, i32
  }
  func.func @transform_8(%arg0: i32) -> (i32, i32) {
    %c0_i32 = arith.constant 0 : i32
    %c0_i32_0 = arith.constant 0 : i32
    %c0_i32_1 = arith.constant 0 : i32
    return %c0_i32, %c0_i32_0 : i32, i32
  }
  func.func @transform_9(%arg0: i32) -> (i32, i32) {
    %c0_i32 = arith.constant 0 : i32
    %c0_i32_0 = arith.constant 0 : i32
    %c0_i32_1 = arith.constant 0 : i32
    return %c0_i32, %c0_i32_0 : i32, i32
  }
}

</mosaic_0001>

<llo_original>
// kernel: patch_gnp_forward.4
$region0: #{patch_gnp_forward.4}
  #allocation0 [shape = 'u32[]', space=smem, size = 0x4, offset = 0x4, fixed_abs, tag = 'smem constant byte address 0x4 - core index']
  #allocation1 [shape = 'u32[144,128]{1,0:T(1,128)}', space=vmem, size = 0x12000, scoped, tag = 'internal scratch']
  %s0 = inlined_call_operand.vmem [shape: f32[64,8], index: 0, kind: input, shape index: {}]
  %s1 = inlined_call_operand.vmem [shape: f32[8,16], index: 1, kind: input, shape index: {}]
  %s2 = inlined_call_operand.vmem [shape: f32[1,16], index: 2, kind: input, shape index: {}]
  %s3 = inlined_call_operand.vmem [shape: f32[64,16], index: 3, kind: output, shape index: {}]
  %s4 = sld [smem:[#allocation0]]
  $region22: #{patch_gnp_forward.4} parent=0
    _
  %s6 = ssub.s32 1, %s4
  %s7 = scalar_select 0, %s6, %s4
  // Predicated region
  $region2: #{patch_gnp_forward.4} parent=0 // pred_check
    _
  $region3: #{patch_gnp_forward.4} parent=0 // pred_check_branch
    %9 = sbr.rel (0) target = $region5
  $region4: #{patch_gnp_forward.4} parent=0 // pred_region
    _
  $region5: #{patch_gnp_forward.4} parent=0 // pred_fallthru
    _
  // Predicated region
  $region6: #{patch_gnp_forward.4} parent=0 // pred_check
    _
  $region7: #{patch_gnp_forward.4} parent=0 // pred_check_branch
    %11 = sbr.rel (0) target = $region9
  $region8: #{patch_gnp_forward.4} parent=0 // pred_region
    _
  $region9: #{patch_gnp_forward.4} parent=0 // pred_fallthru
    _
  // Predicated region
  $region10: #{patch_gnp_forward.4} parent=0 // pred_check
    _
  $region11: #{patch_gnp_forward.4} parent=0 // pred_check_branch
    %13 = sbr.rel (0) target = $region13
  $region12: #{patch_gnp_forward.4} parent=0 // pred_region
    _
  $region13: #{patch_gnp_forward.4} parent=0 // pred_fallthru
    _
  %v14 = vld [vmem:[%s0] sm:$0xff]
  %v15 = vld [vmem:[%s0 + $0x8] sm:$0xff]
  %v16 = vld [vmem:[%s0 + $0x10] sm:$0xff]
  %v17 = vld [vmem:[%s0 + $0x18] sm:$0xff]
  %v18 = vld [vmem:[%s0 + $0x20] sm:$0xff]
  %v19 = vld [vmem:[%s0 + $0x28] sm:$0xff]
  %v20 = vld [vmem:[%s0 + $0x30] sm:$0xff]
  %v21 = vld [vmem:[%s0 + $0x38] sm:$0xff]
  %v22 = vld [vmem:[%s1] sm:$0xff]
  %v23 = vld [vmem:[%s2] sm:$0x1]
  %v25 = vlaneseq
  %v26 = vshrl.u32 %v25, 7
  %v27 = vsub.s32 0, %v26
  %v28 = vrot.slane %v23, %v27
  %vm30 = vcmask 64512
  %v32 = vsel %vm30, %v14, 0
  %v35 = vsel %vm30, %v15, 0
  %v38 = vsel %vm30, %v16, 0
  %v41 = vsel %vm30, %v17, 0
  %v44 = vsel %vm30, %v18, 0
  %v47 = vsel %vm30, %v19, 0
  %v50 = vsel %vm30, %v20, 0
  %v53 = vsel %vm30, %v21, 0
  %55 = vmatprep.subr.mxu0 0.0
  %56 = vmatpush1.msra.mxu0 %v22
  %57 = vmatprep.subr.mxu0 0.0
  %58 = vmatpush1.msra.mxu0 0.0
  %59 = vmatprep.subr.mxu0 0.0
  %60 = vmatpush1.msra.mxu0 0.0
  %61 = vmatprep.subr.mxu0 0.0
  %62 = vmatpush1.msra.mxu0 0.0
  %63 = vmatprep.subr.mxu0 0.0
  %64 = vmatpush1.msra.mxu0 0.0
  %65 = vmatprep.subr.mxu0 0.0
  %66 = vmatpush1.msra.mxu0 0.0
  %67 = vmatprep.subr.mxu0 0.0
  %68 = vmatpush1.msra.mxu0 0.0
  %69 = vmatprep.subr.mxu0 0.0
  %70 = vmatpush1.msra.mxu0 0.0
  %71 = vmatprep.subr.mxu0 0.0
  %72 = vmatpush1.msra.mxu0 0.0
  %73 = vmatprep.subr.mxu0 0.0
  %74 = vmatpush1.msra.mxu0 0.0
  %75 = vmatprep.subr.mxu0 0.0
  %76 = vmatpush1.msra.mxu0 0.0
  %77 = vmatprep.subr.mxu0 0.0
  %78 = vmatpush1.msra.mxu0 0.0
  %79 = vmatprep.subr.mxu0 0.0
  %80 = vmatpush1.msra.mxu0 0.0
  %81 = vmatprep.subr.mxu0 0.0
  %82 = vmatpush1.msra.mxu0 0.0
  %83 = vmatprep.subr.mxu0 0.0
  %84 = vmatpush1.msra.mxu0 0.0
  %85 = vmatprep.subr.mxu0 0.0
  %86 = vmatpush1.msra.mxu0 0.0
  %87 = vmatprep.subr.mxu0 0.0
  %88 = vmatpush1.msra.mxu0 0.0
  %89 = vmatprep.subr.mxu0 0.0
  %90 = vmatpush1.msra.mxu0 0.0
  %91 = vmatprep.subr.mxu0 0.0
  %92 = vmatpush1.msra.mxu0 0.0
  %93 = vmatprep.subr.mxu0 0.0
  %94 = vmatpush1.msra.mxu0 0.0
  %95 = vmatprep.subr.mxu0 0.0
  %96 = vmatpush1.msra.mxu0 0.0
  %97 = vmatprep.subr.mxu0 0.0
  %98 = vmatpush1.msra.mxu0 0.0
  %99 = vmatprep.subr.mxu0 0.0
  %100 = vmatpush1.msra.mxu0 0.0
  %101 = vmatprep.subr.mxu0 0.0
  %102 = vmatpush1.msra.mxu0 0.0
  %103 = vmatprep.subr.mxu0 0.0
  %104 = vmatpush1.msra.mxu0 0.0
  %105 = vmatprep.subr.mxu0 0.0
  %106 = vmatpush1.msra.mxu0 0.0
  %107 = vmatprep.subr.mxu0 0.0
  %108 = vmatpush1.msra.mxu0 0.0
  %109 = vmatprep.subr.mxu0 0.0
  %110 = vmatpush1.msra.mxu0 0.0
  %111 = vmatprep.subr.mxu0 0.0
  %112 = vmatpush1.msra.mxu0 0.0
  %113 = vmatprep.subr.mxu0 0.0
  %114 = vmatpush1.msra.mxu0 0.0
  %115 = vmatprep.subr.mxu0 0.0
  %116 = vmatpush1.msra.mxu0 0.0
  %117 = vmatprep.subr.mxu0 0.0
  %118 = vmatpush1.msra.mxu0 0.0
  %119 = vmatprep.mubr.f32.mxu0 0.0
  %120 = vmatmul.mubr.f32.gmra.mrb[0].mxu0 %v32
  %v121 = vpop.f32.mrb[0].mxu0
  %v122 = vadd.f32 %v28, %v121
  %v123 = vpop.f32.mrb[0].mxu0
  %124 = vmatprep.mubr.f32.mxu0 0.0
  %125 = vmatmul.mubr.f32.gmra.mrb[0].mxu0 %v35
  %v126 = vpop.f32.mrb[0].mxu0
  %v127 = vadd.f32 %v28, %v126
  %v128 = vpop.f32.mrb[0].mxu0
  %129 = vmatprep.mubr.f32.mxu0 0.0
  %130 = vmatmul.mubr.f32.gmra.mrb[0].mxu0 %v38
  %v131 = vpop.f32.mrb[0].mxu0
  %v132 = vadd.f32 %v28, %v131
  %v133 = vpop.f32.mrb[0].mxu0
  %134 = vmatprep.mubr.f32.mxu0 0.0
  %135 = vmatmul.mubr.f32.gmra.mrb[0].mxu0 %v41
  %v136 = vpop.f32.mrb[0].mxu0
  %v137 = vadd.f32 %v28, %v136
  %v138 = vpop.f32.mrb[0].mxu0
  %139 = vmatprep.mubr.f32.mxu0 0.0
  %140 = vmatmul.mubr.f32.gmra.mrb[0].mxu0 %v44
  %v141 = vpop.f32.mrb[0].mxu0
  %v142 = vadd.f32 %v28, %v141
  %v143 = vpop.f32.mrb[0].mxu0
  %144 = vmatprep.mubr.f32.mxu0 0.0
  %145 = vmatmul.mubr.f32.gmra.mrb[0].mxu0 %v47
  %v146 = vpop.f32.mrb[0].mxu0
  %v147 = vadd.f32 %v28, %v146
  %v148 = vpop.f32.mrb[0].mxu0
  %149 = vmatprep.mubr.f32.mxu0 0.0
  %150 = vmatmul.mubr.f32.gmra.mrb[0].mxu0 %v50
  %v151 = vpop.f32.mrb[0].mxu0
  %v152 = vadd.f32 %v28, %v151
  %v153 = vpop.f32.mrb[0].mxu0
  %154 = vmatprep.mubr.f32.mxu0 0.0
  %155 = vmatmul.mubr.f32.gmra.mrb[0].mxu0 %v53
  %v156 = vpop.f32.mrb[0].mxu0
  %v157 = vadd.f32 %v28, %v156
  %v158 = vpop.f32.mrb[0].mxu0
  %159 = vdwg.mxu0
  %vm160 = vcmask 130048
  %161 = vst.msk [vmem:[%s3] sm:$0xff] %vm160, %v122
  %162 = vst.msk [vmem:[%s3 + $0x8] sm:$0xff] %vm160, %v127
  %163 = vst.msk [vmem:[%s3 + $0x10] sm:$0xff] %vm160, %v132
  %164 = vst.msk [vmem:[%s3 + $0x18] sm:$0xff] %vm160, %v137
  %165 = vst.msk [vmem:[%s3 + $0x20] sm:$0xff] %vm160, %v142
  %166 = vst.msk [vmem:[%s3 + $0x28] sm:$0xff] %vm160, %v147
  %167 = vst.msk [vmem:[%s3 + $0x30] sm:$0xff] %vm160, %v152
  %168 = vst.msk [vmem:[%s3 + $0x38] sm:$0xff] %vm160, %v157
  // Predicated region
  $region14: #{patch_gnp_forward.4} parent=0 // pred_check
    _
  $region15: #{patch_gnp_forward.4} parent=0 // pred_check_branch
    %170 = sbr.rel (0) target = $region17
  $region16: #{patch_gnp_forward.4} parent=0 // pred_region
    _
  $region17: #{patch_gnp_forward.4} parent=0 // pred_fallthru
    _
  // Predicated region
  $region18: #{patch_gnp_forward.4} parent=0 // pred_check
    _
  $region19: #{patch_gnp_forward.4} parent=0 // pred_check_branch
    %172 = sbr.rel (0) target = $region21
  $region20: #{patch_gnp_forward.4} parent=0 // pred_region
    _
  $region21: #{patch_gnp_forward.4} parent=0 // pred_fallthru
    _

// kernel: patch_gnp_forward.7
$region0: #{patch_gnp_forward.7}
  #allocation0 [shape = 'u32[]', space=smem, size = 0x4, offset = 0x4, fixed_abs, tag = 'smem constant byte address 0x4 - core index']
  #allocation1 [shape = 'u32[144,128]{1,0:T(1,128)}', space=vmem, size = 0x12000, scoped, tag = 'internal scratch']
  #allocation2 [shape = 'f32[2,16]{1,0:T(2,128)}', space=vmem, size = 0x400, scoped, tag = 'scratch operand']
  %s0 = inlined_call_operand.vmem [shape: s32[1,64], index: 0, kind: input, shape index: {}]
  %s1 = inlined_call_operand.vmem [shape: f32[1,64], index: 1, kind: input, shape index: {}]
  %s2 = inlined_call_operand.vmem [shape: f32[64,32], index: 2, kind: input, shape index: {}]
  %s3 = inlined_call_operand.vmem [shape: f32[32,16], index: 3, kind: input, shape index: {}]
  %s4 = inlined_call_operand.vmem [shape: f32[1,16], index: 4, kind: input, shape index: {}]
  %s5 = inlined_call_operand.vmem [shape: f32[16,32], index: 5, kind: input, shape index: {}]
  %s6 = inlined_call_operand.vmem [shape: f32[1,32], index: 6, kind: input, shape index: {}]
  %s7 = inlined_call_operand.vmem [shape: f32[32,8], index: 7, kind: input, shape index: {}]
  %s8 = inlined_call_operand.vmem [shape: f32[1,8], index: 8, kind: input, shape index: {}]
  %s9 = inlined_call_operand.hbm [shape: f32[2,8], index: 9, kind: output, shape index: {}]
  %s10 = sld [smem:[#allocation0]]
  $region54: #{patch_gnp_forward.7} parent=0
    _
  %s12 = ssub.s32 1, %s10
  %s13 = scalar_select 0, %s12, %s10
  $region1: #{patch_gnp_forward.7} parent=0
    #allocation3 [shape = 'u8[1024]{0}', space=vmem, size = 0x400, scoped, tag = 'output window, operand 0, single buffered']
    #allocation4 [shape = 's32[1]{0}', space=sflag, size = 0x4, scoped, tag = 'scoped memory for patch_gnp_forward.7']
    %14 = vsyncpa [#allocation4], 0
    // Predicated region
    $region2: #{patch_gnp_forward.7} parent=1 // pred_check
      _
    $region3: #{patch_gnp_forward.7} parent=1 // pred_check_branch
      %16 = sbr.rel (0) target = $region5
    $region4: #{patch_gnp_forward.7} parent=1 // pred_region
      _
    $region5: #{patch_gnp_forward.7} parent=1 // pred_fallthru
      _
    // Predicated region
    $region6: #{patch_gnp_forward.7} parent=1 // pred_check
      _
    $region7: #{patch_gnp_forward.7} parent=1 // pred_check_branch
      %18 = sbr.rel (0) target = $region9
    $region8: #{patch_gnp_forward.7} parent=1 // pred_region
      _
    $region9: #{patch_gnp_forward.7} parent=1 // pred_fallthru
      _
    // Predicated region
    $region10: #{patch_gnp_forward.7} parent=1 // pred_check
      _
    $region11: #{patch_gnp_forward.7} parent=1 // pred_check_branch
      %20 = sbr.rel (0) target = $region13
    $region12: #{patch_gnp_forward.7} parent=1 // pred_region
      _
    $region13: #{patch_gnp_forward.7} parent=1 // pred_fallthru
      _
    // Predicated region
    $region14: #{patch_gnp_forward.7} parent=1 // pred_check
      _
    $region15: #{patch_gnp_forward.7} parent=1 // pred_check_branch
      %22 = sbr.rel (0) target = $region17
    $region16: #{patch_gnp_forward.7} parent=1 // pred_region
      _
    $region17: #{patch_gnp_forward.7} parent=1 // pred_fallthru
      _
    // Predicated region
    $region18: #{patch_gnp_forward.7} parent=1 // pred_check
      _
    $region19: #{patch_gnp_forward.7} parent=1 // pred_check_branch
      %24 = sbr.rel (0) target = $region21
    $region20: #{patch_gnp_forward.7} parent=1 // pred_region
      _
    $region21: #{patch_gnp_forward.7} parent=1 // pred_fallthru
      _
    // Predicated region
    $region22: #{patch_gnp_forward.7} parent=1 // pred_check
      _
    $region23: #{patch_gnp_forward.7} parent=1 // pred_check_branch
      %26 = sbr.rel (0) target = $region25
    $region24: #{patch_gnp_forward.7} parent=1 // pred_region
      _
    $region25: #{patch_gnp_forward.7} parent=1 // pred_fallthru
      _
    // Predicated region
    $region26: #{patch_gnp_forward.7} parent=1 // pred_check
      _
    $region27: #{patch_gnp_forward.7} parent=1 // pred_check_branch
      %28 = sbr.rel (0) target = $region29
    $region28: #{patch_gnp_forward.7} parent=1 // pred_region
      _
    $region29: #{patch_gnp_forward.7} parent=1 // pred_fallthru
      _
    // Predicated region
    $region30: #{patch_gnp_forward.7} parent=1 // pred_check
      _
    $region31: #{patch_gnp_forward.7} parent=1 // pred_check_branch
      %30 = sbr.rel (0) target = $region33
    $region32: #{patch_gnp_forward.7} parent=1 // pred_region
      _
    $region33: #{patch_gnp_forward.7} parent=1 // pred_fallthru
      _
    // Predicated region
    $region34: #{patch_gnp_forward.7} parent=1 // pred_check
      _
    $region35: #{patch_gnp_forward.7} parent=1 // pred_check_branch
      %32 = sbr.rel (0) target = $region37
    $region36: #{patch_gnp_forward.7} parent=1 // pred_region
      _
    $region37: #{patch_gnp_forward.7} parent=1 // pred_fallthru
      _
    %p33 = scmp.eq.s32.totalorder 0, 0
    // Predicated region
    $region38: #{patch_gnp_forward.7} parent=1 // pred_check
      %p34 = pneg %p33
    $region39: #{patch_gnp_forward.7} parent=1 // pred_check_branch
      %36 = sbr.rel (%p34) target = $region41
    $region40: #{patch_gnp_forward.7} parent=1 // pred_region
      %vm37 = vcmask 123904
      %38 = vst.msk [vmem:[#allocation2] sm:$0x3] %vm37, 0.0
    $region41: #{patch_gnp_forward.7} parent=1 // pred_fallthru
      _
    %v39 = vld [vmem:[%s2] sm:$0xff]
    %v40 = vld [vmem:[%s2 + $0x8] sm:$0xff]
    %v41 = vld [vmem:[%s2 + $0x10] sm:$0xff]
    %v42 = vld [vmem:[%s2 + $0x18] sm:$0xff]
    %v43 = vld [vmem:[%s2 + $0x20] sm:$0xff]
    %v44 = vld [vmem:[%s2 + $0x28] sm:$0xff]
    %v45 = vld [vmem:[%s2 + $0x30] sm:$0xff]
    %v46 = vld [vmem:[%s2 + $0x38] sm:$0xff]
    %v47 = vld [vmem:[%s3] sm:$0xff]
    %v48 = vld [vmem:[%s3 + $0x8] sm:$0xff]
    %v49 = vld [vmem:[%s3 + $0x10] sm:$0xff]
    %v50 = vld [vmem:[%s3 + $0x18] sm:$0xff]
    %v51 = vld [vmem:[%s4] sm:$0x1]
    %v53 = vlaneseq
    %v54 = vshrl.u32 %v53, 7
    %v55 = vsub.s32 0, %v54
    %v56 = vrot.slane %v51, %v55
    %vm58 = vcmask 261120
    %v60 = vsel %vm58, %v39, 0
    %v63 = vsel %vm58, %v40, 0
    %v66 = vsel %vm58, %v41, 0
    %v69 = vsel %vm58, %v42, 0
    %v72 = vsel %vm58, %v43, 0
    %v75 = vsel %vm58, %v44, 0
    %v78 = vsel %vm58, %v45, 0
    %v81 = vsel %vm58, %v46, 0
    %83 = vmatprep.subr.mxu0 0.0
    %84 = vmatpush1.msra.mxu0 %v47
    %85 = vmatprep.subr.mxu0 0.0
    %86 = vmatpush1.msra.mxu0 %v48
    %87 = vmatprep.subr.mxu0 0.0
    %88 = vmatpush1.msra.mxu0 %v49
    %89 = vmatprep.subr.mxu0 0.0
    %90 = vmatpush1.msra.mxu0 %v50
    %91 = vmatprep.subr.mxu0 0.0
    %92 = vmatpush1.msra.mxu0 0.0
    %93 = vmatprep.subr.mxu0 0.0
    %94 = vmatpush1.msra.mxu0 0.0
    %95 = vmatprep.subr.mxu0 0.0
    %96 = vmatpush1.msra.mxu0 0.0
    %97 = vmatprep.subr.mxu0 0.0
    %98 = vmatpush1.msra.mxu0 0.0
    %99 = vmatprep.subr.mxu0 0.0
    %100 = vmatpush1.msra.mxu0 0.0
    %101 = vmatprep.subr.mxu0 0.0
    %102 = vmatpush1.msra.mxu0 0.0
    %103 = vmatprep.subr.mxu0 0.0
    %104 = vmatpush1.msra.mxu0 0.0
    %105 = vmatprep.subr.mxu0 0.0
    %106 = vmatpush1.msra.mxu0 0.0
    %107 = vmatprep.subr.mxu0 0.0
    %108 = vmatpush1.msra.mxu0 0.0
    %109 = vmatprep.subr.mxu0 0.0
    %110 = vmatpush1.msra.mxu0 0.0
    %111 = vmatprep.subr.mxu0 0.0
    %112 = vmatpush1.msra.mxu0 0.0
    %113 = vmatprep.subr.mxu0 0.0
    %114 = vmatpush1.msra.mxu0 0.0
    %115 = vmatprep.subr.mxu0 0.0
    %116 = vmatpush1.msra.mxu0 0.0
    %117 = vmatprep.subr.mxu0 0.0
    %118 = vmatpush1.msra.mxu0 0.0
    %119 = vmatprep.subr.mxu0 0.0
    %120 = vmatpush1.msra.mxu0 0.0
    %121 = vmatprep.subr.mxu0 0.0
    %122 = vmatpush1.msra.mxu0 0.0
    %123 = vmatprep.subr.mxu0 0.0
    %124 = vmatpush1.msra.mxu0 0.0
    %125 = vmatprep.subr.mxu0 0.0
    %126 = vmatpush1.msra.mxu0 0.0
    %127 = vmatprep.subr.mxu0 0.0
    %128 = vmatpush1.msra.mxu0 0.0
    %129 = vmatprep.subr.mxu0 0.0
    %130 = vmatpush1.msra.mxu0 0.0
    %131 = vmatprep.subr.mxu0 0.0
    %132 = vmatpush1.msra.mxu0 0.0
    %133 = vmatprep.subr.mxu0 0.0
    %134 = vmatpush1.msra.mxu0 0.0
    %135 = vmatprep.subr.mxu0 0.0
    %136 = vmatpush1.msra.mxu0 0.0
    %137 = vmatprep.subr.mxu0 0.0
    %138 = vmatpush1.msra.mxu0 0.0
    %139 = vmatprep.subr.mxu0 0.0
    %140 = vmatpush1.msra.mxu0 0.0
    %141 = vmatprep.subr.mxu0 0.0
    %142 = vmatpush1.msra.mxu0 0.0
    %143 = vmatprep.subr.mxu0 0.0
    %144 = vmatpush1.msra.mxu0 0.0
    %145 = vmatprep.subr.mxu0 0.0
    %146 = vmatpush1.msra.mxu0 0.0
    %147 = vmatprep.mubr.f32.mxu0 0.0
    %148 = vmatmul.mubr.f32.gmra.mrb[0].mxu0 %v60
    %v149 = vpop.f32.mrb[0].mxu0
    %v150 = vadd.f32 %v56, %v149
    %v151 = vpop.f32.mrb[0].mxu0
    %152 = vmatprep.mubr.f32.mxu0 0.0
    %153 = vmatmul.mubr.f32.gmra.mrb[0].mxu0 %v63
    %v154 = vpop.f32.mrb[0].mxu0
    %v155 = vadd.f32 %v56, %v154
    %v156 = vpop.f32.mrb[0].mxu0
    %157 = vmatprep.mubr.f32.mxu0 0.0
    %158 = vmatmul.mubr.f32.gmra.mrb[0].mxu0 %v66
    %v159 = vpop.f32.mrb[0].mxu0
    %v160 = vadd.f32 %v56, %v159
    %v161 = vpop.f32.mrb[0].mxu0
    %162 = vmatprep.mubr.f32.mxu0 0.0
    %163 = vmatmul.mubr.f32.gmra.mrb[0].mxu0 %v69
    %v164 = vpop.f32.mrb[0].mxu0
    %v165 = vadd.f32 %v56, %v164
    %v166 = vpop.f32.mrb[0].mxu0
    %167 = vmatprep.mubr.f32.mxu0 0.0
    %168 = vmatmul.mubr.f32.gmra.mrb[0].mxu0 %v72
    %v169 = vpop.f32.mrb[0].mxu0
    %v170 = vadd.f32 %v56, %v169
    %v171 = vpop.f32.mrb[0].mxu0
    %172 = vmatprep.mubr.f32.mxu0 0.0
    %173 = vmatmul.mubr.f32.gmra.mrb[0].mxu0 %v75
    %v174 = vpop.f32.mrb[0].mxu0
    %v175 = vadd.f32 %v56, %v174
    %v176 = vpop.f32.mrb[0].mxu0
    %177 = vmatprep.mubr.f32.mxu0 0.0
    %178 = vmatmul.mubr.f32.gmra.mrb[0].mxu0 %v78
    %v179 = vpop.f32.mrb[0].mxu0
    %v180 = vadd.f32 %v56, %v179
    %v181 = vpop.f32.mrb[0].mxu0
    %182 = vmatprep.mubr.f32.mxu0 0.0
    %183 = vmatmul.mubr.f32.gmra.mrb[0].mxu0 %v81
    %v184 = vpop.f32.mrb[0].mxu0
    %v185 = vadd.f32 %v56, %v184
    %v186 = vpop.f32.mrb[0].mxu0
    %187 = vdwg.mxu0
    %v188 = vlaneseq
    %v189 = vshrl.u32 %v188, 7
    %v190 = vld [vmem:[%s0] sm:$0x1]
    %v191 = vlaneseq
    %v192 = vshrl.u32 %v191, 7
    %v193 = vsub.s32 0, %v192
    %v194 = vrot.slane %v190, %v193
    %vm195 = vcmp.eq.s32.totalorder %v189, %v194
    %v196 = vsel %vm195, 1, 0
    %v197 = vcvt.s32.f32 %v196
    %v198 = vld [vmem:[%s1] sm:$0x1]
    %v200 = vlaneseq
    %v201 = vshrl.u32 %v200, 7
    %v202 = vsub.s32 0, %v201
    %v203 = vrot.slane %v198, %v202
    %v205 = vmul.f32 %v197, %v203
    %v206 = vld [vmem:[#allocation2] sm:$0x3]
    %vm207 = vcmask 523264
    %v209 = vsel %vm207, %v205, 0
    %211 = vmatprep.subr.mxu0 0.0
    %212 = vmatpush1.msra.mxu0 %v150
    %213 = vmatprep.subr.mxu0 0.0
    %214 = vmatpush1.msra.mxu0 %v155
    %215 = vmatprep.subr.mxu0 0.0
    %216 = vmatpush1.msra.mxu0 %v160
    %217 = vmatprep.subr.mxu0 0.0
    %218 = vmatpush1.msra.mxu0 %v165
    %219 = vmatprep.subr.mxu0 0.0
    %220 = vmatpush1.msra.mxu0 %v170
    %221 = vmatprep.subr.mxu0 0.0
    %222 = vmatpush1.msra.mxu0 %v175
    %223 = vmatprep.subr.mxu0 0.0
    %224 = vmatpush1.msra.mxu0 %v180
    %225 = vmatprep.subr.mxu0 0.0
    %226 = vmatpush1.msra.mxu0 %v185
    %227 = vmatprep.subr.mxu0 0.0
    %228 = vmatpush1.msra.mxu0 0.0
    %229 = vmatprep.subr.mxu0 0.0
    %230 = vmatpush1.msra.mxu0 0.0
    %231 = vmatprep.subr.mxu0 0.0
    %232 = vmatpush1.msra.mxu0 0.0
    %233 = vmatprep.subr.mxu0 0.0
    %234 = vmatpush1.msra.mxu0 0.0
    %235 = vmatprep.subr.mxu0 0.0
    %236 = vmatpush1.msra.mxu0 0.0
    %237 = vmatprep.subr.mxu0 0.0
    %238 = vmatpush1.msra.mxu0 0.0
    %239 = vmatprep.subr.mxu0 0.0
    %240 = vmatpush1.msra.mxu0 0.0
    %241 = vmatprep.subr.mxu0 0.0
    %242 = vmatpush1.msra.mxu0 0.0
    %243 = vmatprep.subr.mxu0 0.0
    %244 = vmatpush1.msra.mxu0 0.0
    %245 = vmatprep.subr.mxu0 0.0
    %246 = vmatpush1.msra.mxu0 0.0
    %247 = vmatprep.subr.mxu0 0.0
    %248 = vmatpush1.msra.mxu0 0.0
    %249 = vmatprep.subr.mxu0 0.0
    %250 = vmatpush1.msra.mxu0 0.0
    %251 = vmatprep.subr.mxu0 0.0
    %252 = vmatpush1.msra.mxu0 0.0
    %253 = vmatprep.subr.mxu0 0.0
    %254 = vmatpush1.msra.mxu0 0.0
    %255 = vmatprep.subr.mxu0 0.0
    %256 = vmatpush1.msra.mxu0 0.0
    %257 = vmatprep.subr.mxu0 0.0
    %258 = vmatpush1.msra.mxu0 0.0
    %259 = vmatprep.subr.mxu0 0.0
    %260 = vmatpush1.msra.mxu0 0.0
    %261 = vmatprep.subr.mxu0 0.0
    %262 = vmatpush1.msra.mxu0 0.0
    %263 = vmatprep.subr.mxu0 0.0
    %264 = vmatpush1.msra.mxu0 0.0
    %265 = vmatprep.subr.mxu0 0.0
    %266 = vmatpush1.msra.mxu0 0.0
    %267 = vmatprep.subr.mxu0 0.0
    %268 = vmatpush1.msra.mxu0 0.0
    %269 = vmatprep.subr.mxu0 0.0
    %270 = vmatpush1.msra.mxu0 0.0
    %271 = vmatprep.subr.mxu0 0.0
    %272 = vmatpush1.msra.mxu0 0.0
    %273 = vmatprep.subr.mxu0 0.0
    %274 = vmatpush1.msra.mxu0 0.0
    %275 = vmatprep.mubr.f32.mxu0 0.0
    %276 = vmatmul.mubr.f32.gmra.mrb[0].mxu0 %v209
    %v277 = vpop.f32.mrb[0].mxu0
    %v278 = vadd.f32 0.0, %v277
    %v279 = vpop.f32.mrb[0].mxu0
    %280 = vdwg.mxu0
    %v281 = vadd.f32 %v206, %v278
    %vm282 = vcmask 123904
    %283 = vst.msk [vmem:[#allocation2] sm:$0x3] %vm282, %v281
    // Predicated region
    $region42: #{patch_gnp_forward.7} parent=1 // pred_check
      %p284 = pneg %p33
    $region43: #{patch_gnp_forward.7} parent=1 // pred_check_branch
      %286 = sbr.rel (%p284) target = $region45
    $region44: #{patch_gnp_forward.7} parent=1 // pred_region
      %v287 = vld [vmem:[#allocation2] sm:$0x3]
      %v288 = vld [vmem:[%s5] sm:$0xff]
      %v289 = vld [vmem:[%s5 + $0x8] sm:$0xff]
      %v290 = vld [vmem:[%s6] sm:$0x1]
      %v292 = vlaneseq
      %v293 = vshrl.u32 %v292, 7
      %v294 = vsub.s32 0, %v293
      %v295 = vrot.slane %v290, %v294
      %vm297 = vcmask 130048
      %v299 = vsel %vm297, %v287, 0
      %301 = vmatprep.subr.mxu0 0.0
      %302 = vmatpush1.msra.mxu0 %v288
      %303 = vmatprep.subr.mxu0 0.0
      %304 = vmatpush1.msra.mxu0 %v289
      %305 = vmatprep.subr.mxu0 0.0
      %306 = vmatpush1.msra.mxu0 0.0
      %307 = vmatprep.subr.mxu0 0.0
      %308 = vmatpush1.msra.mxu0 0.0
      %309 = vmatprep.subr.mxu0 0.0
      %310 = vmatpush1.msra.mxu0 0.0
      %311 = vmatprep.subr.mxu0 0.0
      %312 = vmatpush1.msra.mxu0 0.0
      %313 = vmatprep.subr.mxu0 0.0
      %314 = vmatpush1.msra.mxu0 0.0
      %315 = vmatprep.subr.mxu0 0.0
      %316 = vmatpush1.msra.mxu0 0.0
      %317 = vmatprep.subr.mxu0 0.0
      %318 = vmatpush1.msra.mxu0 0.0
      %319 = vmatprep.subr.mxu0 0.0
      %320 = vmatpush1.msra.mxu0 0.0
      %321 = vmatprep.subr.mxu0 0.0
      %322 = vmatpush1.msra.mxu0 0.0
      %323 = vmatprep.subr.mxu0 0.0
      %324 = vmatpush1.msra.mxu0 0.0
      %325 = vmatprep.subr.mxu0 0.0
      %326 = vmatpush1.msra.mxu0 0.0
      %327 = vmatprep.subr.mxu0 0.0
      %328 = vmatpush1.msra.mxu0 0.0
      %329 = vmatprep.subr.mxu0 0.0
      %330 = vmatpush1.msra.mxu0 0.0
      %331 = vmatprep.subr.mxu0 0.0
      %332 = vmatpush1.msra.mxu0 0.0
      %333 = vmatprep.subr.mxu0 0.0
      %334 = vmatpush1.msra.mxu0 0.0
      %335 = vmatprep.subr.mxu0 0.0
      %336 = vmatpush1.msra.mxu0 0.0
      %337 = vmatprep.subr.mxu0 0.0
      %338 = vmatpush1.msra.mxu0 0.0
      %339 = vmatprep.subr.mxu0 0.0
      %340 = vmatpush1.msra.mxu0 0.0
      %341 = vmatprep.subr.mxu0 0.0
      %342 = vmatpush1.msra.mxu0 0.0
      %343 = vmatprep.subr.mxu0 0.0
      %344 = vmatpush1.msra.mxu0 0.0
      %345 = vmatprep.subr.mxu0 0.0
      %346 = vmatpush1.msra.mxu0 0.0
      %347 = vmatprep.subr.mxu0 0.0
      %348 = vmatpush1.msra.mxu0 0.0
      %349 = vmatprep.subr.mxu0 0.0
      %350 = vmatpush1.msra.mxu0 0.0
      %351 = vmatprep.subr.mxu0 0.0
      %352 = vmatpush1.msra.mxu0 0.0
      %353 = vmatprep.subr.mxu0 0.0
      %354 = vmatpush1.msra.mxu0 0.0
      %355 = vmatprep.subr.mxu0 0.0
      %356 = vmatpush1.msra.mxu0 0.0
      %357 = vmatprep.subr.mxu0 0.0
      %358 = vmatpush1.msra.mxu0 0.0
      %359 = vmatprep.subr.mxu0 0.0
      %360 = vmatpush1.msra.mxu0 0.0
      %361 = vmatprep.subr.mxu0 0.0
      %362 = vmatpush1.msra.mxu0 0.0
      %363 = vmatprep.subr.mxu0 0.0
      %364 = vmatpush1.msra.mxu0 0.0
      %365 = vmatprep.mubr.f32.mxu0 0.0
      %366 = vmatmul.mubr.f32.gmra.mrb[0].mxu0 %v299
      %v367 = vpop.f32.mrb[0].mxu0
      %v368 = vadd.f32 %v295, %v367
      %v369 = vpop.f32.mrb[0].mxu0
      %370 = vdwg.mxu0
      %v371 = vmax.f32 %v368, 0.0
      %v372 = vld [vmem:[%s7] sm:$0xff]
      %v373 = vld [vmem:[%s7 + $0x8] sm:$0xff]
      %v374 = vld [vmem:[%s7 + $0x10] sm:$0xff]
      %v375 = vld [vmem:[%s7 + $0x18] sm:$0xff]
      %v376 = vld [vmem:[%s8] sm:$0x1]
      %v378 = vlaneseq
      %v379 = vshrl.u32 %v378, 7
      %v380 = vsub.s32 0, %v379
      %v381 = vrot.slane %v376, %v380
      %v384 = vsel %vm58, %v371, 0
      %386 = vmatprep.subr.mxu0 0.0
      %387 = vmatpush1.msra.mxu0 %v372
      %388 = vmatprep.subr.mxu0 0.0
      %389 = vmatpush1.msra.mxu0 %v373
      %390 = vmatprep.subr.mxu0 0.0
      %391 = vmatpush1.msra.mxu0 %v374
      %392 = vmatprep.subr.mxu0 0.0
      %393 = vmatpush1.msra.mxu0 %v375
      %394 = vmatprep.subr.mxu0 0.0
      %395 = vmatpush1.msra.mxu0 0.0
      %396 = vmatprep.subr.mxu0 0.0
      %397 = vmatpush1.msra.mxu0 0.0
      %398 = vmatprep.subr.mxu0 0.0
      %399 = vmatpush1.msra.mxu0 0.0
      %400 = vmatprep.subr.mxu0 0.0
      %401 = vmatpush1.msra.mxu0 0.0
      %402 = vmatprep.subr.mxu0 0.0
      %403 = vmatpush1.msra.mxu0 0.0
      %404 = vmatprep.subr.mxu0 0.0
      %405 = vmatpush1.msra.mxu0 0.0
      %406 = vmatprep.subr.mxu0 0.0
      %407 = vmatpush1.msra.mxu0 0.0
      %408 = vmatprep.subr.mxu0 0.0
      %409 = vmatpush1.msra.mxu0 0.0
      %410 = vmatprep.subr.mxu0 0.0
      %411 = vmatpush1.msra.mxu0 0.0
      %412 = vmatprep.subr.mxu0 0.0
      %413 = vmatpush1.msra.mxu0 0.0
      %414 = vmatprep.subr.mxu0 0.0
      %415 = vmatpush1.msra.mxu0 0.0
      %416 = vmatprep.subr.mxu0 0.0
      %417 = vmatpush1.msra.mxu0 0.0
      %418 = vmatprep.subr.mxu0 0.0
      %419 = vmatpush1.msra.mxu0 0.0
      %420 = vmatprep.subr.mxu0 0.0
      %421 = vmatpush1.msra.mxu0 0.0
      %422 = vmatprep.subr.mxu0 0.0
      %423 = vmatpush1.msra.mxu0 0.0
      %424 = vmatprep.subr.mxu0 0.0
      %425 = vmatpush1.msra.mxu0 0.0
      %426 = vmatprep.subr.mxu0 0.0
      %427 = vmatpush1.msra.mxu0 0.0
      %428 = vmatprep.subr.mxu0 0.0
      %429 = vmatpush1.msra.mxu0 0.0
      %430 = vmatprep.subr.mxu0 0.0
      %431 = vmatpush1.msra.mxu0 0.0
      %432 = vmatprep.subr.mxu0 0.0
      %433 = vmatpush1.msra.mxu0 0.0
      %434 = vmatprep.subr.mxu0 0.0
      %435 = vmatpush1.msra.mxu0 0.0
      %436 = vmatprep.subr.mxu0 0.0
      %437 = vmatpush1.msra.mxu0 0.0
      %438 = vmatprep.subr.mxu0 0.0
      %439 = vmatpush1.msra.mxu0 0.0
      %440 = vmatprep.subr.mxu0 0.0
      %441 = vmatpush1.msra.mxu0 0.0
      %442 = vmatprep.subr.mxu0 0.0
      %443 = vmatpush1.msra.mxu0 0.0
      %444 = vmatprep.subr.mxu0 0.0
      %445 = vmatpush1.msra.mxu0 0.0
      %446 = vmatprep.subr.mxu0 0.0
      %447 = vmatpush1.msra.mxu0 0.0
      %448 = vmatprep.subr.mxu0 0.0
      %449 = vmatpush1.msra.mxu0 0.0
      %450 = vmatprep.mubr.f32.mxu0 0.0
      %451 = vmatmul.mubr.f32.gmra.mrb[0].mxu0 %v384
      %v452 = vpop.f32.mrb[0].mxu0
      %v453 = vadd.f32 %v381, %v452
      %v454 = vpop.f32.mrb[0].mxu0
      %455 = vdwg.mxu0
      %vm456 = vcmask 58368
      %457 = vst.msk [vmem:[#allocation3] sm:$0x3] %vm456, %v453
    $region45: #{patch_gnp_forward.7} parent=1 // pred_fallthru
      _
    // Predicated region
    $region46: #{patch_gnp_forward.7} parent=1 // pred_check
      _
    $region47: #{patch_gnp_forward.7} parent=1 // pred_check_branch
      %459 = sbr.rel (0) target = $region49
    $region48: #{patch_gnp_forward.7} parent=1 // pred_region
      %s461 = ssub.s32 32, 32
      %462 = vsyncadd [#allocation4], %s461
      %s464 = sshll.u32 [#allocation3], 4
      %s465 = int_to_ptr.vmem [resolvable:$true] %s464
      %467 = dma.vmem_to_hbm [thread:$0]  %s465, 32, %s9, [#allocation4]
    $region49: #{patch_gnp_forward.7} parent=1 // pred_fallthru
      _
    // Predicated region
    $region50: #{patch_gnp_forward.7} parent=1 // pred_check
      _
    $region51: #{patch_gnp_forward.7} parent=1 // pred_check_branch
      %469 = sbr.rel (0) target = $region53
    $region52: #{patch_gnp_forward.7} parent=1 // pred_region
      %470 = dma.done [#allocation4], 32
    $region53: #{patch_gnp_forward.7} parent=1 // pred_fallthru
      _
    %471 = vsyncpa [#allocation4], 1

// kernel: patch_gnp_forward.5
$region0: #{patch_gnp_forward.5}
  #allocation0 [shape = 'u32[]', space=smem, size = 0x4, offset = 0x4, fixed_abs, tag = 'smem constant byte address 0x4 - core index']
  #allocation1 [shape = 'u32[144,128]{1,0:T(1,128)}', space=vmem, size = 0x12000, scoped, tag = 'internal scratch']
  %s0 = inlined_call_operand.vmem [shape: s32[256,1], index: 0, kind: input, shape index: {}]
  %s1 = inlined_call_operand.vmem [shape: s32[1,256], index: 1, kind: input, shape index: {}]
  %s2 = inlined_call_operand.vmem [shape: f32[256,4], index: 2, kind: input, shape index: {}]
  %s3 = inlined_call_operand.vmem [shape: f32[64,16], index: 3, kind: input, shape index: {}]
  %s4 = inlined_call_operand.vmem [shape: f32[4,128], index: 4, kind: input, shape index: {}]
  %s5 = inlined_call_operand.vmem [shape: f32[1,128], index: 5, kind: input, shape index: {}]
  %s6 = inlined_call_operand.vmem [shape: f32[128,128], index: 6, kind: input, shape index: {}]
  %s7 = inlined_call_operand.vmem [shape: f32[1,128], index: 7, kind: input, shape index: {}]
  %s8 = inlined_call_operand.vmem [shape: f32[16,128], index: 8, kind: input, shape index: {}]
  %s9 = inlined_call_operand.vmem [shape: f32[128,32], index: 9, kind: input, shape index: {}]
  %s10 = inlined_call_operand.vmem [shape: f32[64,1], index: 10, kind: input, shape index: {}]
  %s11 = inlined_call_operand.vmem [shape: f32[16,32], index: 11, kind: input, shape index: {}]
  %s12 = inlined_call_operand.vmem [shape: f32[1,32], index: 12, kind: input, shape index: {}]
  %s13 = inlined_call_operand.vmem [shape: f32[32,32], index: 13, kind: input, shape index: {}]
  %s14 = inlined_call_operand.vmem [shape: f32[1,32], index: 14, kind: input, shape index: {}]
  %s15 = inlined_call_operand.vmem [shape: f32[64,32], index: 15, kind: output, shape index: {}]
  %s16 = sld [smem:[#allocation0]]
  $region101: #{patch_gnp_forward.5} parent=0
    _
  %s18 = ssub.s32 1, %s16
  %s19 = scalar_select 0, %s18, %s16
  loop: start=0, step=1, limit=4
  $region2: #{patch_gnp_forward.5} parent=0 // loop_pre_header
    _
  $region3: #{patch_gnp_forward.5} parent=0 // loop_header
    %s21 = sphi 0, %s25
    %p22 = scmp.ge.s32.totalorder %s21, 4
    %s31 = sphi 0, %s33
    %s34 = sphi 0, %s31
    %s35 = sphi 0, %s34
    %s51 = sphi 0, %s35
    %s57 = sphi 0, %s59
    %s60 = sphi 0, %s57
    %s61 = sphi 0, %s60
    %s77 = sphi 0, %s61
    %s83 = sphi 0, %s85
    %s86 = sphi 0, %s83
    %s87 = sphi 0, %s86
    %s103 = sphi 0, %s87
    %s107 = sphi 0, %s107
    %s109 = sphi 0, %s107
    %s110 = sphi 0, %s109
    %s124 = sphi 0, %s110
    %s128 = sphi 0, %s128
    %s130 = sphi 0, %s128
    %s131 = sphi 0, %s130
    %s145 = sphi 0, %s131
    %s149 = sphi 0, %s149
    %s151 = sphi 0, %s149
    %s152 = sphi 0, %s151
    %s166 = sphi 0, %s152
    %s170 = sphi 0, %s170
    %s172 = sphi 0, %s170
    %s173 = sphi 0, %s172
    %s187 = sphi 0, %s173
    %s191 = sphi 0, %s191
    %s193 = sphi 0, %s191
    %s194 = sphi 0, %s193
    %s208 = sphi 0, %s194
    %s212 = sphi 0, %s212
    %s214 = sphi 0, %s212
    %s215 = sphi 0, %s214
    %s229 = sphi 0, %s215
    %s233 = sphi 0, %s233
    %s235 = sphi 0, %s233
    %s236 = sphi 0, %s235
    %s250 = sphi 0, %s236
    %s254 = sphi 0, %s254
    %s256 = sphi 0, %s254
    %s257 = sphi 0, %s256
    %s271 = sphi 0, %s257
    %s275 = sphi 0, %s275
    %s277 = sphi 0, %s275
    %s278 = sphi 0, %s277
    %s292 = sphi 0, %s278
    %s296 = sphi 0, %s296
    %s298 = sphi 0, %s296
    %s299 = sphi 0, %s298
    %s313 = sphi 0, %s299
    %s317 = sphi 0, %s317
    %s319 = sphi 0, %s317
    %s320 = sphi 0, %s319
    %s334 = sphi 0, %s320
    %s338 = sphi 0, %s338
    %s340 = sphi 0, %s338
    %s341 = sphi 0, %s340
    %s355 = sphi 0, %s341
    %s359 = sphi 0, %s359
    %s361 = sphi 0, %s359
    %s362 = sphi 0, %s361
    %s376 = sphi 0, %s362
  $region4: #{patch_gnp_forward.5} parent=0 // loop_header_branch
    %24 = sbr.rel (%p22) target = $region8
  $region5: #{patch_gnp_forward.5} parent=0 // loop_body
    %s26 = ssub.s32 %s21, 1
    %s27 = ssub.s32 %s21, 2
    %s28 = sadd.s32 %s21, 1
    %s29 = ssub.s32 %s21, %s28
    %p30 = scmp.eq.s32.totalorder %s29, 0
    %s32 = sadd.s32 %s31, 1
    %s33 = scalar_select %p30, %s31, %s32
    %p36 = pneg %p30
    %p37 = scmp.eq.s32.totalorder %s21, 1
    %p38 = por %p36, %p37
    %p39 = scmp.ne.s32.totalorder %s31, %s34
    %p40 = scmp.eq.s32.totalorder %s21, 0
    %p41 = por %p39, %p40
    %p42 = scmp.ne.s32.totalorder %s31, %s34
    %p43 = scmp.eq.s32.totalorder %s26, 1
    %p44 = por %p42, %p43
    %p45 = scmp.ne.s32.totalorder %s34, %s35
    %p46 = scmp.eq.s32.totalorder %s26, 0
    %p47 = por %p45, %p46
    %p48 = scmp.ne.s32.totalorder %s34, %s35
    %p49 = scmp.eq.s32.totalorder %s27, 1
    %p50 = por %p48, %p49
    %p52 = scmp.ne.s32.totalorder %s35, %s51
    %p53 = scmp.eq.s32.totalorder %s27, 0
    %p54 = por %p52, %p53
    %s55 = ssub.s32 %s21, %s28
    %p56 = scmp.eq.s32.totalorder %s55, 0
    %s58 = sadd.s32 %s57, 1
    %s59 = scalar_select %p56, %s57, %s58
    %p62 = pneg %p56
    %p63 = scmp.eq.s32.totalorder %s21, 1
    %p64 = por %p62, %p63
    %p65 = scmp.ne.s32.totalorder %s57, %s60
    %p66 = scmp.eq.s32.totalorder %s21, 0
    %p67 = por %p65, %p66
    %p68 = scmp.ne.s32.totalorder %s57, %s60
    %p69 = scmp.eq.s32.totalorder %s26, 1
    %p70 = por %p68, %p69
    %p71 = scmp.ne.s32.totalorder %s60, %s61
    %p72 = scmp.eq.s32.totalorder %s26, 0
    %p73 = por %p71, %p72
    %p74 = scmp.ne.s32.totalorder %s60, %s61
    %p75 = scmp.eq.s32.totalorder %s27, 1
    %p76 = por %p74, %p75
    %p78 = scmp.ne.s32.totalorder %s61, %s77
    %p79 = scmp.eq.s32.totalorder %s27, 0
    %p80 = por %p78, %p79
    %s81 = ssub.s32 %s21, %s28
    %p82 = scmp.eq.s32.totalorder %s81, 0
    %s84 = sadd.s32 %s83, 1
    %s85 = scalar_select %p82, %s83, %s84
    %p88 = pneg %p82
    %p89 = scmp.eq.s32.totalorder %s21, 1
    %p90 = por %p88, %p89
    %p91 = scmp.ne.s32.totalorder %s83, %s86
    %p92 = scmp.eq.s32.totalorder %s21, 0
    %p93 = por %p91, %p92
    %p94 = scmp.ne.s32.totalorder %s83, %s86
    %p95 = scmp.eq.s32.totalorder %s26, 1
    %p96 = por %p94, %p95
    %p97 = scmp.ne.s32.totalorder %s86, %s87
    %p98 = scmp.eq.s32.totalorder %s26, 0
    %p99 = por %p97, %p98
    %p100 = scmp.ne.s32.totalorder %s86, %s87
    %p101 = scmp.eq.s32.totalorder %s27, 1
    %p102 = por %p100, %p101
    %p104 = scmp.ne.s32.totalorder %s87, %s103
    %p105 = scmp.eq.s32.totalorder %s27, 0
    %p106 = por %p104, %p105
    %s108 = sadd.s32 %s107, 1
    %p111 = scmp.eq.s32.totalorder %s21, 1
    %p112 = scmp.ne.s32.totalorder %s107, %s109
    %p113 = scmp.eq.s32.totalorder %s21, 0
    %p114 = por %p112, %p113
    %p115 = scmp.ne.s32.totalorder %s107, %s109
    %p116 = scmp.eq.s32.totalorder %s26, 1
    %p117 = por %p115, %p116
    %p118 = scmp.ne.s32.totalorder %s109, %s110
    %p119 = scmp.eq.s32.totalorder %s26, 0
    %p120 = por %p118, %p119
    %p121 = scmp.ne.s32.totalorder %s109, %s110
    %p122 = scmp.eq.s32.totalorder %s27, 1
    %p123 = por %p121, %p122
    %p125 = scmp.ne.s32.totalorder %s110, %s124
    %p126 = scmp.eq.s32.totalorder %s27, 0
    %p127 = por %p125, %p126
    %s129 = sadd.s32 %s128, 1
    %p132 = scmp.eq.s32.totalorder %s21, 1
    %p133 = scmp.ne.s32.totalorder %s128, %s130
    %p134 = scmp.eq.s32.totalorder %s21, 0
    %p135 = por %p133, %p134
    %p136 = scmp.ne.s32.totalorder %s128, %s130
    %p137 = scmp.eq.s32.totalorder %s26, 1
    %p138 = por %p136, %p137
    %p139 = scmp.ne.s32.totalorder %s130, %s131
    %p140 = scmp.eq.s32.totalorder %s26, 0
    %p141 = por %p139, %p140
    %p142 = scmp.ne.s32.totalorder %s130, %s131
    %p143 = scmp.eq.s32.totalorder %s27, 1
    %p144 = por %p142, %p143
    %p146 = scmp.ne.s32.totalorder %s131, %s145
    %p147 = scmp.eq.s32.totalorder %s27, 0
    %p148 = por %p146, %p147
    %s150 = sadd.s32 %s149, 1
    %p153 = scmp.eq.s32.totalorder %s21, 1
    %p154 = scmp.ne.s32.totalorder %s149, %s151
    %p155 = scmp.eq.s32.totalorder %s21, 0
    %p156 = por %p154, %p155
    %p157 = scmp.ne.s32.totalorder %s149, %s151
    %p158 = scmp.eq.s32.totalorder %s26, 1
    %p159 = por %p157, %p158
    %p160 = scmp.ne.s32.totalorder %s151, %s152
    %p161 = scmp.eq.s32.totalorder %s26, 0
    %p162 = por %p160, %p161
    %p163 = scmp.ne.s32.totalorder %s151, %s152
    %p164 = scmp.eq.s32.totalorder %s27, 1
    %p165 = por %p163, %p164
    %p167 = scmp.ne.s32.totalorder %s152, %s166
    %p168 = scmp.eq.s32.totalorder %s27, 0
    %p169 = por %p167, %p168
    %s171 = sadd.s32 %s170, 1
    %p174 = scmp.eq.s32.totalorder %s21, 1
    %p175 = scmp.ne.s32.totalorder %s170, %s172
    %p176 = scmp.eq.s32.totalorder %s21, 0
    %p177 = por %p175, %p176
    %p178 = scmp.ne.s32.totalorder %s170, %s172
    %p179 = scmp.eq.s32.totalorder %s26, 1
    %p180 = por %p178, %p179
    %p181 = scmp.ne.s32.totalorder %s172, %s173
    %p182 = scmp.eq.s32.totalorder %s26, 0
    %p183 = por %p181, %p182
    %p184 = scmp.ne.s32.totalorder %s172, %s173
    %p185 = scmp.eq.s32.totalorder %s27, 1
    %p186 = por %p184, %p185
    %p188 = scmp.ne.s32.totalorder %s173, %s187
    %p189 = scmp.eq.s32.totalorder %s27, 0
    %p190 = por %p188, %p189
    %s192 = sadd.s32 %s191, 1
    %p195 = scmp.eq.s32.totalorder %s21, 1
    %p196 = scmp.ne.s32.totalorder %s191, %s193
    %p197 = scmp.eq.s32.totalorder %s21, 0
    %p198 = por %p196, %p197
    %p199 = scmp.ne.s32.totalorder %s191, %s193
    %p200 = scmp.eq.s32.totalorder %s26, 1
    %p201 = por %p199, %p200
    %p202 = scmp.ne.s32.totalorder %s193, %s194
    %p203 = scmp.eq.s32.totalorder %s26, 0
    %p204 = por %p202, %p203
    %p205 = scmp.ne.s32.totalorder %s193, %s194
    %p206 = scmp.eq.s32.totalorder %s27, 1
    %p207 = por %p205, %p206
    %p209 = scmp.ne.s32.totalorder %s194, %s208
    %p210 = scmp.eq.s32.totalorder %s27, 0
    %p211 = por %p209, %p210
    %s213 = sadd.s32 %s212, 1
    %p216 = scmp.eq.s32.totalorder %s21, 1
    %p217 = scmp.ne.s32.totalorder %s212, %s214
    %p218 = scmp.eq.s32.totalorder %s21, 0
    %p219 = por %p217, %p218
    %p220 = scmp.ne.s32.totalorder %s212, %s214
    %p221 = scmp.eq.s32.totalorder %s26, 1
    %p222 = por %p220, %p221
    %p223 = scmp.ne.s32.totalorder %s214, %s215
    %p224 = scmp.eq.s32.totalorder %s26, 0
    %p225 = por %p223, %p224
    %p226 = scmp.ne.s32.totalorder %s214, %s215
    %p227 = scmp.eq.s32.totalorder %s27, 1
    %p228 = por %p226, %p227
    %p230 = scmp.ne.s32.totalorder %s215, %s229
    %p231 = scmp.eq.s32.totalorder %s27, 0
    %p232 = por %p230, %p231
    %s234 = sadd.s32 %s233, 1
    %p237 = scmp.eq.s32.totalorder %s21, 1
    %p238 = scmp.ne.s32.totalorder %s233, %s235
    %p239 = scmp.eq.s32.totalorder %s21, 0
    %p240 = por %p238, %p239
    %p241 = scmp.ne.s32.totalorder %s233, %s235
    %p242 = scmp.eq.s32.totalorder %s26, 1
    %p243 = por %p241, %p242
    %p244 = scmp.ne.s32.totalorder %s235, %s236
    %p245 = scmp.eq.s32.totalorder %s26, 0
    %p246 = por %p244, %p245
    %p247 = scmp.ne.s32.totalorder %s235, %s236
    %p248 = scmp.eq.s32.totalorder %s27, 1
    %p249 = por %p247, %p248
    %p251 = scmp.ne.s32.totalorder %s236, %s250
    %p252 = scmp.eq.s32.totalorder %s27, 0
    %p253 = por %p251, %p252
    %s255 = sadd.s32 %s254, 1
    %p258 = scmp.eq.s32.totalorder %s21, 1
    %p259 = scmp.ne.s32.totalorder %s254, %s256
    %p260 = scmp.eq.s32.totalorder %s21, 0
    %p261 = por %p259, %p260
    %p262 = scmp.ne.s32.totalorder %s254, %s256
    %p263 = scmp.eq.s32.totalorder %s26, 1
    %p264 = por %p262, %p263
    %p265 = scmp.ne.s32.totalorder %s256, %s257
    %p266 = scmp.eq.s32.totalorder %s26, 0
    %p267 = por %p265, %p266
    %p268 = scmp.ne.s32.totalorder %s256, %s257
    %p269 = scmp.eq.s32.totalorder %s27, 1
    %p270 = por %p268, %p269
    %p272 = scmp.ne.s32.totalorder %s257, %s271
    %p273 = scmp.eq.s32.totalorder %s27, 0
    %p274 = por %p272, %p273
    %s276 = sadd.s32 %s275, 1
    %p279 = scmp.eq.s32.totalorder %s21, 1
    %p280 = scmp.ne.s32.totalorder %s275, %s277
    %p281 = scmp.eq.s32.totalorder %s21, 0
    %p282 = por %p280, %p281
    %p283 = scmp.ne.s32.totalorder %s275, %s277
    %p284 = scmp.eq.s32.totalorder %s26, 1
    %p285 = por %p283, %p284
    %p286 = scmp.ne.s32.totalorder %s277, %s278
    %p287 = scmp.eq.s32.totalorder %s26, 0
    %p288 = por %p286, %p287
    %p289 = scmp.ne.s32.totalorder %s277, %s278
    %p290 = scmp.eq.s32.totalorder %s27, 1
    %p291 = por %p289, %p290
    %p293 = scmp.ne.s32.totalorder %s278, %s292
    %p294 = scmp.eq.s32.totalorder %s27, 0
    %p295 = por %p293, %p294
    %s297 = sadd.s32 %s296, 1
    %p300 = scmp.eq.s32.totalorder %s21, 1
    %p301 = scmp.ne.s32.totalorder %s296, %s298
    %p302 = scmp.eq.s32.totalorder %s21, 0
    %p303 = por %p301, %p302
    %p304 = scmp.ne.s32.totalorder %s296, %s298
    %p305 = scmp.eq.s32.totalorder %s26, 1
    %p306 = por %p304, %p305
    %p307 = scmp.ne.s32.totalorder %s298, %s299
    %p308 = scmp.eq.s32.totalorder %s26, 0
    %p309 = por %p307, %p308
    %p310 = scmp.ne.s32.totalorder %s298, %s299
    %p311 = scmp.eq.s32.totalorder %s27, 1
    %p312 = por %p310, %p311
    %p314 = scmp.ne.s32.totalorder %s299, %s313
    %p315 = scmp.eq.s32.totalorder %s27, 0
    %p316 = por %p314, %p315
    %s318 = sadd.s32 %s317, 1
    %p321 = scmp.eq.s32.totalorder %s21, 1
    %p322 = scmp.ne.s32.totalorder %s317, %s319
    %p323 = scmp.eq.s32.totalorder %s21, 0
    %p324 = por %p322, %p323
    %p325 = scmp.ne.s32.totalorder %s317, %s319
    %p326 = scmp.eq.s32.totalorder %s26, 1
    %p327 = por %p325, %p326
    %p328 = scmp.ne.s32.totalorder %s319, %s320
    %p329 = scmp.eq.s32.totalorder %s26, 0
    %p330 = por %p328, %p329
    %p331 = scmp.ne.s32.totalorder %s319, %s320
    %p332 = scmp.eq.s32.totalorder %s27, 1
    %p333 = por %p331, %p332
    %p335 = scmp.ne.s32.totalorder %s320, %s334
    %p336 = scmp.eq.s32.totalorder %s27, 0
    %p337 = por %p335, %p336
    %s339 = sadd.s32 %s338, 1
    %p342 = scmp.eq.s32.totalorder %s21, 1
    %p343 = scmp.ne.s32.totalorder %s338, %s340
    %p344 = scmp.eq.s32.totalorder %s21, 0
    %p345 = por %p343, %p344
    %p346 = scmp.ne.s32.totalorder %s338, %s340
    %p347 = scmp.eq.s32.totalorder %s26, 1
    %p348 = por %p346, %p347
    %p349 = scmp.ne.s32.totalorder %s340, %s341
    %p350 = scmp.eq.s32.totalorder %s26, 0
    %p351 = por %p349, %p350
    %p352 = scmp.ne.s32.totalorder %s340, %s341
    %p353 = scmp.eq.s32.totalorder %s27, 1
    %p354 = por %p352, %p353
    %p356 = scmp.ne.s32.totalorder %s341, %s355
    %p357 = scmp.eq.s32.totalorder %s27, 0
    %p358 = por %p356, %p357
    %s360 = sadd.s32 %s359, 1
    %p363 = scmp.eq.s32.totalorder %s21, 1
    %p364 = scmp.ne.s32.totalorder %s359, %s361
    %p365 = scmp.eq.s32.totalorder %s21, 0
    %p366 = por %p364, %p365
    %p367 = scmp.ne.s32.totalorder %s359, %s361
    %p368 = scmp.eq.s32.totalorder %s26, 1
    %p369 = por %p367, %p368
    %p370 = scmp.ne.s32.totalorder %s361, %s362
    %p371 = scmp.eq.s32.totalorder %s26, 0
    %p372 = por %p370, %p371
    %p373 = scmp.ne.s32.totalorder %s361, %s362
    %p374 = scmp.eq.s32.totalorder %s27, 1
    %p375 = por %p373, %p374
    %p377 = scmp.ne.s32.totalorder %s362, %s376
    %p378 = scmp.eq.s32.totalorder %s27, 0
    %p379 = por %p377, %p378
    %p380 = scmp.le.s32.totalorder 1, %s21
    %p381 = scmp.lt.s32.totalorder %s21, 3
    %p382 = pnand %p380, %p381
    %p383 = pneg %p382
    // Predicated region
    $region9: #{patch_gnp_forward.5} parent=5 // pred_check
      _
    $region10: #{patch_gnp_forward.5} parent=5 // pred_check_branch
      %385 = sbr.rel (%p382) target = $region12
    $region11: #{patch_gnp_forward.5} parent=5 // pred_region
      %s386 = ssub.s32 %s21, 1
      // Predicated region
      $region13: #{patch_gnp_forward.5} parent=11 // pred_check
        %p387 = pneg %p120
      $region14: #{patch_gnp_forward.5} parent=11 // pred_check_branch
        %389 = sbr.rel (%p387) target = $region16
      $region15: #{patch_gnp_forward.5} parent=11 // pred_region
        _
      $region16: #{patch_gnp_forward.5} parent=11 // pred_fallthru
        _
      // Predicated region
      $region17: #{patch_gnp_forward.5} parent=11 // pred_check
        %p390 = pneg %p141
      $region18: #{patch_gnp_forward.5} parent=11 // pred_check_branch
        %392 = sbr.rel (%p390) target = $region20
      $region19: #{patch_gnp_forward.5} parent=11 // pred_region
        _
      $region20: #{patch_gnp_forward.5} parent=11 // pred_fallthru
        _
      // Predicated region
      $region21: #{patch_gnp_forward.5} parent=11 // pred_check
        %p393 = pneg %p162
      $region22: #{patch_gnp_forward.5} parent=11 // pred_check_branch
        %395 = sbr.rel (%p393) target = $region24
      $region23: #{patch_gnp_forward.5} parent=11 // pred_region
        _
      $region24: #{patch_gnp_forward.5} parent=11 // pred_fallthru
        _
      // Predicated region
      $region25: #{patch_gnp_forward.5} parent=11 // pred_check
        %p396 = pneg %p183
      $region26: #{patch_gnp_forward.5} parent=11 // pred_check_branch
        %398 = sbr.rel (%p396) target = $region28
      $region27: #{patch_gnp_forward.5} parent=11 // pred_region
        _
      $region28: #{patch_gnp_forward.5} parent=11 // pred_fallthru
        _
      // Predicated region
      $region29: #{patch_gnp_forward.5} parent=11 // pred_check
        %p399 = pneg %p204
      $region30: #{patch_gnp_forward.5} parent=11 // pred_check_branch
        %401 = sbr.rel (%p399) target = $region32
      $region31: #{patch_gnp_forward.5} parent=11 // pred_region
        _
      $region32: #{patch_gnp_forward.5} parent=11 // pred_fallthru
        _
      // Predicated region
      $region33: #{patch_gnp_forward.5} parent=11 // pred_check
        %p402 = pneg %p225
      $region34: #{patch_gnp_forward.5} parent=11 // pred_check_branch
        %404 = sbr.rel (%p402) target = $region36
      $region35: #{patch_gnp_forward.5} parent=11 // pred_region
        _
      $region36: #{patch_gnp_forward.5} parent=11 // pred_fallthru
        _
      // Predicated region
      $region37: #{patch_gnp_forward.5} parent=11 // pred_check
        %p405 = pneg %p246
      $region38: #{patch_gnp_forward.5} parent=11 // pred_check_branch
        %407 = sbr.rel (%p405) target = $region40
      $region39: #{patch_gnp_forward.5} parent=11 // pred_region
        _
      $region40: #{patch_gnp_forward.5} parent=11 // pred_fallthru
        _
      // Predicated region
      $region41: #{patch_gnp_forward.5} parent=11 // pred_check
        %p408 = pneg %p267
      $region42: #{patch_gnp_forward.5} parent=11 // pred_check_branch
        %410 = sbr.rel (%p408) target = $region44
      $region43: #{patch_gnp_forward.5} parent=11 // pred_region
        _
      $region44: #{patch_gnp_forward.5} parent=11 // pred_fallthru
        _
      // Predicated region
      $region45: #{patch_gnp_forward.5} parent=11 // pred_check
        %p411 = pneg %p288
      $region46: #{patch_gnp_forward.5} parent=11 // pred_check_branch
        %413 = sbr.rel (%p411) target = $region48
      $region47: #{patch_gnp_forward.5} parent=11 // pred_region
        _
      $region48: #{patch_gnp_forward.5} parent=11 // pred_fallthru
        _
      // Predicated region
      $region49: #{patch_gnp_forward.5} parent=11 // pred_check
        %p414 = pneg %p309
      $region50: #{patch_gnp_forward.5} parent=11 // pred_check_branch
        %416 = sbr.rel (%p414) target = $region52
      $region51: #{patch_gnp_forward.5} parent=11 // pred_region
        _
      $region52: #{patch_gnp_forward.5} parent=11 // pred_fallthru
        _
      // Predicated region
      $region53: #{patch_gnp_forward.5} parent=11 // pred_check
        %p417 = pneg %p330
      $region54: #{patch_gnp_forward.5} parent=11 // pred_check_branch
        %419 = sbr.rel (%p417) target = $region56
      $region55: #{patch_gnp_forward.5} parent=11 // pred_region
        _
      $region56: #{patch_gnp_forward.5} parent=11 // pred_fallthru
        _
      // Predicated region
      $region57: #{patch_gnp_forward.5} parent=11 // pred_check
        %p420 = pneg %p351
      $region58: #{patch_gnp_forward.5} parent=11 // pred_check_branch
        %422 = sbr.rel (%p420) target = $region60
      $region59: #{patch_gnp_forward.5} parent=11 // pred_region
        _
      $region60: #{patch_gnp_forward.5} parent=11 // pred_fallthru
        _
    $region12: #{patch_gnp_forward.5} parent=5 // pred_fallthru
      _
    %p423 = scmp.lt.s32.totalorder %s21, 2
    // Predicated region
    $region61: #{patch_gnp_forward.5} parent=5 // pred_check
      %p424 = pneg %p423
    $region62: #{patch_gnp_forward.5} parent=5 // pred_check_branch
      %426 = sbr.rel (%p424) target = $region64
    $region63: #{patch_gnp_forward.5} parent=5 // pred_region
      // Predicated region
      $region65: #{patch_gnp_forward.5} parent=63 // pred_check
        %p427 = pneg %p41
      $region66: #{patch_gnp_forward.5} parent=63 // pred_check_branch
        %429 = sbr.rel (%p427) target = $region68
      $region67: #{patch_gnp_forward.5} parent=63 // pred_region
        %s430 = smul.u32 16, %s21
        %p431 = scmp.lt.s32.totalorder %s430, 31
        %s432 = scalar_select %p431, %s430, 31
        %s433 = smul.addr %s432, 8
        %s434 = scalar_lea.vmem %s0, %s433
        %s435 = smul.u32 16, %s21
      $region68: #{patch_gnp_forward.5} parent=63 // pred_fallthru
        _
      // Predicated region
      $region69: #{patch_gnp_forward.5} parent=63 // pred_check
        %p436 = pneg %p67
      $region70: #{patch_gnp_forward.5} parent=63 // pred_check_branch
        %438 = sbr.rel (%p436) target = $region72
      $region71: #{patch_gnp_forward.5} parent=63 // pred_region
        %p439 = scmp.lt.s32.totalorder %s21, 1
        %s440 = scalar_select %p439, %s21, 1
        %s441 = scalar_lea.vmem %s1, %s440
      $region72: #{patch_gnp_forward.5} parent=63 // pred_fallthru
        _
      // Predicated region
      $region73: #{patch_gnp_forward.5} parent=63 // pred_check
        %p442 = pneg %p93
      $region74: #{patch_gnp_forward.5} parent=63 // pred_check_branch
        %444 = sbr.rel (%p442) target = $region76
      $region75: #{patch_gnp_forward.5} parent=63 // pred_region
        %s445 = smul.u32 16, %s21
        %p446 = scmp.lt.s32.totalorder %s445, 31
        %s447 = scalar_select %p446, %s445, 31
        %s448 = smul.addr %s447, 8
        %s449 = scalar_lea.vmem %s2, %s448
        %s450 = smul.u32 16, %s21
      $region76: #{patch_gnp_forward.5} parent=63 // pred_fallthru
        _
    $region64: #{patch_gnp_forward.5} parent=5 // pred_fallthru
      _
    %p451 = scmp.le.s32.totalorder 1, %s21
    %p452 = scmp.lt.s32.totalorder %s21, 3
    %p453 = pnand %p451, %p452
    %p454 = pneg %p453
    // Predicated region
    $region77: #{patch_gnp_forward.5} parent=5 // pred_check
      _
    $region78: #{patch_gnp_forward.5} parent=5 // pred_check_branch
      %456 = sbr.rel (%p453) target = $region80
    $region79: #{patch_gnp_forward.5} parent=5 // pred_region
      %s457 = ssub.s32 %s21, 1
      %s458 = smul.u32 16, %s26
      %p459 = scmp.lt.s32.totalorder %s458, 31
      %s460 = scalar_select %p459, %s458, 31
      %s461 = smul.addr %s460, 8
      %s462 = scalar_lea.vmem %s0, %s461
      %p463 = pneg %p47
      %p464 = pneg %p44
      %p465 = scmp.lt.s32.totalorder %s26, 1
      %s466 = scalar_select %p465, %s26, 1
      %s467 = scalar_lea.vmem %s1, %s466
      %p468 = pneg %p73
      %p469 = pneg %p70
      %s470 = smul.u32 16, %s26
      %p471 = scmp.lt.s32.totalorder %s470, 31
      %s472 = scalar_select %p471, %s470, 31
      %s473 = smul.addr %s472, 8
      %s474 = scalar_lea.vmem %s2, %s473
      %p475 = pneg %p99
      %p476 = pneg %p96
      %p477 = pneg %p120
      %p478 = pneg %p117
      %p479 = pneg %p141
      %p480 = pneg %p138
      %p481 = pneg %p162
      %p482 = pneg %p159
      %p483 = pneg %p183
      %p484 = pneg %p180
      %p485 = pneg %p204
      %p486 = pneg %p201
      %p487 = pneg %p225
      %p488 = pneg %p222
      %p489 = pneg %p246
      %p490 = pneg %p243
      %p491 = pneg %p267
      %p492 = pneg %p264
      %p493 = pneg %p288
      %p494 = pneg %p285
      %p495 = pneg %p309
      %p496 = pneg %p306
      %p497 = pneg %p330
      %p498 = pneg %p327
      %p499 = pneg %p351
      %p500 = pneg %p348
      %p501 = pneg %p372
      %p502 = pneg %p369
      %s503 = smul.u32 16, %s26
      %p504 = scmp.lt.s32.totalorder %s503, 31
      %s505 = scalar_select %p504, %s503, 31
      %s506 = smul.addr %s505, 8
      %s507 = scalar_lea.vmem %s0, %s506
      %s508 = smul.u32 16, %s26
      %p509 = scmp.lt.s32.totalorder %s26, 1
      %s510 = scalar_select %p509, %s26, 1
      %s511 = scalar_lea.vmem %s1, %s510
      %s512 = smul.u32 16, %s26
      %p513 = scmp.lt.s32.totalorder %s512, 31
      %s514 = scalar_select %p513, %s512, 31
      %s515 = smul.addr %s514, 8
      %s516 = scalar_lea.vmem %s2, %s515
      %s517 = smul.u32 16, %s26
      %p518 = scmp.eq.s32.totalorder %s26, 0
      // Predicated region
      $region81: #{patch_gnp_forward.5} parent=79 // pred_check
        %p519 = pneg %p518
      $region82: #{patch_gnp_forward.5} parent=79 // pred_check_branch
        %521 = sbr.rel (%p519) target = $region84
      $region83: #{patch_gnp_forward.5} parent=79 // pred_region
        %vm522 = vcmask 261120
        %523 = vst.msk [vmem:[%s15] sm:$0xff] %vm522, 0.0
        %524 = vst.msk [vmem:[%s15 + $0x8] sm:$0xff] %vm522, 0.0
        %525 = vst.msk [vmem:[%s15 + $0x10] sm:$0xff] %vm522, 0.0
        %526 = vst.msk [vmem:[%s15 + $0x18] sm:$0xff] %vm522, 0.0
        %527 = vst.msk [vmem:[%s15 + $0x20] sm:$0xff] %vm522, 0.0
        %528 = vst.msk [vmem:[%s15 + $0x28] sm:$0xff] %vm522, 0.0
        %529 = vst.msk [vmem:[%s15 + $0x30] sm:$0xff] %vm522, 0.0
        %530 = vst.msk [vmem:[%s15 + $0x38] sm:$0xff] %vm522, 0.0
      $region84: #{patch_gnp_forward.5} parent=79 // pred_fallthru
        _
      %v531 = vld [vmem:[%s3] sm:$0xff]
      %v532 = vld [vmem:[%s3 + $0x8] sm:$0xff]
      %v533 = vld [vmem:[%s3 + $0x10] sm:$0xff]
      %v534 = vld [vmem:[%s3 + $0x18] sm:$0xff]
      %v535 = vld [vmem:[%s3 + $0x20] sm:$0xff]
      %v536 = vld [vmem:[%s3 + $0x28] sm:$0xff]
      %v537 = vld [vmem:[%s3 + $0x30] sm:$0xff]
      %v538 = vld [vmem:[%s3 + $0x38] sm:$0xff]
      %v539 = vlaneseq
      %v540 = vand.u32 %v539, 127
      %v541 = vld [vmem:[%s507] sm:$0xff]
      %v542 = vld [vmem:[%s507 + $0x8] sm:$0xff]
      %v543 = vld [vmem:[%s507 + $0x10] sm:$0xff]
      %v544 = vld [vmem:[%s507 + $0x18] sm:$0xff]
      %v545 = vld [vmem:[%s507 + $0x20] sm:$0xff]
      %v546 = vld [vmem:[%s507 + $0x28] sm:$0xff]
      %v547 = vld [vmem:[%s507 + $0x30] sm:$0xff]
      %v548 = vld [vmem:[%s507 + $0x38] sm:$0xff]
      %v549 = vld [vmem:[%s507 + $0x40] sm:$0xff]
      %v550 = vld [vmem:[%s507 + $0x48] sm:$0xff]
      %v551 = vld [vmem:[%s507 + $0x50] sm:$0xff]
      %v552 = vld [vmem:[%s507 + $0x58] sm:$0xff]
      %v553 = vld [vmem:[%s507 + $0x60] sm:$0xff]
      %v554 = vld [vmem:[%s507 + $0x68] sm:$0xff]
      %v555 = vld [vmem:[%s507 + $0x70] sm:$0xff]
      %v556 = vld [vmem:[%s507 + $0x78] sm:$0xff]
      %557 = vset.pattern.permute.xlu0 0
      %558 = vperm.xlu0 %557, %v541
      %v559 = vpop.permute.xlu0 %558
      %560 = vset.pattern.permute.xlu0 0
      %561 = vperm.xlu0 %560, %v542
      %v562 = vpop.permute.xlu0 %561
      %563 = vset.pattern.permute.xlu0 0
      %564 = vperm.xlu0 %563, %v543
      %v565 = vpop.permute.xlu0 %564
      %566 = vset.pattern.permute.xlu0 0
      %567 = vperm.xlu0 %566, %v544
      %v568 = vpop.permute.xlu0 %567
      %569 = vset.pattern.permute.xlu0 0
      %570 = vperm.xlu0 %569, %v545
      %v571 = vpop.permute.xlu0 %570
      %572 = vset.pattern.permute.xlu0 0
      %573 = vperm.xlu0 %572, %v546
      %v574 = vpop.permute.xlu0 %573
      %575 = vset.pattern.permute.xlu0 0
      %576 = vperm.xlu0 %575, %v547
      %v577 = vpop.permute.xlu0 %576
      %578 = vset.pattern.permute.xlu0 0
      %579 = vperm.xlu0 %578, %v548
      %v580 = vpop.permute.xlu0 %579
      %581 = vset.pattern.permute.xlu0 0
      %582 = vperm.xlu0 %581, %v549
      %v583 = vpop.permute.xlu0 %582
      %584 = vset.pattern.permute.xlu0 0
      %585 = vperm.xlu0 %584, %v550
      %v586 = vpop.permute.xlu0 %585
      %587 = vset.pattern.permute.xlu0 0
      %588 = vperm.xlu0 %587, %v551
      %v589 = vpop.permute.xlu0 %588
      %590 = vset.pattern.permute.xlu0 0
      %591 = vperm.xlu0 %590, %v552
      %v592 = vpop.permute.xlu0 %591
      %593 = vset.pattern.permute.xlu0 0
      %594 = vperm.xlu0 %593, %v553
      %v595 = vpop.permute.xlu0 %594
      %596 = vset.pattern.permute.xlu0 0
      %597 = vperm.xlu0 %596, %v554
      %v598 = vpop.permute.xlu0 %597
      %599 = vset.pattern.permute.xlu0 0
      %600 = vperm.xlu0 %599, %v555
      %v601 = vpop.permute.xlu0 %600
      %602 = vset.pattern.permute.xlu0 0
      %603 = vperm.xlu0 %602, %v556
      %v604 = vpop.permute.xlu0 %603
      %vm605 = vcmp.eq.s32.totalorder %v540, %v559
      %vm606 = vcmp.eq.s32.totalorder %v540, %v562
      %vm607 = vcmp.eq.s32.totalorder %v540, %v565
      %vm608 = vcmp.eq.s32.totalorder %v540, %v568
      %vm609 = vcmp.eq.s32.totalorder %v540, %v571
      %vm610 = vcmp.eq.s32.totalorder %v540, %v574
      %vm611 = vcmp.eq.s32.totalorder %v540, %v577
      %vm612 = vcmp.eq.s32.totalorder %v540, %v580
      %vm613 = vcmp.eq.s32.totalorder %v540, %v583
      %vm614 = vcmp.eq.s32.totalorder %v540, %v586
      %vm615 = vcmp.eq.s32.totalorder %v540, %v589
      %vm616 = vcmp.eq.s32.totalorder %v540, %v592
      %vm617 = vcmp.eq.s32.totalorder %v540, %v595
      %vm618 = vcmp.eq.s32.totalorder %v540, %v598
      %vm619 = vcmp.eq.s32.totalorder %v540, %v601
      %vm620 = vcmp.eq.s32.totalorder %v540, %v604
      %v621 = vsel %vm605, 1, 0
      %v622 = vsel %vm606, 1, 0
      %v623 = vsel %vm607, 1, 0
      %v624 = vsel %vm608, 1, 0
      %v625 = vsel %vm609, 1, 0
      %v626 = vsel %vm610, 1, 0
      %v627 = vsel %vm611, 1, 0
      %v628 = vsel %vm612, 1, 0
      %v629 = vsel %vm613, 1, 0
      %v630 = vsel %vm614, 1, 0
      %v631 = vsel %vm615, 1, 0
      %v632 = vsel %vm616, 1, 0
      %v633 = vsel %vm617, 1, 0
      %v634 = vsel %vm618, 1, 0
      %v635 = vsel %vm619, 1, 0
      %v636 = vsel %vm620, 1, 0
      %v637 = vcvt.s32.f32 %v621
      %v638 = vcvt.s32.f32 %v622
      %v639 = vcvt.s32.f32 %v623
      %v640 = vcvt.s32.f32 %v624
      %v641 = vcvt.s32.f32 %v625
      %v642 = vcvt.s32.f32 %v626
      %v643 = vcvt.s32.f32 %v627
      %v644 = vcvt.s32.f32 %v628
      %v645 = vcvt.s32.f32 %v629
      %v646 = vcvt.s32.f32 %v630
      %v647 = vcvt.s32.f32 %v631
      %v648 = vcvt.s32.f32 %v632
      %v649 = vcvt.s32.f32 %v633
      %v650 = vcvt.s32.f32 %v634
      %v651 = vcvt.s32.f32 %v635
      %v652 = vcvt.s32.f32 %v636
      %vm653 = vcmask 523264
      %v655 = vsel %vm653, %v637, 0
      %v658 = vsel %vm653, %v638, 0
      %v661 = vsel %vm653, %v639, 0
      %v664 = vsel %vm653, %v640, 0
      %v667 = vsel %vm653, %v641, 0
      %v670 = vsel %vm653, %v642, 0
      %v673 = vsel %vm653, %v643, 0
      %v676 = vsel %vm653, %v644, 0
      %v679 = vsel %vm653, %v645, 0
      %v682 = vsel %vm653, %v646, 0
      %v685 = vsel %vm653, %v647, 0
      %v688 = vsel %vm653, %v648, 0
      %v691 = vsel %vm653, %v649, 0
      %v694 = vsel %vm653, %v650, 0
      %v697 = vsel %vm653, %v651, 0
      %v700 = vsel %vm653, %v652, 0
      %702 = vmatprep.subr.mxu0 0.0
      %703 = vmatpush1.msra.mxu0 %v531
      %704 = vmatprep.subr.mxu0 0.0
      %705 = vmatpush1.msra.mxu0 %v532
      %706 = vmatprep.subr.mxu0 0.0
      %707 = vmatpush1.msra.mxu0 %v533
      %708 = vmatprep.subr.mxu0 0.0
      %709 = vmatpush1.msra.mxu0 %v534
      %710 = vmatprep.subr.mxu0 0.0
      %711 = vmatpush1.msra.mxu0 %v535
      %712 = vmatprep.subr.mxu0 0.0
      %713 = vmatpush1.msra.mxu0 %v536
      %714 = vmatprep.subr.mxu0 0.0
      %715 = vmatpush1.msra.mxu0 %v537
      %716 = vmatprep.subr.mxu0 0.0
      %717 = vmatpush1.msra.mxu0 %v538
      %718 = vmatprep.subr.mxu0 0.0
      %719 = vmatpush1.msra.mxu0 0.0
      %720 = vmatprep.subr.mxu0 0.0
      %721 = vmatpush1.msra.mxu0 0.0
      %722 = vmatprep.subr.mxu0 0.0
      %723 = vmatpush1.msra.mxu0 0.0
      %724 = vmatprep.subr.mxu0 0.0
      %725 = vmatpush1.msra.mxu0 0.0
      %726 = vmatprep.subr.mxu0 0.0
      %727 = vmatpush1.msra.mxu0 0.0
      %728 = vmatprep.subr.mxu0 0.0
      %729 = vmatpush1.msra.mxu0 0.0
      %730 = vmatprep.subr.mxu0 0.0
      %731 = vmatpush1.msra.mxu0 0.0
      %732 = vmatprep.subr.mxu0 0.0
      %733 = vmatpush1.msra.mxu0 0.0
      %734 = vmatprep.subr.mxu0 0.0
      %735 = vmatpush1.msra.mxu0 0.0
      %736 = vmatprep.subr.mxu0 0.0
      %737 = vmatpush1.msra.mxu0 0.0
      %738 = vmatprep.subr.mxu0 0.0
      %739 = vmatpush1.msra.mxu0 0.0
      %740 = vmatprep.subr.mxu0 0.0
      %741 = vmatpush1.msra.mxu0 0.0
      %742 = vmatprep.subr.mxu0 0.0
      %743 = vmatpush1.msra.mxu0 0.0
      %744 = vmatprep.subr.mxu0 0.0
      %745 = vmatpush1.msra.mxu0 0.0
      %746 = vmatprep.subr.mxu0 0.0
      %747 = vmatpush1.msra.mxu0 0.0
      %748 = vmatprep.subr.mxu0 0.0
      %749 = vmatpush1.msra.mxu0 0.0
      %750 = vmatprep.subr.mxu0 0.0
      %751 = vmatpush1.msra.mxu0 0.0
      %752 = vmatprep.subr.mxu0 0.0
      %753 = vmatpush1.msra.mxu0 0.0
      %754 = vmatprep.subr.mxu0 0.0
      %755 = vmatpush1.msra.mxu0 0.0
      %756 = vmatprep.subr.mxu0 0.0
      %757 = vmatpush1.msra.mxu0 0.0
      %758 = vmatprep.subr.mxu0 0.0
      %759 = vmatpush1.msra.mxu0 0.0
      %760 = vmatprep.subr.mxu0 0.0
      %761 = vmatpush1.msra.mxu0 0.0
      %762 = vmatprep.subr.mxu0 0.0
      %763 = vmatpush1.msra.mxu0 0.0
      %764 = vmatprep.subr.mxu0 0.0
      %765 = vmatpush1.msra.mxu0 0.0
      %766 = vmatprep.mubr.f32.mxu0 0.0
      %767 = vmatmul.mubr.f32.gmra.mrb[0].mxu0 %v655
      %v768 = vpop.f32.mrb[0].mxu0
      %v769 = vadd.f32 0.0, %v768
      %v770 = vpop.f32.mrb[0].mxu0
      %771 = vmatprep.mubr.f32.mxu0 0.0
      %772 = vmatmul.mubr.f32.gmra.mrb[0].mxu0 %v658
      %v773 = vpop.f32.mrb[0].mxu0
      %v774 = vadd.f32 0.0, %v773
      %v775 = vpop.f32.mrb[0].mxu0
      %776 = vmatprep.mubr.f32.mxu0 0.0
      %777 = vmatmul.mubr.f32.gmra.mrb[0].mxu0 %v661
      %v778 = vpop.f32.mrb[0].mxu0
      %v779 = vadd.f32 0.0, %v778
      %v780 = vpop.f32.mrb[0].mxu0
      %781 = vmatprep.mubr.f32.mxu0 0.0
      %782 = vmatmul.mubr.f32.gmra.mrb[0].mxu0 %v664
      %v783 = vpop.f32.mrb[0].mxu0
      %v784 = vadd.f32 0.0, %v783
      %v785 = vpop.f32.mrb[0].mxu0
      %786 = vmatprep.mubr.f32.mxu0 0.0
      %787 = vmatmul.mubr.f32.gmra.mrb[0].mxu0 %v667
      %v788 = vpop.f32.mrb[0].mxu0
      %v789 = vadd.f32 0.0, %v788
      %v790 = vpop.f32.mrb[0].mxu0
      %791 = vmatprep.mubr.f32.mxu0 0.0
      %792 = vmatmul.mubr.f32.gmra.mrb[0].mxu0 %v670
      %v793 = vpop.f32.mrb[0].mxu0
      %v794 = vadd.f32 0.0, %v793
      %v795 = vpop.f32.mrb[0].mxu0
      %796 = vmatprep.mubr.f32.mxu0 0.0
      %797 = vmatmul.mubr.f32.gmra.mrb[0].mxu0 %v673
      %v798 = vpop.f32.mrb[0].mxu0
      %v799 = vadd.f32 0.0, %v798
      %v800 = vpop.f32.mrb[0].mxu0
      %801 = vmatprep.mubr.f32.mxu0 0.0
      %802 = vmatmul.mubr.f32.gmra.mrb[0].mxu0 %v676
      %v803 = vpop.f32.mrb[0].mxu0
      %v804 = vadd.f32 0.0, %v803
      %v805 = vpop.f32.mrb[0].mxu0
      %806 = vmatprep.mubr.f32.mxu0 0.0
      %807 = vmatmul.mubr.f32.gmra.mrb[0].mxu0 %v679
      %v808 = vpop.f32.mrb[0].mxu0
      %v809 = vadd.f32 0.0, %v808
      %v810 = vpop.f32.mrb[0].mxu0
      %811 = vmatprep.mubr.f32.mxu0 0.0
      %812 = vmatmul.mubr.f32.gmra.mrb[0].mxu0 %v682
      %v813 = vpop.f32.mrb[0].mxu0
      %v814 = vadd.f32 0.0, %v813
      %v815 = vpop.f32.mrb[0].mxu0
      %816 = vmatprep.mubr.f32.mxu0 0.0
      %817 = vmatmul.mubr.f32.gmra.mrb[0].mxu0 %v685
      %v818 = vpop.f32.mrb[0].mxu0
      %v819 = vadd.f32 0.0, %v818
      %v820 = vpop.f32.mrb[0].mxu0
      %821 = vmatprep.mubr.f32.mxu0 0.0
      %822 = vmatmul.mubr.f32.gmra.mrb[0].mxu0 %v688
      %v823 = vpop.f32.mrb[0].mxu0
      %v824 = vadd.f32 0.0, %v823
      %v825 = vpop.f32.mrb[0].mxu0
      %826 = vmatprep.mubr.f32.mxu0 0.0
      %827 = vmatmul.mubr.f32.gmra.mrb[0].mxu0 %v691
      %v828 = vpop.f32.mrb[0].mxu0
      %v829 = vadd.f32 0.0, %v828
      %v830 = vpop.f32.mrb[0].mxu0
      %831 = vmatprep.mubr.f32.mxu0 0.0
      %832 = vmatmul.mubr.f32.gmra.mrb[0].mxu0 %v694
      %v833 = vpop.f32.mrb[0].mxu0
      %v834 = vadd.f32 0.0, %v833
      %v835 = vpop.f32.mrb[0].mxu0
      %836 = vmatprep.mubr.f32.mxu0 0.0
      %837 = vmatmul.mubr.f32.gmra.mrb[0].mxu0 %v697
      %v838 = vpop.f32.mrb[0].mxu0
      %v839 = vadd.f32 0.0, %v838
      %v840 = vpop.f32.mrb[0].mxu0
      %841 = vmatprep.mubr.f32.mxu0 0.0
      %842 = vmatmul.mubr.f32.gmra.mrb[0].mxu0 %v700
      %v843 = vpop.f32.mrb[0].mxu0
      %v844 = vadd.f32 0.0, %v843
      %v845 = vpop.f32.mrb[0].mxu0
      %846 = vdwg.mxu0
      %v847 = vld [vmem:[%s516] sm:$0xff]
      %v848 = vld [vmem:[%s516 + $0x8] sm:$0xff]
      %v849 = vld [vmem:[%s516 + $0x10] sm:$0xff]
      %v850 = vld [vmem:[%s516 + $0x18] sm:$0xff]
      %v851 = vld [vmem:[%s516 + $0x20] sm:$0xff]
      %v852 = vld [vmem:[%s516 + $0x28] sm:$0xff]
      %v853 = vld [vmem:[%s516 + $0x30] sm:$0xff]
      %v854 = vld [vmem:[%s516 + $0x38] sm:$0xff]
      %v855 = vld [vmem:[%s516 + $0x40] sm:$0xff]
      %v856 = vld [vmem:[%s516 + $0x48] sm:$0xff]
      %v857 = vld [vmem:[%s516 + $0x50] sm:$0xff]
      %v858 = vld [vmem:[%s516 + $0x58] sm:$0xff]
      %v859 = vld [vmem:[%s516 + $0x60] sm:$0xff]
      %v860 = vld [vmem:[%s516 + $0x68] sm:$0xff]
      %v861 = vld [vmem:[%s516 + $0x70] sm:$0xff]
      %v862 = vld [vmem:[%s516 + $0x78] sm:$0xff]
      %v863 = vld [vmem:[%s4] sm:$0xf]
      %v864 = vld [vmem:[%s5] sm:$0x1]
      %v866 = vlaneseq
      %v867 = vshrl.u32 %v866, 7
      %v868 = vsub.s32 0, %v867
      %v869 = vrot.slane %v864, %v868
      %vm871 = vcmask 31744
      %v873 = vsel %vm871, %v847, 0
      %v876 = vsel %vm871, %v848, 0
      %v879 = vsel %vm871, %v849, 0
      %v882 = vsel %vm871, %v850, 0
      %v885 = vsel %vm871, %v851, 0
      %v888 = vsel %vm871, %v852, 0
      %v891 = vsel %vm871, %v853, 0
      %v894 = vsel %vm871, %v854, 0
      %v897 = vsel %vm871, %v855, 0
      %v900 = vsel %vm871, %v856, 0
      %v903 = vsel %vm871, %v857, 0
      %v906 = vsel %vm871, %v858, 0
      %v909 = vsel %vm871, %v859, 0
      %v912 = vsel %vm871, %v860, 0
      %v915 = vsel %vm871, %v861, 0
      %v918 = vsel %vm871, %v862, 0
      %vm920 = vcmask 1043456
      %v922 = vsel %vm920, %v863, 0
      %924 = vmatprep.subr.mxu0 0.0
      %925 = vmatpush1.msra.mxu0 %v922
      %926 = vmatprep.subr.mxu0 0.0
      %927 = vmatpush1.msra.mxu0 0.0
      %928 = vmatprep.subr.mxu0 0.0
      %929 = vmatpush1.msra.mxu0 0.0
      %930 = vmatprep.subr.mxu0 0.0
      %931 = vmatpush1.msra.mxu0 0.0
      %932 = vmatprep.subr.mxu0 0.0
      %933 = vmatpush1.msra.mxu0 0.0
      %934 = vmatprep.subr.mxu0 0.0
      %935 = vmatpush1.msra.mxu0 0.0
      %936 = vmatprep.subr.mxu0 0.0
      %937 = vmatpush1.msra.mxu0 0.0
      %938 = vmatprep.subr.mxu0 0.0
      %939 = vmatpush1.msra.mxu0 0.0
      %940 = vmatprep.subr.mxu0 0.0
      %941 = vmatpush1.msra.mxu0 0.0
      %942 = vmatprep.subr.mxu0 0.0
      %943 = vmatpush1.msra.mxu0 0.0
      %944 = vmatprep.subr.mxu0 0.0
      %945 = vmatpush1.msra.mxu0 0.0
      %946 = vmatprep.subr.mxu0 0.0
      %947 = vmatpush1.msra.mxu0 0.0
      %948 = vmatprep.subr.mxu0 0.0
      %949 = vmatpush1.msra.mxu0 0.0
      %950 = vmatprep.subr.mxu0 0.0
      %951 = vmatpush1.msra.mxu0 0.0
      %952 = vmatprep.subr.mxu0 0.0
      %953 = vmatpush1.msra.mxu0 0.0
      %954 = vmatprep.subr.mxu0 0.0
      %955 = vmatpush1.msra.mxu0 0.0
      %956 = vmatprep.subr.mxu0 0.0
      %957 = vmatpush1.msra.mxu0 0.0
      %958 = vmatprep.subr.mxu0 0.0
      %959 = vmatpush1.msra.mxu0 0.0
      %960 = vmatprep.subr.mxu0 0.0
      %961 = vmatpush1.msra.mxu0 0.0
      %962 = vmatprep.subr.mxu0 0.0
      %963 = vmatpush1.msra.mxu0 0.0
      %964 = vmatprep.subr.mxu0 0.0
      %965 = vmatpush1.msra.mxu0 0.0
      %966 = vmatprep.subr.mxu0 0.0
      %967 = vmatpush1.msra.mxu0 0.0
      %968 = vmatprep.subr.mxu0 0.0
      %969 = vmatpush1.msra.mxu0 0.0
      %970 = vmatprep.subr.mxu0 0.0
      %971 = vmatpush1.msra.mxu0 0.0
      %972 = vmatprep.subr.mxu0 0.0
      %973 = vmatpush1.msra.mxu0 0.0
      %974 = vmatprep.subr.mxu0 0.0
      %975 = vmatpush1.msra.mxu0 0.0
      %976 = vmatprep.subr.mxu0 0.0
      %977 = vmatpush1.msra.mxu0 0.0
      %978 = vmatprep.subr.mxu0 0.0
      %979 = vmatpush1.msra.mxu0 0.0
      %980 = vmatprep.subr.mxu0 0.0
      %981 = vmatpush1.msra.mxu0 0.0
      %982 = vmatprep.subr.mxu0 0.0
      %983 = vmatpush1.msra.mxu0 0.0
      %984 = vmatprep.subr.mxu0 0.0
      %985 = vmatpush1.msra.mxu0 0.0
      %986 = vmatprep.subr.mxu0 0.0
      %987 = vmatpush1.msra.mxu0 0.0
      %988 = vmatprep.mubr.f32.mxu0 0.0
      %989 = vmatmul.mubr.f32.gmra.mrb[0].mxu0 %v873
      %v990 = vpop.f32.mrb[0].mxu0
      %v991 = vadd.f32 %v869, %v990
      %v992 = vpop.f32.mrb[0].mxu0
      %993 = vmatprep.mubr.f32.mxu0 0.0
      %994 = vmatmul.mubr.f32.gmra.mrb[0].mxu0 %v876
      %v995 = vpop.f32.mrb[0].mxu0
      %v996 = vadd.f32 %v869, %v995
      %v997 = vpop.f32.mrb[0].mxu0
      %998 = vmatprep.mubr.f32.mxu0 0.0
      %999 = vmatmul.mubr.f32.gmra.mrb[0].mxu0 %v879
      %v1000 = vpop.f32.mrb[0].mxu0
      %v1001 = vadd.f32 %v869, %v1000
      %v1002 = vpop.f32.mrb[0].mxu0
      %1003 = vmatprep.mubr.f32.mxu0 0.0
      %1004 = vmatmul.mubr.f32.gmra.mrb[0].mxu0 %v882
      %v1005 = vpop.f32.mrb[0].mxu0
      %v1006 = vadd.f32 %v869, %v1005
      %v1007 = vpop.f32.mrb[0].mxu0
      %1008 = vmatprep.mubr.f32.mxu0 0.0
      %1009 = vmatmul.mubr.f32.gmra.mrb[0].mxu0 %v885
      %v1010 = vpop.f32.mrb[0].mxu0
      %v1011 = vadd.f32 %v869, %v1010
      %v1012 = vpop.f32.mrb[0].mxu0
      %1013 = vmatprep.mubr.f32.mxu0 0.0
      %1014 = vmatmul.mubr.f32.gmra.mrb[0].mxu0 %v888
      %v1015 = vpop.f32.mrb[0].mxu0
      %v1016 = vadd.f32 %v869, %v1015
      %v1017 = vpop.f32.mrb[0].mxu0
      %1018 = vmatprep.mubr.f32.mxu0 0.0
      %1019 = vmatmul.mubr.f32.gmra.mrb[0].mxu0 %v891
      %v1020 = vpop.f32.mrb[0].mxu0
      %v1021 = vadd.f32 %v869, %v1020
      %v1022 = vpop.f32.mrb[0].mxu0
      %1023 = vmatprep.mubr.f32.mxu0 0.0
      %1024 = vmatmul.mubr.f32.gmra.mrb[0].mxu0 %v894
      %v1025 = vpop.f32.mrb[0].mxu0
      %v1026 = vadd.f32 %v869, %v1025
      %v1027 = vpop.f32.mrb[0].mxu0
      %1028 = vmatprep.mubr.f32.mxu0 0.0
      %1029 = vmatmul.mubr.f32.gmra.mrb[0].mxu0 %v897
      %v1030 = vpop.f32.mrb[0].mxu0
      %v1031 = vadd.f32 %v869, %v1030
      %v1032 = vpop.f32.mrb[0].mxu0
      %1033 = vmatprep.mubr.f32.mxu0 0.0
      %1034 = vmatmul.mubr.f32.gmra.mrb[0].mxu0 %v900
      %v1035 = vpop.f32.mrb[0].mxu0
      %v1036 = vadd.f32 %v869, %v1035
      %v1037 = vpop.f32.mrb[0].mxu0
      %1038 = vmatprep.mubr.f32.mxu0 0.0
      %1039 = vmatmul.mubr.f32.gmra.mrb[0].mxu0 %v903
      %v1040 = vpop.f32.mrb[0].mxu0
      %v1041 = vadd.f32 %v869, %v1040
      %v1042 = vpop.f32.mrb[0].mxu0
      %1043 = vmatprep.mubr.f32.mxu0 0.0
      %1044 = vmatmul.mubr.f32.gmra.mrb[0].mxu0 %v906
      %v1045 = vpop.f32.mrb[0].mxu0
      %v1046 = vadd.f32 %v869, %v1045
      %v1047 = vpop.f32.mrb[0].mxu0
      %1048 = vmatprep.mubr.f32.mxu0 0.0
      %1049 = vmatmul.mubr.f32.gmra.mrb[0].mxu0 %v909
      %v1050 = vpop.f32.mrb[0].mxu0
      %v1051 = vadd.f32 %v869, %v1050
      %v1052 = vpop.f32.mrb[0].mxu0
      %1053 = vmatprep.mubr.f32.mxu0 0.0
      %1054 = vmatmul.mubr.f32.gmra.mrb[0].mxu0 %v912
      %v1055 = vpop.f32.mrb[0].mxu0
      %v1056 = vadd.f32 %v869, %v1055
      %v1057 = vpop.f32.mrb[0].mxu0
      %1058 = vmatprep.mubr.f32.mxu0 0.0
      %1059 = vmatmul.mubr.f32.gmra.mrb[0].mxu0 %v915
      %v1060 = vpop.f32.mrb[0].mxu0
      %v1061 = vadd.f32 %v869, %v1060
      %v1062 = vpop.f32.mrb[0].mxu0
      %1063 = vmatprep.mubr.f32.mxu0 0.0
      %1064 = vmatmul.mubr.f32.gmra.mrb[0].mxu0 %v918
      %v1065 = vpop.f32.mrb[0].mxu0
      %v1066 = vadd.f32 %v869, %v1065
      %v1067 = vpop.f32.mrb[0].mxu0
      %1068 = vdwg.mxu0
      %v1069 = vmax.f32 %v991, 0.0
      %v1070 = vmax.f32 %v996, 0.0
      %v1071 = vmax.f32 %v1001, 0.0
      %v1072 = vmax.f32 %v1006, 0.0
      %v1073 = vmax.f32 %v1011, 0.0
      %v1074 = vmax.f32 %v1016, 0.0
      %v1075 = vmax.f32 %v1021, 0.0
      %v1076 = vmax.f32 %v1026, 0.0
      %v1077 = vmax.f32 %v1031, 0.0
      %v1078 = vmax.f32 %v1036, 0.0
      %v1079 = vmax.f32 %v1041, 0.0
      %v1080 = vmax.f32 %v1046, 0.0
      %v1081 = vmax.f32 %v1051, 0.0
      %v1082 = vmax.f32 %v1056, 0.0
      %v1083 = vmax.f32 %v1061, 0.0
      %v1084 = vmax.f32 %v1066, 0.0
      %v1085 = vld [vmem:[%s6] sm:$0xff]
      %v1086 = vld [vmem:[%s6 + $0x8] sm:$0xff]
      %v1087 = vld [vmem:[%s6 + $0x10] sm:$0xff]
      %v1088 = vld [vmem:[%s6 + $0x18] sm:$0xff]
      %v1089 = vld [vmem:[%s6 + $0x20] sm:$0xff]
      %v1090 = vld [vmem:[%s6 + $0x28] sm:$0xff]
      %v1091 = vld [vmem:[%s6 + $0x30] sm:$0xff]
      %v1092 = vld [vmem:[%s6 + $0x38] sm:$0xff]
      %v1093 = vld [vmem:[%s6 + $0x40] sm:$0xff]
      %v1094 = vld [vmem:[%s6 + $0x48] sm:$0xff]
      %v1095 = vld [vmem:[%s6 + $0x50] sm:$0xff]
      %v1096 = vld [vmem:[%s6 + $0x58] sm:$0xff]
      %v1097 = vld [vmem:[%s6 + $0x60] sm:$0xff]
      %v1098 = vld [vmem:[%s6 + $0x68] sm:$0xff]
      %v1099 = vld [vmem:[%s6 + $0x70] sm:$0xff]
      %v1100 = vld [vmem:[%s6 + $0x78] sm:$0xff]
      %v1101 = vld [vmem:[%s7] sm:$0x1]
      %v1103 = vlaneseq
      %v1104 = vshrl.u32 %v1103, 7
      %v1105 = vsub.s32 0, %v1104
      %v1106 = vrot.slane %v1101, %v1105
      %1108 = vmatprep.subr.mxu0 0.0
      %1109 = vmatpush1.msra.mxu0 %v1085
      %1110 = vmatprep.subr.mxu0 0.0
      %1111 = vmatpush1.msra.mxu0 %v1086
      %1112 = vmatprep.subr.mxu0 0.0
      %1113 = vmatpush1.msra.mxu0 %v1087
      %1114 = vmatprep.subr.mxu0 0.0
      %1115 = vmatpush1.msra.mxu0 %v1088
      %1116 = vmatprep.subr.mxu0 0.0
      %1117 = vmatpush1.msra.mxu0 %v1089
      %1118 = vmatprep.subr.mxu0 0.0
      %1119 = vmatpush1.msra.mxu0 %v1090
      %1120 = vmatprep.subr.mxu0 0.0
      %1121 = vmatpush1.msra.mxu0 %v1091
      %1122 = vmatprep.subr.mxu0 0.0
      %1123 = vmatpush1.msra.mxu0 %v1092
      %1124 = vmatprep.subr.mxu0 0.0
      %1125 = vmatpush1.msra.mxu0 %v1093
      %1126 = vmatprep.subr.mxu0 0.0
      %1127 = vmatpush1.msra.mxu0 %v1094
      %1128 = vmatprep.subr.mxu0 0.0
      %1129 = vmatpush1.msra.mxu0 %v1095
      %1130 = vmatprep.subr.mxu0 0.0
      %1131 = vmatpush1.msra.mxu0 %v1096
      %1132 = vmatprep.subr.mxu0 0.0
      %1133 = vmatpush1.msra.mxu0 %v1097
      %1134 = vmatprep.subr.mxu0 0.0
      %1135 = vmatpush1.msra.mxu0 %v1098
      %1136 = vmatprep.subr.mxu0 0.0
      %1137 = vmatpush1.msra.mxu0 %v1099
      %1138 = vmatprep.subr.mxu0 0.0
      %1139 = vmatpush1.msra.mxu0 %v1100
      %1140 = vmatprep.subr.mxu0 0.0
      %1141 = vmatpush1.msra.mxu0 0.0
      %1142 = vmatprep.subr.mxu0 0.0
      %1143 = vmatpush1.msra.mxu0 0.0
      %1144 = vmatprep.subr.mxu0 0.0
      %1145 = vmatpush1.msra.mxu0 0.0
      %1146 = vmatprep.subr.mxu0 0.0
      %1147 = vmatpush1.msra.mxu0 0.0
      %1148 = vmatprep.subr.mxu0 0.0
      %1149 = vmatpush1.msra.mxu0 0.0
      %1150 = vmatprep.subr.mxu0 0.0
      %1151 = vmatpush1.msra.mxu0 0.0
      %1152 = vmatprep.subr.mxu0 0.0
      %1153 = vmatpush1.msra.mxu0 0.0
      %1154 = vmatprep.subr.mxu0 0.0
      %1155 = vmatpush1.msra.mxu0 0.0
      %1156 = vmatprep.subr.mxu0 0.0
      %1157 = vmatpush1.msra.mxu0 0.0
      %1158 = vmatprep.subr.mxu0 0.0
      %1159 = vmatpush1.msra.mxu0 0.0
      %1160 = vmatprep.subr.mxu0 0.0
      %1161 = vmatpush1.msra.mxu0 0.0
      %1162 = vmatprep.subr.mxu0 0.0
      %1163 = vmatpush1.msra.mxu0 0.0
      %1164 = vmatprep.subr.mxu0 0.0
      %1165 = vmatpush1.msra.mxu0 0.0
      %1166 = vmatprep.subr.mxu0 0.0
      %1167 = vmatpush1.msra.mxu0 0.0
      %1168 = vmatprep.subr.mxu0 0.0
      %1169 = vmatpush1.msra.mxu0 0.0
      %1170 = vmatprep.subr.mxu0 0.0
      %1171 = vmatpush1.msra.mxu0 0.0
      %1172 = vmatprep.mubr.f32.mxu0 0.0
      %1173 = vmatmul.mubr.f32.gmra.mrb[0].mxu0 %v1069
      %v1174 = vpop.f32.mrb[0].mxu0
      %v1175 = vadd.f32 %v1106, %v1174
      %v1176 = vpop.f32.mrb[0].mxu0
      %1177 = vmatprep.mubr.f32.mxu0 0.0
      %1178 = vmatmul.mubr.f32.gmra.mrb[0].mxu0 %v1070
      %v1179 = vpop.f32.mrb[0].mxu0
      %v1180 = vadd.f32 %v1106, %v1179
      %v1181 = vpop.f32.mrb[0].mxu0
      %1182 = vmatprep.mubr.f32.mxu0 0.0
      %1183 = vmatmul.mubr.f32.gmra.mrb[0].mxu0 %v1071
      %v1184 = vpop.f32.mrb[0].mxu0
      %v1185 = vadd.f32 %v1106, %v1184
      %v1186 = vpop.f32.mrb[0].mxu0
      %1187 = vmatprep.mubr.f32.mxu0 0.0
      %1188 = vmatmul.mubr.f32.gmra.mrb[0].mxu0 %v1072
      %v1189 = vpop.f32.mrb[0].mxu0
      %v1190 = vadd.f32 %v1106, %v1189
      %v1191 = vpop.f32.mrb[0].mxu0
      %1192 = vmatprep.mubr.f32.mxu0 0.0
      %1193 = vmatmul.mubr.f32.gmra.mrb[0].mxu0 %v1073
      %v1194 = vpop.f32.mrb[0].mxu0
      %v1195 = vadd.f32 %v1106, %v1194
      %v1196 = vpop.f32.mrb[0].mxu0
      %1197 = vmatprep.mubr.f32.mxu0 0.0
      %1198 = vmatmul.mubr.f32.gmra.mrb[0].mxu0 %v1074
      %v1199 = vpop.f32.mrb[0].mxu0
      %v1200 = vadd.f32 %v1106, %v1199
      %v1201 = vpop.f32.mrb[0].mxu0
      %1202 = vmatprep.mubr.f32.mxu0 0.0
      %1203 = vmatmul.mubr.f32.gmra.mrb[0].mxu0 %v1075
      %v1204 = vpop.f32.mrb[0].mxu0
      %v1205 = vadd.f32 %v1106, %v1204
      %v1206 = vpop.f32.mrb[0].mxu0
      %1207 = vmatprep.mubr.f32.mxu0 0.0
      %1208 = vmatmul.mubr.f32.gmra.mrb[0].mxu0 %v1076
      %v1209 = vpop.f32.mrb[0].mxu0
      %v1210 = vadd.f32 %v1106, %v1209
      %v1211 = vpop.f32.mrb[0].mxu0
      %1212 = vmatprep.mubr.f32.mxu0 0.0
      %1213 = vmatmul.mubr.f32.gmra.mrb[0].mxu0 %v1077
      %v1214 = vpop.f32.mrb[0].mxu0
      %v1215 = vadd.f32 %v1106, %v1214
      %v1216 = vpop.f32.mrb[0].mxu0
      %1217 = vmatprep.mubr.f32.mxu0 0.0
      %1218 = vmatmul.mubr.f32.gmra.mrb[0].mxu0 %v1078
      %v1219 = vpop.f32.mrb[0].mxu0
      %v1220 = vadd.f32 %v1106, %v1219
      %v1221 = vpop.f32.mrb[0].mxu0
      %1222 = vmatprep.mubr.f32.mxu0 0.0
      %1223 = vmatmul.mubr.f32.gmra.mrb[0].mxu0 %v1079
      %v1224 = vpop.f32.mrb[0].mxu0
      %v1225 = vadd.f32 %v1106, %v1224
      %v1226 = vpop.f32.mrb[0].mxu0
      %1227 = vmatprep.mubr.f32.mxu0 0.0
      %1228 = vmatmul.mubr.f32.gmra.mrb[0].mxu0 %v1080
      %v1229 = vpop.f32.mrb[0].mxu0
      %v1230 = vadd.f32 %v1106, %v1229
      %v1231 = vpop.f32.mrb[0].mxu0
      %1232 = vmatprep.mubr.f32.mxu0 0.0
      %1233 = vmatmul.mubr.f32.gmra.mrb[0].mxu0 %v1081
      %v1234 = vpop.f32.mrb[0].mxu0
      %v1235 = vadd.f32 %v1106, %v1234
      %v1236 = vpop.f32.mrb[0].mxu0
      %1237 = vmatprep.mubr.f32.mxu0 0.0
      %1238 = vmatmul.mubr.f32.gmra.mrb[0].mxu0 %v1082
      %v1239 = vpop.f32.mrb[0].mxu0
      %v1240 = vadd.f32 %v1106, %v1239
      %v1241 = vpop.f32.mrb[0].mxu0
      %1242 = vmatprep.mubr.f32.mxu0 0.0
      %1243 = vmatmul.mubr.f32.gmra.mrb[0].mxu0 %v1083
      %v1244 = vpop.f32.mrb[0].mxu0
      %v1245 = vadd.f32 %v1106, %v1244
      %v1246 = vpop.f32.mrb[0].mxu0
      %1247 = vmatprep.mubr.f32.mxu0 0.0
      %1248 = vmatmul.mubr.f32.gmra.mrb[0].mxu0 %v1084
      %v1249 = vpop.f32.mrb[0].mxu0
      %v1250 = vadd.f32 %v1106, %v1249
      %v1251 = vpop.f32.mrb[0].mxu0
      %1252 = vdwg.mxu0
      %v1253 = vld [vmem:[%s8] sm:$0xff]
      %v1254 = vld [vmem:[%s8 + $0x8] sm:$0xff]
      %vm1255 = vcmask 130048
      %v1257 = vsel %vm1255, %v769, 0
      %v1260 = vsel %vm1255, %v774, 0
      %v1263 = vsel %vm1255, %v779, 0
      %v1266 = vsel %vm1255, %v784, 0
      %v1269 = vsel %vm1255, %v789, 0
      %v1272 = vsel %vm1255, %v794, 0
      %v1275 = vsel %vm1255, %v799, 0
      %v1278 = vsel %vm1255, %v804, 0
      %v1281 = vsel %vm1255, %v809, 0
      %v1284 = vsel %vm1255, %v814, 0
      %v1287 = vsel %vm1255, %v819, 0
      %v1290 = vsel %vm1255, %v824, 0
      %v1293 = vsel %vm1255, %v829, 0
      %v1296 = vsel %vm1255, %v834, 0
      %v1299 = vsel %vm1255, %v839, 0
      %v1302 = vsel %vm1255, %v844, 0
      %1304 = vmatprep.subr.mxu0 0.0
      %1305 = vmatpush1.msra.mxu0 %v1253
      %1306 = vmatprep.subr.mxu0 0.0
      %1307 = vmatpush1.msra.mxu0 %v1254
      %1308 = vmatprep.subr.mxu0 0.0
      %1309 = vmatpush1.msra.mxu0 0.0
      %1310 = vmatprep.subr.mxu0 0.0
      %1311 = vmatpush1.msra.mxu0 0.0
      %1312 = vmatprep.subr.mxu0 0.0
      %1313 = vmatpush1.msra.mxu0 0.0
      %1314 = vmatprep.subr.mxu0 0.0
      %1315 = vmatpush1.msra.mxu0 0.0
      %1316 = vmatprep.subr.mxu0 0.0
      %1317 = vmatpush1.msra.mxu0 0.0
      %1318 = vmatprep.subr.mxu0 0.0
      %1319 = vmatpush1.msra.mxu0 0.0
      %1320 = vmatprep.subr.mxu0 0.0
      %1321 = vmatpush1.msra.mxu0 0.0
      %1322 = vmatprep.subr.mxu0 0.0
      %1323 = vmatpush1.msra.mxu0 0.0
      %1324 = vmatprep.subr.mxu0 0.0
      %1325 = vmatpush1.msra.mxu0 0.0
      %1326 = vmatprep.subr.mxu0 0.0
      %1327 = vmatpush1.msra.mxu0 0.0
      %1328 = vmatprep.subr.mxu0 0.0
      %1329 = vmatpush1.msra.mxu0 0.0
      %1330 = vmatprep.subr.mxu0 0.0
      %1331 = vmatpush1.msra.mxu0 0.0
      %1332 = vmatprep.subr.mxu0 0.0
      %1333 = vmatpush1.msra.mxu0 0.0
      %1334 = vmatprep.subr.mxu0 0.0
      %1335 = vmatpush1.msra.mxu0 0.0
      %1336 = vmatprep.subr.mxu0 0.0
      %1337 = vmatpush1.msra.mxu0 0.0
      %1338 = vmatprep.subr.mxu0 0.0
      %1339 = vmatpush1.msra.mxu0 0.0
      %1340 = vmatprep.subr.mxu0 0.0
      %1341 = vmatpush1.msra.mxu0 0.0
      %1342 = vmatprep.subr.mxu0 0.0
      %1343 = vmatpush1.msra.mxu0 0.0
      %1344 = vmatprep.subr.mxu0 0.0
      %1345 = vmatpush1.msra.mxu0 0.0
      %1346 = vmatprep.subr.mxu0 0.0
      %1347 = vmatpush1.msra.mxu0 0.0
      %1348 = vmatprep.subr.mxu0 0.0
      %1349 = vmatpush1.msra.mxu0 0.0
      %1350 = vmatprep.subr.mxu0 0.0
      %1351 = vmatpush1.msra.mxu0 0.0
      %1352 = vmatprep.subr.mxu0 0.0
      %1353 = vmatpush1.msra.mxu0 0.0
      %1354 = vmatprep.subr.mxu0 0.0
      %1355 = vmatpush1.msra.mxu0 0.0
      %1356 = vmatprep.subr.mxu0 0.0
      %1357 = vmatpush1.msra.mxu0 0.0
      %1358 = vmatprep.subr.mxu0 0.0
      %1359 = vmatpush1.msra.mxu0 0.0
      %1360 = vmatprep.subr.mxu0 0.0
      %1361 = vmatpush1.msra.mxu0 0.0
      %1362 = vmatprep.subr.mxu0 0.0
      %1363 = vmatpush1.msra.mxu0 0.0
      %1364 = vmatprep.subr.mxu0 0.0
      %1365 = vmatpush1.msra.mxu0 0.0
      %1366 = vmatprep.subr.mxu0 0.0
      %1367 = vmatpush1.msra.mxu0 0.0
      %1368 = vmatprep.mubr.f32.mxu0 0.0
      %1369 = vmatmul.mubr.f32.gmra.mrb[0].mxu0 %v1257
      %v1370 = vpop.f32.mrb[0].mxu0
      %v1371 = vadd.f32 0.0, %v1370
      %v1372 = vpop.f32.mrb[0].mxu0
      %1373 = vmatprep.mubr.f32.mxu0 0.0
      %1374 = vmatmul.mubr.f32.gmra.mrb[0].mxu0 %v1260
      %v1375 = vpop.f32.mrb[0].mxu0
      %v1376 = vadd.f32 0.0, %v1375
      %v1377 = vpop.f32.mrb[0].mxu0
      %1378 = vmatprep.mubr.f32.mxu0 0.0
      %1379 = vmatmul.mubr.f32.gmra.mrb[0].mxu0 %v1263
      %v1380 = vpop.f32.mrb[0].mxu0
      %v1381 = vadd.f32 0.0, %v1380
      %v1382 = vpop.f32.mrb[0].mxu0
      %1383 = vmatprep.mubr.f32.mxu0 0.0
      %1384 = vmatmul.mubr.f32.gmra.mrb[0].mxu0 %v1266
      %v1385 = vpop.f32.mrb[0].mxu0
      %v1386 = vadd.f32 0.0, %v1385
      %v1387 = vpop.f32.mrb[0].mxu0
      %1388 = vmatprep.mubr.f32.mxu0 0.0
      %1389 = vmatmul.mubr.f32.gmra.mrb[0].mxu0 %v1269
      %v1390 = vpop.f32.mrb[0].mxu0
      %v1391 = vadd.f32 0.0, %v1390
      %v1392 = vpop.f32.mrb[0].mxu0
      %1393 = vmatprep.mubr.f32.mxu0 0.0
      %1394 = vmatmul.mubr.f32.gmra.mrb[0].mxu0 %v1272
      %v1395 = vpop.f32.mrb[0].mxu0
      %v1396 = vadd.f32 0.0, %v1395
      %v1397 = vpop.f32.mrb[0].mxu0
      %1398 = vmatprep.mubr.f32.mxu0 0.0
      %1399 = vmatmul.mubr.f32.gmra.mrb[0].mxu0 %v1275
      %v1400 = vpop.f32.mrb[0].mxu0
      %v1401 = vadd.f32 0.0, %v1400
      %v1402 = vpop.f32.mrb[0].mxu0
      %1403 = vmatprep.mubr.f32.mxu0 0.0
      %1404 = vmatmul.mubr.f32.gmra.mrb[0].mxu0 %v1278
      %v1405 = vpop.f32.mrb[0].mxu0
      %v1406 = vadd.f32 0.0, %v1405
      %v1407 = vpop.f32.mrb[0].mxu0
      %1408 = vmatprep.mubr.f32.mxu0 0.0
      %1409 = vmatmul.mubr.f32.gmra.mrb[0].mxu0 %v1281
      %v1410 = vpop.f32.mrb[0].mxu0
      %v1411 = vadd.f32 0.0, %v1410
      %v1412 = vpop.f32.mrb[0].mxu0
      %1413 = vmatprep.mubr.f32.mxu0 0.0
      %1414 = vmatmul.mubr.f32.gmra.mrb[0].mxu0 %v1284
      %v1415 = vpop.f32.mrb[0].mxu0
      %v1416 = vadd.f32 0.0, %v1415
      %v1417 = vpop.f32.mrb[0].mxu0
      %1418 = vmatprep.mubr.f32.mxu0 0.0
      %1419 = vmatmul.mubr.f32.gmra.mrb[0].mxu0 %v1287
      %v1420 = vpop.f32.mrb[0].mxu0
      %v1421 = vadd.f32 0.0, %v1420
      %v1422 = vpop.f32.mrb[0].mxu0
      %1423 = vmatprep.mubr.f32.mxu0 0.0
      %1424 = vmatmul.mubr.f32.gmra.mrb[0].mxu0 %v1290
      %v1425 = vpop.f32.mrb[0].mxu0
      %v1426 = vadd.f32 0.0, %v1425
      %v1427 = vpop.f32.mrb[0].mxu0
      %1428 = vmatprep.mubr.f32.mxu0 0.0
      %1429 = vmatmul.mubr.f32.gmra.mrb[0].mxu0 %v1293
      %v1430 = vpop.f32.mrb[0].mxu0
      %v1431 = vadd.f32 0.0, %v1430
      %v1432 = vpop.f32.mrb[0].mxu0
      %1433 = vmatprep.mubr.f32.mxu0 0.0
      %1434 = vmatmul.mubr.f32.gmra.mrb[0].mxu0 %v1296
      %v1435 = vpop.f32.mrb[0].mxu0
      %v1436 = vadd.f32 0.0, %v1435
      %v1437 = vpop.f32.mrb[0].mxu0
      %1438 = vmatprep.mubr.f32.mxu0 0.0
      %1439 = vmatmul.mubr.f32.gmra.mrb[0].mxu0 %v1299
      %v1440 = vpop.f32.mrb[0].mxu0
      %v1441 = vadd.f32 0.0, %v1440
      %v1442 = vpop.f32.mrb[0].mxu0
      %1443 = vmatprep.mubr.f32.mxu0 0.0
      %1444 = vmatmul.mubr.f32.gmra.mrb[0].mxu0 %v1302
      %v1445 = vpop.f32.mrb[0].mxu0
      %v1446 = vadd.f32 0.0, %v1445
      %v1447 = vpop.f32.mrb[0].mxu0
      %1448 = vdwg.mxu0
      %v1449 = vmul.f32 %v1175, %v1371
      %v1450 = vmul.f32 %v1180, %v1376
      %v1451 = vmul.f32 %v1185, %v1381
      %v1452 = vmul.f32 %v1190, %v1386
      %v1453 = vmul.f32 %v1195, %v1391
      %v1454 = vmul.f32 %v1200, %v1396
      %v1455 = vmul.f32 %v1205, %v1401
      %v1456 = vmul.f32 %v1210, %v1406
      %v1457 = vmul.f32 %v1215, %v1411
      %v1458 = vmul.f32 %v1220, %v1416
      %v1459 = vmul.f32 %v1225, %v1421
      %v1460 = vmul.f32 %v1230, %v1426
      %v1461 = vmul.f32 %v1235, %v1431
      %v1462 = vmul.f32 %v1240, %v1436
      %v1463 = vmul.f32 %v1245, %v1441
      %v1464 = vmul.f32 %v1250, %v1446
      %v1465 = vld [vmem:[%s9] sm:$0xff]
      %v1466 = vld [vmem:[%s9 + $0x8] sm:$0xff]
      %v1467 = vld [vmem:[%s9 + $0x10] sm:$0xff]
      %v1468 = vld [vmem:[%s9 + $0x18] sm:$0xff]
      %v1469 = vld [vmem:[%s9 + $0x20] sm:$0xff]
      %v1470 = vld [vmem:[%s9 + $0x28] sm:$0xff]
      %v1471 = vld [vmem:[%s9 + $0x30] sm:$0xff]
      %v1472 = vld [vmem:[%s9 + $0x38] sm:$0xff]
      %v1473 = vld [vmem:[%s9 + $0x40] sm:$0xff]
      %v1474 = vld [vmem:[%s9 + $0x48] sm:$0xff]
      %v1475 = vld [vmem:[%s9 + $0x50] sm:$0xff]
      %v1476 = vld [vmem:[%s9 + $0x58] sm:$0xff]
      %v1477 = vld [vmem:[%s9 + $0x60] sm:$0xff]
      %v1478 = vld [vmem:[%s9 + $0x68] sm:$0xff]
      %v1479 = vld [vmem:[%s9 + $0x70] sm:$0xff]
      %v1480 = vld [vmem:[%s9 + $0x78] sm:$0xff]
      %1481 = vmatprep.subr.mxu0 0.0
      %1482 = vmatpush1.msra.mxu0 %v1465
      %1483 = vmatprep.subr.mxu0 0.0
      %1484 = vmatpush1.msra.mxu0 %v1466
      %1485 = vmatprep.subr.mxu0 0.0
      %1486 = vmatpush1.msra.mxu0 %v1467
      %1487 = vmatprep.subr.mxu0 0.0
      %1488 = vmatpush1.msra.mxu0 %v1468
      %1489 = vmatprep.subr.mxu0 0.0
      %1490 = vmatpush1.msra.mxu0 %v1469
      %1491 = vmatprep.subr.mxu0 0.0
      %1492 = vmatpush1.msra.mxu0 %v1470
      %1493 = vmatprep.subr.mxu0 0.0
      %1494 = vmatpush1.msra.mxu0 %v1471
      %1495 = vmatprep.subr.mxu0 0.0
      %1496 = vmatpush1.msra.mxu0 %v1472
      %1497 = vmatprep.subr.mxu0 0.0
      %1498 = vmatpush1.msra.mxu0 %v1473
      %1499 = vmatprep.subr.mxu0 0.0
      %1500 = vmatpush1.msra.mxu0 %v1474
      %1501 = vmatprep.subr.mxu0 0.0
      %1502 = vmatpush1.msra.mxu0 %v1475
      %1503 = vmatprep.subr.mxu0 0.0
      %1504 = vmatpush1.msra.mxu0 %v1476
      %1505 = vmatprep.subr.mxu0 0.0
      %1506 = vmatpush1.msra.mxu0 %v1477
      %1507 = vmatprep.subr.mxu0 0.0
      %1508 = vmatpush1.msra.mxu0 %v1478
      %1509 = vmatprep.subr.mxu0 0.0
      %1510 = vmatpush1.msra.mxu0 %v1479
      %1511 = vmatprep.subr.mxu0 0.0
      %1512 = vmatpush1.msra.mxu0 %v1480
      %1513 = vmatprep.subr.mxu0 0.0
      %1514 = vmatpush1.msra.mxu0 0.0
      %1515 = vmatprep.subr.mxu0 0.0
      %1516 = vmatpush1.msra.mxu0 0.0
      %1517 = vmatprep.subr.mxu0 0.0
      %1518 = vmatpush1.msra.mxu0 0.0
      %1519 = vmatprep.subr.mxu0 0.0
      %1520 = vmatpush1.msra.mxu0 0.0
      %1521 = vmatprep.subr.mxu0 0.0
      %1522 = vmatpush1.msra.mxu0 0.0
      %1523 = vmatprep.subr.mxu0 0.0
      %1524 = vmatpush1.msra.mxu0 0.0
      %1525 = vmatprep.subr.mxu0 0.0
      %1526 = vmatpush1.msra.mxu0 0.0
      %1527 = vmatprep.subr.mxu0 0.0
      %1528 = vmatpush1.msra.mxu0 0.0
      %1529 = vmatprep.subr.mxu0 0.0
      %1530 = vmatpush1.msra.mxu0 0.0
      %1531 = vmatprep.subr.mxu0 0.0
      %1532 = vmatpush1.msra.mxu0 0.0
      %1533 = vmatprep.subr.mxu0 0.0
      %1534 = vmatpush1.msra.mxu0 0.0
      %1535 = vmatprep.subr.mxu0 0.0
      %1536 = vmatpush1.msra.mxu0 0.0
      %1537 = vmatprep.subr.mxu0 0.0
      %1538 = vmatpush1.msra.mxu0 0.0
      %1539 = vmatprep.subr.mxu0 0.0
      %1540 = vmatpush1.msra.mxu0 0.0
      %1541 = vmatprep.subr.mxu0 0.0
      %1542 = vmatpush1.msra.mxu0 0.0
      %1543 = vmatprep.subr.mxu0 0.0
      %1544 = vmatpush1.msra.mxu0 0.0
      %1545 = vmatprep.mubr.f32.mxu0 0.0
      %1546 = vmatmul.mubr.f32.gmra.mrb[0].mxu0 %v1449
      %v1547 = vpop.f32.mrb[0].mxu0
      %v1548 = vadd.f32 0.0, %v1547
      %v1549 = vpop.f32.mrb[0].mxu0
      %1550 = vmatprep.mubr.f32.mxu0 0.0
      %1551 = vmatmul.mubr.f32.gmra.mrb[0].mxu0 %v1450
      %v1552 = vpop.f32.mrb[0].mxu0
      %v1553 = vadd.f32 0.0, %v1552
      %v1554 = vpop.f32.mrb[0].mxu0
      %1555 = vmatprep.mubr.f32.mxu0 0.0
      %1556 = vmatmul.mubr.f32.gmra.mrb[0].mxu0 %v1451
      %v1557 = vpop.f32.mrb[0].mxu0
      %v1558 = vadd.f32 0.0, %v1557
      %v1559 = vpop.f32.mrb[0].mxu0
      %1560 = vmatprep.mubr.f32.mxu0 0.0
      %1561 = vmatmul.mubr.f32.gmra.mrb[0].mxu0 %v1452
      %v1562 = vpop.f32.mrb[0].mxu0
      %v1563 = vadd.f32 0.0, %v1562
      %v1564 = vpop.f32.mrb[0].mxu0
      %1565 = vmatprep.mubr.f32.mxu0 0.0
      %1566 = vmatmul.mubr.f32.gmra.mrb[0].mxu0 %v1453
      %v1567 = vpop.f32.mrb[0].mxu0
      %v1568 = vadd.f32 0.0, %v1567
      %v1569 = vpop.f32.mrb[0].mxu0
      %1570 = vmatprep.mubr.f32.mxu0 0.0
      %1571 = vmatmul.mubr.f32.gmra.mrb[0].mxu0 %v1454
      %v1572 = vpop.f32.mrb[0].mxu0
      %v1573 = vadd.f32 0.0, %v1572
      %v1574 = vpop.f32.mrb[0].mxu0
      %1575 = vmatprep.mubr.f32.mxu0 0.0
      %1576 = vmatmul.mubr.f32.gmra.mrb[0].mxu0 %v1455
      %v1577 = vpop.f32.mrb[0].mxu0
      %v1578 = vadd.f32 0.0, %v1577
      %v1579 = vpop.f32.mrb[0].mxu0
      %1580 = vmatprep.mubr.f32.mxu0 0.0
      %1581 = vmatmul.mubr.f32.gmra.mrb[0].mxu0 %v1456
      %v1582 = vpop.f32.mrb[0].mxu0
      %v1583 = vadd.f32 0.0, %v1582
      %v1584 = vpop.f32.mrb[0].mxu0
      %1585 = vmatprep.mubr.f32.mxu0 0.0
      %1586 = vmatmul.mubr.f32.gmra.mrb[0].mxu0 %v1457
      %v1587 = vpop.f32.mrb[0].mxu0
      %v1588 = vadd.f32 0.0, %v1587
      %v1589 = vpop.f32.mrb[0].mxu0
      %1590 = vmatprep.mubr.f32.mxu0 0.0
      %1591 = vmatmul.mubr.f32.gmra.mrb[0].mxu0 %v1458
      %v1592 = vpop.f32.mrb[0].mxu0
      %v1593 = vadd.f32 0.0, %v1592
      %v1594 = vpop.f32.mrb[0].mxu0
      %1595 = vmatprep.mubr.f32.mxu0 0.0
      %1596 = vmatmul.mubr.f32.gmra.mrb[0].mxu0 %v1459
      %v1597 = vpop.f32.mrb[0].mxu0
      %v1598 = vadd.f32 0.0, %v1597
      %v1599 = vpop.f32.mrb[0].mxu0
      %1600 = vmatprep.mubr.f32.mxu0 0.0
      %1601 = vmatmul.mubr.f32.gmra.mrb[0].mxu0 %v1460
      %v1602 = vpop.f32.mrb[0].mxu0
      %v1603 = vadd.f32 0.0, %v1602
      %v1604 = vpop.f32.mrb[0].mxu0
      %1605 = vmatprep.mubr.f32.mxu0 0.0
      %1606 = vmatmul.mubr.f32.gmra.mrb[0].mxu0 %v1461
      %v1607 = vpop.f32.mrb[0].mxu0
      %v1608 = vadd.f32 0.0, %v1607
      %v1609 = vpop.f32.mrb[0].mxu0
      %1610 = vmatprep.mubr.f32.mxu0 0.0
      %1611 = vmatmul.mubr.f32.gmra.mrb[0].mxu0 %v1462
      %v1612 = vpop.f32.mrb[0].mxu0
      %v1613 = vadd.f32 0.0, %v1612
      %v1614 = vpop.f32.mrb[0].mxu0
      %1615 = vmatprep.mubr.f32.mxu0 0.0
      %1616 = vmatmul.mubr.f32.gmra.mrb[0].mxu0 %v1463
      %v1617 = vpop.f32.mrb[0].mxu0
      %v1618 = vadd.f32 0.0, %v1617
      %v1619 = vpop.f32.mrb[0].mxu0
      %1620 = vmatprep.mubr.f32.mxu0 0.0
      %1621 = vmatmul.mubr.f32.gmra.mrb[0].mxu0 %v1464
      %v1622 = vpop.f32.mrb[0].mxu0
      %v1623 = vadd.f32 0.0, %v1622
      %v1624 = vpop.f32.mrb[0].mxu0
      %1625 = vdwg.mxu0
      %v1626 = vlaneseq
      %v1627 = vshrl.u32 %v1626, 7
      %v1628 = vadd.s32 %v1627, 8
      %v1629 = vadd.s32 %v1627, 16
      %v1630 = vadd.s32 %v1627, 24
      %v1631 = vadd.s32 %v1627, 32
      %v1632 = vadd.s32 %v1627, 40
      %v1633 = vadd.s32 %v1627, 48
      %v1634 = vadd.s32 %v1627, 56
      %v1635 = vld [vmem:[%s511] sm:$0x1]
      %v1636 = vlaneseq
      %v1637 = vshrl.u32 %v1636, 7
      %v1638 = vsub.s32 0, %v1637
      %v1639 = vrot.slane %v1635, %v1638
      %vm1640 = vcmp.eq.s32.totalorder %v1627, %v1639
      %vm1641 = vcmp.eq.s32.totalorder %v1628, %v1639
      %vm1642 = vcmp.eq.s32.totalorder %v1629, %v1639
      %vm1643 = vcmp.eq.s32.totalorder %v1630, %v1639
      %vm1644 = vcmp.eq.s32.totalorder %v1631, %v1639
      %vm1645 = vcmp.eq.s32.totalorder %v1632, %v1639
      %vm1646 = vcmp.eq.s32.totalorder %v1633, %v1639
      %vm1647 = vcmp.eq.s32.totalorder %v1634, %v1639
      %v1648 = vsel %vm1640, 1, 0
      %v1649 = vsel %vm1641, 1, 0
      %v1650 = vsel %vm1642, 1, 0
      %v1651 = vsel %vm1643, 1, 0
      %v1652 = vsel %vm1644, 1, 0
      %v1653 = vsel %vm1645, 1, 0
      %v1654 = vsel %vm1646, 1, 0
      %v1655 = vsel %vm1647, 1, 0
      %v1656 = vcvt.s32.f32 %v1648
      %v1657 = vcvt.s32.f32 %v1649
      %v1658 = vcvt.s32.f32 %v1650
      %v1659 = vcvt.s32.f32 %v1651
      %v1660 = vcvt.s32.f32 %v1652
      %v1661 = vcvt.s32.f32 %v1653
      %v1662 = vcvt.s32.f32 %v1654
      %v1663 = vcvt.s32.f32 %v1655
      %v1664 = vld [vmem:[%s15] sm:$0xff]
      %v1665 = vld [vmem:[%s15 + $0x8] sm:$0xff]
      %v1666 = vld [vmem:[%s15 + $0x10] sm:$0xff]
      %v1667 = vld [vmem:[%s15 + $0x18] sm:$0xff]
      %v1668 = vld [vmem:[%s15 + $0x20] sm:$0xff]
      %v1669 = vld [vmem:[%s15 + $0x28] sm:$0xff]
      %v1670 = vld [vmem:[%s15 + $0x30] sm:$0xff]
      %v1671 = vld [vmem:[%s15 + $0x38] sm:$0xff]
      %1672 = vmatprep.subr.mxu0 0.0
      %1673 = vmatpush1.msra.mxu0 %v1548
      %1674 = vmatprep.subr.mxu0 0.0
      %1675 = vmatpush1.msra.mxu0 %v1553
      %1676 = vmatprep.subr.mxu0 0.0
      %1677 = vmatpush1.msra.mxu0 %v1558
      %1678 = vmatprep.subr.mxu0 0.0
      %1679 = vmatpush1.msra.mxu0 %v1563
      %1680 = vmatprep.subr.mxu0 0.0
      %1681 = vmatpush1.msra.mxu0 %v1568
      %1682 = vmatprep.subr.mxu0 0.0
      %1683 = vmatpush1.msra.mxu0 %v1573
      %1684 = vmatprep.subr.mxu0 0.0
      %1685 = vmatpush1.msra.mxu0 %v1578
      %1686 = vmatprep.subr.mxu0 0.0
      %1687 = vmatpush1.msra.mxu0 %v1583
      %1688 = vmatprep.subr.mxu0 0.0
      %1689 = vmatpush1.msra.mxu0 %v1588
      %1690 = vmatprep.subr.mxu0 0.0
      %1691 = vmatpush1.msra.mxu0 %v1593
      %1692 = vmatprep.subr.mxu0 0.0
      %1693 = vmatpush1.msra.mxu0 %v1598
      %1694 = vmatprep.subr.mxu0 0.0
      %1695 = vmatpush1.msra.mxu0 %v1603
      %1696 = vmatprep.subr.mxu0 0.0
      %1697 = vmatpush1.msra.mxu0 %v1608
      %1698 = vmatprep.subr.mxu0 0.0
      %1699 = vmatpush1.msra.mxu0 %v1613
      %1700 = vmatprep.subr.mxu0 0.0
      %1701 = vmatpush1.msra.mxu0 %v1618
      %1702 = vmatprep.subr.mxu0 0.0
      %1703 = vmatpush1.msra.mxu0 %v1623
      %1704 = vmatprep.subr.mxu0 0.0
      %1705 = vmatpush1.msra.mxu0 0.0
      %1706 = vmatprep.subr.mxu0 0.0
      %1707 = vmatpush1.msra.mxu0 0.0
      %1708 = vmatprep.subr.mxu0 0.0
      %1709 = vmatpush1.msra.mxu0 0.0
      %1710 = vmatprep.subr.mxu0 0.0
      %1711 = vmatpush1.msra.mxu0 0.0
      %1712 = vmatprep.subr.mxu0 0.0
      %1713 = vmatpush1.msra.mxu0 0.0
      %1714 = vmatprep.subr.mxu0 0.0
      %1715 = vmatpush1.msra.mxu0 0.0
      %1716 = vmatprep.subr.mxu0 0.0
      %1717 = vmatpush1.msra.mxu0 0.0
      %1718 = vmatprep.subr.mxu0 0.0
      %1719 = vmatpush1.msra.mxu0 0.0
      %1720 = vmatprep.subr.mxu0 0.0
      %1721 = vmatpush1.msra.mxu0 0.0
      %1722 = vmatprep.subr.mxu0 0.0
      %1723 = vmatpush1.msra.mxu0 0.0
      %1724 = vmatprep.subr.mxu0 0.0
      %1725 = vmatpush1.msra.mxu0 0.0
      %1726 = vmatprep.subr.mxu0 0.0
      %1727 = vmatpush1.msra.mxu0 0.0
      %1728 = vmatprep.subr.mxu0 0.0
      %1729 = vmatpush1.msra.mxu0 0.0
      %1730 = vmatprep.subr.mxu0 0.0
      %1731 = vmatpush1.msra.mxu0 0.0
      %1732 = vmatprep.subr.mxu0 0.0
      %1733 = vmatpush1.msra.mxu0 0.0
      %1734 = vmatprep.subr.mxu0 0.0
      %1735 = vmatpush1.msra.mxu0 0.0
      %1736 = vmatprep.mubr.f32.mxu0 0.0
      %1737 = vmatmul.mubr.f32.gmra.mrb[0].mxu0 %v1656
      %v1738 = vpop.f32.mrb[0].mxu0
      %v1739 = vadd.f32 0.0, %v1738
      %v1740 = vpop.f32.mrb[0].mxu0
      %1741 = vmatprep.mubr.f32.mxu0 0.0
      %1742 = vmatmul.mubr.f32.gmra.mrb[0].mxu0 %v1657
      %v1743 = vpop.f32.mrb[0].mxu0
      %v1744 = vadd.f32 0.0, %v1743
      %v1745 = vpop.f32.mrb[0].mxu0
      %1746 = vmatprep.mubr.f32.mxu0 0.0
      %1747 = vmatmul.mubr.f32.gmra.mrb[0].mxu0 %v1658
      %v1748 = vpop.f32.mrb[0].mxu0
      %v1749 = vadd.f32 0.0, %v1748
      %v1750 = vpop.f32.mrb[0].mxu0
      %1751 = vmatprep.mubr.f32.mxu0 0.0
      %1752 = vmatmul.mubr.f32.gmra.mrb[0].mxu0 %v1659
      %v1753 = vpop.f32.mrb[0].mxu0
      %v1754 = vadd.f32 0.0, %v1753
      %v1755 = vpop.f32.mrb[0].mxu0
      %1756 = vmatprep.mubr.f32.mxu0 0.0
      %1757 = vmatmul.mubr.f32.gmra.mrb[0].mxu0 %v1660
      %v1758 = vpop.f32.mrb[0].mxu0
      %v1759 = vadd.f32 0.0, %v1758
      %v1760 = vpop.f32.mrb[0].mxu0
      %1761 = vmatprep.mubr.f32.mxu0 0.0
      %1762 = vmatmul.mubr.f32.gmra.mrb[0].mxu0 %v1661
      %v1763 = vpop.f32.mrb[0].mxu0
      %v1764 = vadd.f32 0.0, %v1763
      %v1765 = vpop.f32.mrb[0].mxu0
      %1766 = vmatprep.mubr.f32.mxu0 0.0
      %1767 = vmatmul.mubr.f32.gmra.mrb[0].mxu0 %v1662
      %v1768 = vpop.f32.mrb[0].mxu0
      %v1769 = vadd.f32 0.0, %v1768
      %v1770 = vpop.f32.mrb[0].mxu0
      %1771 = vmatprep.mubr.f32.mxu0 0.0
      %1772 = vmatmul.mubr.f32.gmra.mrb[0].mxu0 %v1663
      %v1773 = vpop.f32.mrb[0].mxu0
      %v1774 = vadd.f32 0.0, %v1773
      %v1775 = vpop.f32.mrb[0].mxu0
      %1776 = vdwg.mxu0
      %v1777 = vadd.f32 %v1664, %v1739
      %v1778 = vadd.f32 %v1665, %v1744
      %v1779 = vadd.f32 %v1666, %v1749
      %v1780 = vadd.f32 %v1667, %v1754
      %v1781 = vadd.f32 %v1668, %v1759
      %v1782 = vadd.f32 %v1669, %v1764
      %v1783 = vadd.f32 %v1670, %v1769
      %v1784 = vadd.f32 %v1671, %v1774
      %vm1785 = vcmask 261120
      %1786 = vst.msk [vmem:[%s15] sm:$0xff] %vm1785, %v1777
      %1787 = vst.msk [vmem:[%s15 + $0x8] sm:$0xff] %vm1785, %v1778
      %1788 = vst.msk [vmem:[%s15 + $0x10] sm:$0xff] %vm1785, %v1779
      %1789 = vst.msk [vmem:[%s15 + $0x18] sm:$0xff] %vm1785, %v1780
      %1790 = vst.msk [vmem:[%s15 + $0x20] sm:$0xff] %vm1785, %v1781
      %1791 = vst.msk [vmem:[%s15 + $0x28] sm:$0xff] %vm1785, %v1782
      %1792 = vst.msk [vmem:[%s15 + $0x30] sm:$0xff] %vm1785, %v1783
      %1793 = vst.msk [vmem:[%s15 + $0x38] sm:$0xff] %vm1785, %v1784
      %p1794 = scmp.eq.s32.totalorder %s26, 1
      // Predicated region
      $region85: #{patch_gnp_forward.5} parent=79 // pred_check
        %p1795 = pneg %p1794
      $region86: #{patch_gnp_forward.5} parent=79 // pred_check_branch
        %1797 = sbr.rel (%p1795) target = $region88
      $region87: #{patch_gnp_forward.5} parent=79 // pred_region
        %v1798 = vld [vmem:[%s15] sm:$0xff]
        %v1799 = vld [vmem:[%s15 + $0x8] sm:$0xff]
        %v1800 = vld [vmem:[%s15 + $0x10] sm:$0xff]
        %v1801 = vld [vmem:[%s15 + $0x18] sm:$0xff]
        %v1802 = vld [vmem:[%s15 + $0x20] sm:$0xff]
        %v1803 = vld [vmem:[%s15 + $0x28] sm:$0xff]
        %v1804 = vld [vmem:[%s15 + $0x30] sm:$0xff]
        %v1805 = vld [vmem:[%s15 + $0x38] sm:$0xff]
        %v1806 = vld [vmem:[%s10] sm:$0xff]
        %v1807 = vld [vmem:[%s10 + $0x8] sm:$0xff]
        %v1808 = vld [vmem:[%s10 + $0x10] sm:$0xff]
        %v1809 = vld [vmem:[%s10 + $0x18] sm:$0xff]
        %v1810 = vld [vmem:[%s10 + $0x20] sm:$0xff]
        %v1811 = vld [vmem:[%s10 + $0x28] sm:$0xff]
        %v1812 = vld [vmem:[%s10 + $0x30] sm:$0xff]
        %v1813 = vld [vmem:[%s10 + $0x38] sm:$0xff]
        %1815 = vset.pattern.permute.xlu0 0
        %1816 = vperm.xlu0 %1815, %v1806
        %v1817 = vpop.permute.xlu0 %1816
        %1820 = vset.pattern.permute.xlu0 0
        %1821 = vperm.xlu0 %1820, %v1807
        %v1822 = vpop.permute.xlu0 %1821
        %1825 = vset.pattern.permute.xlu0 0
        %1826 = vperm.xlu0 %1825, %v1808
        %v1827 = vpop.permute.xlu0 %1826
        %1830 = vset.pattern.permute.xlu0 0
        %1831 = vperm.xlu0 %1830, %v1809
        %v1832 = vpop.permute.xlu0 %1831
        %1835 = vset.pattern.permute.xlu0 0
        %1836 = vperm.xlu0 %1835, %v1810
        %v1837 = vpop.permute.xlu0 %1836
        %1840 = vset.pattern.permute.xlu0 0
        %1841 = vperm.xlu0 %1840, %v1811
        %v1842 = vpop.permute.xlu0 %1841
        %1845 = vset.pattern.permute.xlu0 0
        %1846 = vperm.xlu0 %1845, %v1812
        %v1847 = vpop.permute.xlu0 %1846
        %1850 = vset.pattern.permute.xlu0 0
        %1851 = vperm.xlu0 %1850, %v1813
        %v1852 = vpop.permute.xlu0 %1851
        %v1854 = vmul.f32 %v1798, %v1817
        %v1855 = vmul.f32 %v1799, %v1822
        %v1856 = vmul.f32 %v1800, %v1827
        %v1857 = vmul.f32 %v1801, %v1832
        %v1858 = vmul.f32 %v1802, %v1837
        %v1859 = vmul.f32 %v1803, %v1842
        %v1860 = vmul.f32 %v1804, %v1847
        %v1861 = vmul.f32 %v1805, %v1852
        %v1862 = vld [vmem:[%s13] sm:$0xff]
        %v1863 = vld [vmem:[%s13 + $0x8] sm:$0xff]
        %v1864 = vld [vmem:[%s13 + $0x10] sm:$0xff]
        %v1865 = vld [vmem:[%s13 + $0x18] sm:$0xff]
        %v1866 = vld [vmem:[%s14] sm:$0x1]
        %v1868 = vlaneseq
        %v1869 = vshrl.u32 %v1868, 7
        %v1870 = vsub.s32 0, %v1869
        %v1871 = vrot.slane %v1866, %v1870
        %v1874 = vsel %vm1785, %v1854, 0
        %v1877 = vsel %vm1785, %v1855, 0
        %v1880 = vsel %vm1785, %v1856, 0
        %v1883 = vsel %vm1785, %v1857, 0
        %v1886 = vsel %vm1785, %v1858, 0
        %v1889 = vsel %vm1785, %v1859, 0
        %v1892 = vsel %vm1785, %v1860, 0
        %v1895 = vsel %vm1785, %v1861, 0
        %1897 = vmatprep.subr.mxu0 0.0
        %1898 = vmatpush1.msra.mxu0 %v1862
        %1899 = vmatprep.subr.mxu0 0.0
        %1900 = vmatpush1.msra.mxu0 %v1863
        %1901 = vmatprep.subr.mxu0 0.0
        %1902 = vmatpush1.msra.mxu0 %v1864
        %1903 = vmatprep.subr.mxu0 0.0
        %1904 = vmatpush1.msra.mxu0 %v1865
        %1905 = vmatprep.subr.mxu0 0.0
        %1906 = vmatpush1.msra.mxu0 0.0
        %1907 = vmatprep.subr.mxu0 0.0
        %1908 = vmatpush1.msra.mxu0 0.0
        %1909 = vmatprep.subr.mxu0 0.0
        %1910 = vmatpush1.msra.mxu0 0.0
        %1911 = vmatprep.subr.mxu0 0.0
        %1912 = vmatpush1.msra.mxu0 0.0
        %1913 = vmatprep.subr.mxu0 0.0
        %1914 = vmatpush1.msra.mxu0 0.0
        %1915 = vmatprep.subr.mxu0 0.0
        %1916 = vmatpush1.msra.mxu0 0.0
        %1917 = vmatprep.subr.mxu0 0.0
        %1918 = vmatpush1.msra.mxu0 0.0
        %1919 = vmatprep.subr.mxu0 0.0
        %1920 = vmatpush1.msra.mxu0 0.0
        %1921 = vmatprep.subr.mxu0 0.0
        %1922 = vmatpush1.msra.mxu0 0.0
        %1923 = vmatprep.subr.mxu0 0.0
        %1924 = vmatpush1.msra.mxu0 0.0
        %1925 = vmatprep.subr.mxu0 0.0
        %1926 = vmatpush1.msra.mxu0 0.0
        %1927 = vmatprep.subr.mxu0 0.0
        %1928 = vmatpush1.msra.mxu0 0.0
        %1929 = vmatprep.subr.mxu0 0.0
        %1930 = vmatpush1.msra.mxu0 0.0
        %1931 = vmatprep.subr.mxu0 0.0
        %1932 = vmatpush1.msra.mxu0 0.0
        %1933 = vmatprep.subr.mxu0 0.0
        %1934 = vmatpush1.msra.mxu0 0.0
        %1935 = vmatprep.subr.mxu0 0.0
        %1936 = vmatpush1.msra.mxu0 0.0
        %1937 = vmatprep.subr.mxu0 0.0
        %1938 = vmatpush1.msra.mxu0 0.0
        %1939 = vmatprep.subr.mxu0 0.0
        %1940 = vmatpush1.msra.mxu0 0.0
        %1941 = vmatprep.subr.mxu0 0.0
        %1942 = vmatpush1.msra.mxu0 0.0
        %1943 = vmatprep.subr.mxu0 0.0
        %1944 = vmatpush1.msra.mxu0 0.0
        %1945 = vmatprep.subr.mxu0 0.0
        %1946 = vmatpush1.msra.mxu0 0.0
        %1947 = vmatprep.subr.mxu0 0.0
        %1948 = vmatpush1.msra.mxu0 0.0
        %1949 = vmatprep.subr.mxu0 0.0
        %1950 = vmatpush1.msra.mxu0 0.0
        %1951 = vmatprep.subr.mxu0 0.0
        %1952 = vmatpush1.msra.mxu0 0.0
        %1953 = vmatprep.subr.mxu0 0.0
        %1954 = vmatpush1.msra.mxu0 0.0
        %1955 = vmatprep.subr.mxu0 0.0
        %1956 = vmatpush1.msra.mxu0 0.0
        %1957 = vmatprep.subr.mxu0 0.0
        %1958 = vmatpush1.msra.mxu0 0.0
        %1959 = vmatprep.subr.mxu0 0.0
        %1960 = vmatpush1.msra.mxu0 0.0
        %1961 = vmatprep.mubr.f32.mxu0 0.0
        %1962 = vmatmul.mubr.f32.gmra.mrb[0].mxu0 %v1874
        %v1963 = vpop.f32.mrb[0].mxu0
        %v1964 = vadd.f32 %v1871, %v1963
        %v1965 = vpop.f32.mrb[0].mxu0
        %1966 = vmatprep.mubr.f32.mxu0 0.0
        %1967 = vmatmul.mubr.f32.gmra.mrb[0].mxu0 %v1877
        %v1968 = vpop.f32.mrb[0].mxu0
        %v1969 = vadd.f32 %v1871, %v1968
        %v1970 = vpop.f32.mrb[0].mxu0
        %1971 = vmatprep.mubr.f32.mxu0 0.0
        %1972 = vmatmul.mubr.f32.gmra.mrb[0].mxu0 %v1880
        %v1973 = vpop.f32.mrb[0].mxu0
        %v1974 = vadd.f32 %v1871, %v1973
        %v1975 = vpop.f32.mrb[0].mxu0
        %1976 = vmatprep.mubr.f32.mxu0 0.0
        %1977 = vmatmul.mubr.f32.gmra.mrb[0].mxu0 %v1883
        %v1978 = vpop.f32.mrb[0].mxu0
        %v1979 = vadd.f32 %v1871, %v1978
        %v1980 = vpop.f32.mrb[0].mxu0
        %1981 = vmatprep.mubr.f32.mxu0 0.0
        %1982 = vmatmul.mubr.f32.gmra.mrb[0].mxu0 %v1886
        %v1983 = vpop.f32.mrb[0].mxu0
        %v1984 = vadd.f32 %v1871, %v1983
        %v1985 = vpop.f32.mrb[0].mxu0
        %1986 = vmatprep.mubr.f32.mxu0 0.0
        %1987 = vmatmul.mubr.f32.gmra.mrb[0].mxu0 %v1889
        %v1988 = vpop.f32.mrb[0].mxu0
        %v1989 = vadd.f32 %v1871, %v1988
        %v1990 = vpop.f32.mrb[0].mxu0
        %1991 = vmatprep.mubr.f32.mxu0 0.0
        %1992 = vmatmul.mubr.f32.gmra.mrb[0].mxu0 %v1892
        %v1993 = vpop.f32.mrb[0].mxu0
        %v1994 = vadd.f32 %v1871, %v1993
        %v1995 = vpop.f32.mrb[0].mxu0
        %1996 = vmatprep.mubr.f32.mxu0 0.0
        %1997 = vmatmul.mubr.f32.gmra.mrb[0].mxu0 %v1895
        %v1998 = vpop.f32.mrb[0].mxu0
        %v1999 = vadd.f32 %v1871, %v1998
        %v2000 = vpop.f32.mrb[0].mxu0
        %2001 = vdwg.mxu0
        %v2002 = vld [vmem:[%s11] sm:$0xff]
        %v2003 = vld [vmem:[%s11 + $0x8] sm:$0xff]
        %v2004 = vld [vmem:[%s12] sm:$0x1]
        %v2006 = vlaneseq
        %v2007 = vshrl.u32 %v2006, 7
        %v2008 = vsub.s32 0, %v2007
        %v2009 = vrot.slane %v2004, %v2008
        %v2012 = vsel %vm1255, %v531, 0
        %v2015 = vsel %vm1255, %v532, 0
        %v2018 = vsel %vm1255, %v533, 0
        %v2021 = vsel %vm1255, %v534, 0
        %v2024 = vsel %vm1255, %v535, 0
        %v2027 = vsel %vm1255, %v536, 0
        %v2030 = vsel %vm1255, %v537, 0
        %v2033 = vsel %vm1255, %v538, 0
        %2035 = vmatprep.subr.mxu0 0.0
        %2036 = vmatpush1.msra.mxu0 %v2002
        %2037 = vmatprep.subr.mxu0 0.0
        %2038 = vmatpush1.msra.mxu0 %v2003
        %2039 = vmatprep.subr.mxu0 0.0
        %2040 = vmatpush1.msra.mxu0 0.0
        %2041 = vmatprep.subr.mxu0 0.0
        %2042 = vmatpush1.msra.mxu0 0.0
        %2043 = vmatprep.subr.mxu0 0.0
        %2044 = vmatpush1.msra.mxu0 0.0
        %2045 = vmatprep.subr.mxu0 0.0
        %2046 = vmatpush1.msra.mxu0 0.0
        %2047 = vmatprep.subr.mxu0 0.0
        %2048 = vmatpush1.msra.mxu0 0.0
        %2049 = vmatprep.subr.mxu0 0.0
        %2050 = vmatpush1.msra.mxu0 0.0
        %2051 = vmatprep.subr.mxu0 0.0
        %2052 = vmatpush1.msra.mxu0 0.0
        %2053 = vmatprep.subr.mxu0 0.0
        %2054 = vmatpush1.msra.mxu0 0.0
        %2055 = vmatprep.subr.mxu0 0.0
        %2056 = vmatpush1.msra.mxu0 0.0
        %2057 = vmatprep.subr.mxu0 0.0
        %2058 = vmatpush1.msra.mxu0 0.0
        %2059 = vmatprep.subr.mxu0 0.0
        %2060 = vmatpush1.msra.mxu0 0.0
        %2061 = vmatprep.subr.mxu0 0.0
        %2062 = vmatpush1.msra.mxu0 0.0
        %2063 = vmatprep.subr.mxu0 0.0
        %2064 = vmatpush1.msra.mxu0 0.0
        %2065 = vmatprep.subr.mxu0 0.0
        %2066 = vmatpush1.msra.mxu0 0.0
        %2067 = vmatprep.subr.mxu0 0.0
        %2068 = vmatpush1.msra.mxu0 0.0
        %2069 = vmatprep.subr.mxu0 0.0
        %2070 = vmatpush1.msra.mxu0 0.0
        %2071 = vmatprep.subr.mxu0 0.0
        %2072 = vmatpush1.msra.mxu0 0.0
        %2073 = vmatprep.subr.mxu0 0.0
        %2074 = vmatpush1.msra.mxu0 0.0
        %2075 = vmatprep.subr.mxu0 0.0
        %2076 = vmatpush1.msra.mxu0 0.0
        %2077 = vmatprep.subr.mxu0 0.0
        %2078 = vmatpush1.msra.mxu0 0.0
        %2079 = vmatprep.subr.mxu0 0.0
        %2080 = vmatpush1.msra.mxu0 0.0
        %2081 = vmatprep.subr.mxu0 0.0
        %2082 = vmatpush1.msra.mxu0 0.0
        %2083 = vmatprep.subr.mxu0 0.0
        %2084 = vmatpush1.msra.mxu0 0.0
        %2085 = vmatprep.subr.mxu0 0.0
        %2086 = vmatpush1.msra.mxu0 0.0
        %2087 = vmatprep.subr.mxu0 0.0
        %2088 = vmatpush1.msra.mxu0 0.0
        %2089 = vmatprep.subr.mxu0 0.0
        %2090 = vmatpush1.msra.mxu0 0.0
        %2091 = vmatprep.subr.mxu0 0.0
        %2092 = vmatpush1.msra.mxu0 0.0
        %2093 = vmatprep.subr.mxu0 0.0
        %2094 = vmatpush1.msra.mxu0 0.0
        %2095 = vmatprep.subr.mxu0 0.0
        %2096 = vmatpush1.msra.mxu0 0.0
        %2097 = vmatprep.subr.mxu0 0.0
        %2098 = vmatpush1.msra.mxu0 0.0
        %2099 = vmatprep.mubr.f32.mxu0 0.0
        %2100 = vmatmul.mubr.f32.gmra.mrb[0].mxu0 %v2012
        %v2101 = vpop.f32.mrb[0].mxu0
        %v2102 = vadd.f32 %v2009, %v2101
        %v2103 = vpop.f32.mrb[0].mxu0
        %2104 = vmatprep.mubr.f32.mxu0 0.0
        %2105 = vmatmul.mubr.f32.gmra.mrb[0].mxu0 %v2015
        %v2106 = vpop.f32.mrb[0].mxu0
        %v2107 = vadd.f32 %v2009, %v2106
        %v2108 = vpop.f32.mrb[0].mxu0
        %2109 = vmatprep.mubr.f32.mxu0 0.0
        %2110 = vmatmul.mubr.f32.gmra.mrb[0].mxu0 %v2018
        %v2111 = vpop.f32.mrb[0].mxu0
        %v2112 = vadd.f32 %v2009, %v2111
        %v2113 = vpop.f32.mrb[0].mxu0
        %2114 = vmatprep.mubr.f32.mxu0 0.0
        %2115 = vmatmul.mubr.f32.gmra.mrb[0].mxu0 %v2021
        %v2116 = vpop.f32.mrb[0].mxu0
        %v2117 = vadd.f32 %v2009, %v2116
        %v2118 = vpop.f32.mrb[0].mxu0
        %2119 = vmatprep.mubr.f32.mxu0 0.0
        %2120 = vmatmul.mubr.f32.gmra.mrb[0].mxu0 %v2024
        %v2121 = vpop.f32.mrb[0].mxu0
        %v2122 = vadd.f32 %v2009, %v2121
        %v2123 = vpop.f32.mrb[0].mxu0
        %2124 = vmatprep.mubr.f32.mxu0 0.0
        %2125 = vmatmul.mubr.f32.gmra.mrb[0].mxu0 %v2027
        %v2126 = vpop.f32.mrb[0].mxu0
        %v2127 = vadd.f32 %v2009, %v2126
        %v2128 = vpop.f32.mrb[0].mxu0
        %2129 = vmatprep.mubr.f32.mxu0 0.0
        %2130 = vmatmul.mubr.f32.gmra.mrb[0].mxu0 %v2030
        %v2131 = vpop.f32.mrb[0].mxu0
        %v2132 = vadd.f32 %v2009, %v2131
        %v2133 = vpop.f32.mrb[0].mxu0
        %2134 = vmatprep.mubr.f32.mxu0 0.0
        %2135 = vmatmul.mubr.f32.gmra.mrb[0].mxu0 %v2033
        %v2136 = vpop.f32.mrb[0].mxu0
        %v2137 = vadd.f32 %v2009, %v2136
        %v2138 = vpop.f32.mrb[0].mxu0
        %2139 = vdwg.mxu0
        %v2140 = vadd.f32 %v2102, %v1964
        %v2141 = vadd.f32 %v2107, %v1969
        %v2142 = vadd.f32 %v2112, %v1974
        %v2143 = vadd.f32 %v2117, %v1979
        %v2144 = vadd.f32 %v2122, %v1984
        %v2145 = vadd.f32 %v2127, %v1989
        %v2146 = vadd.f32 %v2132, %v1994
        %v2147 = vadd.f32 %v2137, %v1999
        %v2148 = vmax.f32 %v2140, 0.0
        %v2149 = vmax.f32 %v2141, 0.0
        %v2150 = vmax.f32 %v2142, 0.0
        %v2151 = vmax.f32 %v2143, 0.0
        %v2152 = vmax.f32 %v2144, 0.0
        %v2153 = vmax.f32 %v2145, 0.0
        %v2154 = vmax.f32 %v2146, 0.0
        %v2155 = vmax.f32 %v2147, 0.0
        %2156 = vst.msk [vmem:[%s15] sm:$0xff] %vm1785, %v2148
        %2157 = vst.msk [vmem:[%s15 + $0x8] sm:$0xff] %vm1785, %v2149
        %2158 = vst.msk [vmem:[%s15 + $0x10] sm:$0xff] %vm1785, %v2150
        %2159 = vst.msk [vmem:[%s15 + $0x18] sm:$0xff] %vm1785, %v2151
        %2160 = vst.msk [vmem:[%s15 + $0x20] sm:$0xff] %vm1785, %v2152
        %2161 = vst.msk [vmem:[%s15 + $0x28] sm:$0xff] %vm1785, %v2153
        %2162 = vst.msk [vmem:[%s15 + $0x30] sm:$0xff] %vm1785, %v2154
        %2163 = vst.msk [vmem:[%s15 + $0x38] sm:$0xff] %vm1785, %v2155
      $region88: #{patch_gnp_forward.5} parent=79 // pred_fallthru
        _
      // Predicated region
      $region89: #{patch_gnp_forward.5} parent=79 // pred_check
        %p2164 = pneg %p369
      $region90: #{patch_gnp_forward.5} parent=79 // pred_check_branch
        %2166 = sbr.rel (%p2164) target = $region92
      $region91: #{patch_gnp_forward.5} parent=79 // pred_region
        _
      $region92: #{patch_gnp_forward.5} parent=79 // pred_fallthru
        _
      // Predicated region
      $region93: #{patch_gnp_forward.5} parent=79 // pred_check
        %p2167 = pneg %p369
      $region94: #{patch_gnp_forward.5} parent=79 // pred_check_branch
        %2169 = sbr.rel (%p2167) target = $region96
      $region95: #{patch_gnp_forward.5} parent=79 // pred_region
        _
      $region96: #{patch_gnp_forward.5} parent=79 // pred_fallthru
        _
    $region80: #{patch_gnp_forward.5} parent=5 // pred_fallthru
      _
    %p2170 = scmp.le.s32.totalorder 2, %s21
    // Predicated region
    $region97: #{patch_gnp_forward.5} parent=5 // pred_check
      %p2171 = pneg %p2170
    $region98: #{patch_gnp_forward.5} parent=5 // pred_check_branch
      %2173 = sbr.rel (%p2171) target = $region100
    $region99: #{patch_gnp_forward.5} parent=5 // pred_region
      %s2174 = ssub.s32 %s21, 2
    $region100: #{patch_gnp_forward.5} parent=5 // pred_fallthru
      _
  $region6: #{patch_gnp_forward.5} parent=0 // loop_footer
    %s25 = sadd.s32 1, %s21
  $region7: #{patch_gnp_forward.5} parent=0 // loop_footer_branch
    %20 = sbr.rel target = $region3
  $region8: #{patch_gnp_forward.5} parent=0 // loop_exit
    _

// kernel: patch_gnp_forward.6
$region0: #{patch_gnp_forward.6}
  #allocation0 [shape = 'u32[]', space=smem, size = 0x4, offset = 0x4, fixed_abs, tag = 'smem constant byte address 0x4 - core index']
  #allocation1 [shape = 'u32[144,128]{1,0:T(1,128)}', space=vmem, size = 0x12000, scoped, tag = 'internal scratch']
  %s0 = inlined_call_operand.vmem [shape: s32[256,1], index: 0, kind: input, shape index: {}]
  %s1 = inlined_call_operand.vmem [shape: s32[1,256], index: 1, kind: input, shape index: {}]
  %s2 = inlined_call_operand.vmem [shape: f32[256,4], index: 2, kind: input, shape index: {}]
  %s3 = inlined_call_operand.vmem [shape: f32[64,32], index: 3, kind: input, shape index: {}]
  %s4 = inlined_call_operand.vmem [shape: f32[4,128], index: 4, kind: input, shape index: {}]
  %s5 = inlined_call_operand.vmem [shape: f32[1,128], index: 5, kind: input, shape index: {}]
  %s6 = inlined_call_operand.vmem [shape: f32[128,256], index: 6, kind: input, shape index: {}]
  %s7 = inlined_call_operand.vmem [shape: f32[1,256], index: 7, kind: input, shape index: {}]
  %s8 = inlined_call_operand.vmem [shape: f32[32,256], index: 8, kind: input, shape index: {}]
  %s9 = inlined_call_operand.vmem [shape: f32[256,32], index: 9, kind: input, shape index: {}]
  %s10 = inlined_call_operand.vmem [shape: f32[64,1], index: 10, kind: input, shape index: {}]
  %s11 = inlined_call_operand.vmem [shape: f32[32,32], index: 11, kind: input, shape index: {}]
  %s12 = inlined_call_operand.vmem [shape: f32[1,32], index: 12, kind: input, shape index: {}]
  %s13 = inlined_call_operand.vmem [shape: f32[64,32], index: 13, kind: output, shape index: {}]
  %s14 = sld [smem:[#allocation0]]
  $region93: #{patch_gnp_forward.6} parent=0
    _
  %s16 = ssub.s32 1, %s14
  %s17 = scalar_select 0, %s16, %s14
  loop: start=0, step=1, limit=4
  $region2: #{patch_gnp_forward.6} parent=0 // loop_pre_header
    _
  $region3: #{patch_gnp_forward.6} parent=0 // loop_header
    %s19 = sphi 0, %s23
    %p20 = scmp.ge.s32.totalorder %s19, 4
    %s29 = sphi 0, %s31
    %s32 = sphi 0, %s29
    %s33 = sphi 0, %s32
    %s49 = sphi 0, %s33
    %s55 = sphi 0, %s57
    %s58 = sphi 0, %s55
    %s59 = sphi 0, %s58
    %s75 = sphi 0, %s59
    %s81 = sphi 0, %s83
    %s84 = sphi 0, %s81
    %s85 = sphi 0, %s84
    %s101 = sphi 0, %s85
    %s105 = sphi 0, %s105
    %s107 = sphi 0, %s105
    %s108 = sphi 0, %s107
    %s122 = sphi 0, %s108
    %s126 = sphi 0, %s126
    %s128 = sphi 0, %s126
    %s129 = sphi 0, %s128
    %s143 = sphi 0, %s129
    %s147 = sphi 0, %s147
    %s149 = sphi 0, %s147
    %s150 = sphi 0, %s149
    %s164 = sphi 0, %s150
    %s168 = sphi 0, %s168
    %s170 = sphi 0, %s168
    %s171 = sphi 0, %s170
    %s185 = sphi 0, %s171
    %s189 = sphi 0, %s189
    %s191 = sphi 0, %s189
    %s192 = sphi 0, %s191
    %s206 = sphi 0, %s192
    %s210 = sphi 0, %s210
    %s212 = sphi 0, %s210
    %s213 = sphi 0, %s212
    %s227 = sphi 0, %s213
    %s231 = sphi 0, %s231
    %s233 = sphi 0, %s231
    %s234 = sphi 0, %s233
    %s248 = sphi 0, %s234
    %s252 = sphi 0, %s252
    %s254 = sphi 0, %s252
    %s255 = sphi 0, %s254
    %s269 = sphi 0, %s255
    %s273 = sphi 0, %s273
    %s275 = sphi 0, %s273
    %s276 = sphi 0, %s275
    %s290 = sphi 0, %s276
    %s294 = sphi 0, %s294
    %s296 = sphi 0, %s294
    %s297 = sphi 0, %s296
    %s311 = sphi 0, %s297
    %s315 = sphi 0, %s315
    %s317 = sphi 0, %s315
    %s318 = sphi 0, %s317
    %s332 = sphi 0, %s318
  $region4: #{patch_gnp_forward.6} parent=0 // loop_header_branch
    %22 = sbr.rel (%p20) target = $region8
  $region5: #{patch_gnp_forward.6} parent=0 // loop_body
    %s24 = ssub.s32 %s19, 1
    %s25 = ssub.s32 %s19, 2
    %s26 = sadd.s32 %s19, 1
    %s27 = ssub.s32 %s19, %s26
    %p28 = scmp.eq.s32.totalorder %s27, 0
    %s30 = sadd.s32 %s29, 1
    %s31 = scalar_select %p28, %s29, %s30
    %p34 = pneg %p28
    %p35 = scmp.eq.s32.totalorder %s19, 1
    %p36 = por %p34, %p35
    %p37 = scmp.ne.s32.totalorder %s29, %s32
    %p38 = scmp.eq.s32.totalorder %s19, 0
    %p39 = por %p37, %p38
    %p40 = scmp.ne.s32.totalorder %s29, %s32
    %p41 = scmp.eq.s32.totalorder %s24, 1
    %p42 = por %p40, %p41
    %p43 = scmp.ne.s32.totalorder %s32, %s33
    %p44 = scmp.eq.s32.totalorder %s24, 0
    %p45 = por %p43, %p44
    %p46 = scmp.ne.s32.totalorder %s32, %s33
    %p47 = scmp.eq.s32.totalorder %s25, 1
    %p48 = por %p46, %p47
    %p50 = scmp.ne.s32.totalorder %s33, %s49
    %p51 = scmp.eq.s32.totalorder %s25, 0
    %p52 = por %p50, %p51
    %s53 = ssub.s32 %s19, %s26
    %p54 = scmp.eq.s32.totalorder %s53, 0
    %s56 = sadd.s32 %s55, 1
    %s57 = scalar_select %p54, %s55, %s56
    %p60 = pneg %p54
    %p61 = scmp.eq.s32.totalorder %s19, 1
    %p62 = por %p60, %p61
    %p63 = scmp.ne.s32.totalorder %s55, %s58
    %p64 = scmp.eq.s32.totalorder %s19, 0
    %p65 = por %p63, %p64
    %p66 = scmp.ne.s32.totalorder %s55, %s58
    %p67 = scmp.eq.s32.totalorder %s24, 1
    %p68 = por %p66, %p67
    %p69 = scmp.ne.s32.totalorder %s58, %s59
    %p70 = scmp.eq.s32.totalorder %s24, 0
    %p71 = por %p69, %p70
    %p72 = scmp.ne.s32.totalorder %s58, %s59
    %p73 = scmp.eq.s32.totalorder %s25, 1
    %p74 = por %p72, %p73
    %p76 = scmp.ne.s32.totalorder %s59, %s75
    %p77 = scmp.eq.s32.totalorder %s25, 0
    %p78 = por %p76, %p77
    %s79 = ssub.s32 %s19, %s26
    %p80 = scmp.eq.s32.totalorder %s79, 0
    %s82 = sadd.s32 %s81, 1
    %s83 = scalar_select %p80, %s81, %s82
    %p86 = pneg %p80
    %p87 = scmp.eq.s32.totalorder %s19, 1
    %p88 = por %p86, %p87
    %p89 = scmp.ne.s32.totalorder %s81, %s84
    %p90 = scmp.eq.s32.totalorder %s19, 0
    %p91 = por %p89, %p90
    %p92 = scmp.ne.s32.totalorder %s81, %s84
    %p93 = scmp.eq.s32.totalorder %s24, 1
    %p94 = por %p92, %p93
    %p95 = scmp.ne.s32.totalorder %s84, %s85
    %p96 = scmp.eq.s32.totalorder %s24, 0
    %p97 = por %p95, %p96
    %p98 = scmp.ne.s32.totalorder %s84, %s85
    %p99 = scmp.eq.s32.totalorder %s25, 1
    %p100 = por %p98, %p99
    %p102 = scmp.ne.s32.totalorder %s85, %s101
    %p103 = scmp.eq.s32.totalorder %s25, 0
    %p104 = por %p102, %p103
    %s106 = sadd.s32 %s105, 1
    %p109 = scmp.eq.s32.totalorder %s19, 1
    %p110 = scmp.ne.s32.totalorder %s105, %s107
    %p111 = scmp.eq.s32.totalorder %s19, 0
    %p112 = por %p110, %p111
    %p113 = scmp.ne.s32.totalorder %s105, %s107
    %p114 = scmp.eq.s32.totalorder %s24, 1
    %p115 = por %p113, %p114
    %p116 = scmp.ne.s32.totalorder %s107, %s108
    %p117 = scmp.eq.s32.totalorder %s24, 0
    %p118 = por %p116, %p117
    %p119 = scmp.ne.s32.totalorder %s107, %s108
    %p120 = scmp.eq.s32.totalorder %s25, 1
    %p121 = por %p119, %p120
    %p123 = scmp.ne.s32.totalorder %s108, %s122
    %p124 = scmp.eq.s32.totalorder %s25, 0
    %p125 = por %p123, %p124
    %s127 = sadd.s32 %s126, 1
    %p130 = scmp.eq.s32.totalorder %s19, 1
    %p131 = scmp.ne.s32.totalorder %s126, %s128
    %p132 = scmp.eq.s32.totalorder %s19, 0
    %p133 = por %p131, %p132
    %p134 = scmp.ne.s32.totalorder %s126, %s128
    %p135 = scmp.eq.s32.totalorder %s24, 1
    %p136 = por %p134, %p135
    %p137 = scmp.ne.s32.totalorder %s128, %s129
    %p138 = scmp.eq.s32.totalorder %s24, 0
    %p139 = por %p137, %p138
    %p140 = scmp.ne.s32.totalorder %s128, %s129
    %p141 = scmp.eq.s32.totalorder %s25, 1
    %p142 = por %p140, %p141
    %p144 = scmp.ne.s32.totalorder %s129, %s143
    %p145 = scmp.eq.s32.totalorder %s25, 0
    %p146 = por %p144, %p145
    %s148 = sadd.s32 %s147, 1
    %p151 = scmp.eq.s32.totalorder %s19, 1
    %p152 = scmp.ne.s32.totalorder %s147, %s149
    %p153 = scmp.eq.s32.totalorder %s19, 0
    %p154 = por %p152, %p153
    %p155 = scmp.ne.s32.totalorder %s147, %s149
    %p156 = scmp.eq.s32.totalorder %s24, 1
    %p157 = por %p155, %p156
    %p158 = scmp.ne.s32.totalorder %s149, %s150
    %p159 = scmp.eq.s32.totalorder %s24, 0
    %p160 = por %p158, %p159
    %p161 = scmp.ne.s32.totalorder %s149, %s150
    %p162 = scmp.eq.s32.totalorder %s25, 1
    %p163 = por %p161, %p162
    %p165 = scmp.ne.s32.totalorder %s150, %s164
    %p166 = scmp.eq.s32.totalorder %s25, 0
    %p167 = por %p165, %p166
    %s169 = sadd.s32 %s168, 1
    %p172 = scmp.eq.s32.totalorder %s19, 1
    %p173 = scmp.ne.s32.totalorder %s168, %s170
    %p174 = scmp.eq.s32.totalorder %s19, 0
    %p175 = por %p173, %p174
    %p176 = scmp.ne.s32.totalorder %s168, %s170
    %p177 = scmp.eq.s32.totalorder %s24, 1
    %p178 = por %p176, %p177
    %p179 = scmp.ne.s32.totalorder %s170, %s171
    %p180 = scmp.eq.s32.totalorder %s24, 0
    %p181 = por %p179, %p180
    %p182 = scmp.ne.s32.totalorder %s170, %s171
    %p183 = scmp.eq.s32.totalorder %s25, 1
    %p184 = por %p182, %p183
    %p186 = scmp.ne.s32.totalorder %s171, %s185
    %p187 = scmp.eq.s32.totalorder %s25, 0
    %p188 = por %p186, %p187
    %s190 = sadd.s32 %s189, 1
    %p193 = scmp.eq.s32.totalorder %s19, 1
    %p194 = scmp.ne.s32.totalorder %s189, %s191
    %p195 = scmp.eq.s32.totalorder %s19, 0
    %p196 = por %p194, %p195
    %p197 = scmp.ne.s32.totalorder %s189, %s191
    %p198 = scmp.eq.s32.totalorder %s24, 1
    %p199 = por %p197, %p198
    %p200 = scmp.ne.s32.totalorder %s191, %s192
    %p201 = scmp.eq.s32.totalorder %s24, 0
    %p202 = por %p200, %p201
    %p203 = scmp.ne.s32.totalorder %s191, %s192
    %p204 = scmp.eq.s32.totalorder %s25, 1
    %p205 = por %p203, %p204
    %p207 = scmp.ne.s32.totalorder %s192, %s206
    %p208 = scmp.eq.s32.totalorder %s25, 0
    %p209 = por %p207, %p208
    %s211 = sadd.s32 %s210, 1
    %p214 = scmp.eq.s32.totalorder %s19, 1
    %p215 = scmp.ne.s32.totalorder %s210, %s212
    %p216 = scmp.eq.s32.totalorder %s19, 0
    %p217 = por %p215, %p216
    %p218 = scmp.ne.s32.totalorder %s210, %s212
    %p219 = scmp.eq.s32.totalorder %s24, 1
    %p220 = por %p218, %p219
    %p221 = scmp.ne.s32.totalorder %s212, %s213
    %p222 = scmp.eq.s32.totalorder %s24, 0
    %p223 = por %p221, %p222
    %p224 = scmp.ne.s32.totalorder %s212, %s213
    %p225 = scmp.eq.s32.totalorder %s25, 1
    %p226 = por %p224, %p225
    %p228 = scmp.ne.s32.totalorder %s213, %s227
    %p229 = scmp.eq.s32.totalorder %s25, 0
    %p230 = por %p228, %p229
    %s232 = sadd.s32 %s231, 1
    %p235 = scmp.eq.s32.totalorder %s19, 1
    %p236 = scmp.ne.s32.totalorder %s231, %s233
    %p237 = scmp.eq.s32.totalorder %s19, 0
    %p238 = por %p236, %p237
    %p239 = scmp.ne.s32.totalorder %s231, %s233
    %p240 = scmp.eq.s32.totalorder %s24, 1
    %p241 = por %p239, %p240
    %p242 = scmp.ne.s32.totalorder %s233, %s234
    %p243 = scmp.eq.s32.totalorder %s24, 0
    %p244 = por %p242, %p243
    %p245 = scmp.ne.s32.totalorder %s233, %s234
    %p246 = scmp.eq.s32.totalorder %s25, 1
    %p247 = por %p245, %p246
    %p249 = scmp.ne.s32.totalorder %s234, %s248
    %p250 = scmp.eq.s32.totalorder %s25, 0
    %p251 = por %p249, %p250
    %s253 = sadd.s32 %s252, 1
    %p256 = scmp.eq.s32.totalorder %s19, 1
    %p257 = scmp.ne.s32.totalorder %s252, %s254
    %p258 = scmp.eq.s32.totalorder %s19, 0
    %p259 = por %p257, %p258
    %p260 = scmp.ne.s32.totalorder %s252, %s254
    %p261 = scmp.eq.s32.totalorder %s24, 1
    %p262 = por %p260, %p261
    %p263 = scmp.ne.s32.totalorder %s254, %s255
    %p264 = scmp.eq.s32.totalorder %s24, 0
    %p265 = por %p263, %p264
    %p266 = scmp.ne.s32.totalorder %s254, %s255
    %p267 = scmp.eq.s32.totalorder %s25, 1
    %p268 = por %p266, %p267
    %p270 = scmp.ne.s32.totalorder %s255, %s269
    %p271 = scmp.eq.s32.totalorder %s25, 0
    %p272 = por %p270, %p271
    %s274 = sadd.s32 %s273, 1
    %p277 = scmp.eq.s32.totalorder %s19, 1
    %p278 = scmp.ne.s32.totalorder %s273, %s275
    %p279 = scmp.eq.s32.totalorder %s19, 0
    %p280 = por %p278, %p279
    %p281 = scmp.ne.s32.totalorder %s273, %s275
    %p282 = scmp.eq.s32.totalorder %s24, 1
    %p283 = por %p281, %p282
    %p284 = scmp.ne.s32.totalorder %s275, %s276
    %p285 = scmp.eq.s32.totalorder %s24, 0
    %p286 = por %p284, %p285
    %p287 = scmp.ne.s32.totalorder %s275, %s276
    %p288 = scmp.eq.s32.totalorder %s25, 1
    %p289 = por %p287, %p288
    %p291 = scmp.ne.s32.totalorder %s276, %s290
    %p292 = scmp.eq.s32.totalorder %s25, 0
    %p293 = por %p291, %p292
    %s295 = sadd.s32 %s294, 1
    %p298 = scmp.eq.s32.totalorder %s19, 1
    %p299 = scmp.ne.s32.totalorder %s294, %s296
    %p300 = scmp.eq.s32.totalorder %s19, 0
    %p301 = por %p299, %p300
    %p302 = scmp.ne.s32.totalorder %s294, %s296
    %p303 = scmp.eq.s32.totalorder %s24, 1
    %p304 = por %p302, %p303
    %p305 = scmp.ne.s32.totalorder %s296, %s297
    %p306 = scmp.eq.s32.totalorder %s24, 0
    %p307 = por %p305, %p306
    %p308 = scmp.ne.s32.totalorder %s296, %s297
    %p309 = scmp.eq.s32.totalorder %s25, 1
    %p310 = por %p308, %p309
    %p312 = scmp.ne.s32.totalorder %s297, %s311
    %p313 = scmp.eq.s32.totalorder %s25, 0
    %p314 = por %p312, %p313
    %s316 = sadd.s32 %s315, 1
    %p319 = scmp.eq.s32.totalorder %s19, 1
    %p320 = scmp.ne.s32.totalorder %s315, %s317
    %p321 = scmp.eq.s32.totalorder %s19, 0
    %p322 = por %p320, %p321
    %p323 = scmp.ne.s32.totalorder %s315, %s317
    %p324 = scmp.eq.s32.totalorder %s24, 1
    %p325 = por %p323, %p324
    %p326 = scmp.ne.s32.totalorder %s317, %s318
    %p327 = scmp.eq.s32.totalorder %s24, 0
    %p328 = por %p326, %p327
    %p329 = scmp.ne.s32.totalorder %s317, %s318
    %p330 = scmp.eq.s32.totalorder %s25, 1
    %p331 = por %p329, %p330
    %p333 = scmp.ne.s32.totalorder %s318, %s332
    %p334 = scmp.eq.s32.totalorder %s25, 0
    %p335 = por %p333, %p334
    %p336 = scmp.le.s32.totalorder 1, %s19
    %p337 = scmp.lt.s32.totalorder %s19, 3
    %p338 = pnand %p336, %p337
    %p339 = pneg %p338
    // Predicated region
    $region9: #{patch_gnp_forward.6} parent=5 // pred_check
      _
    $region10: #{patch_gnp_forward.6} parent=5 // pred_check_branch
      %341 = sbr.rel (%p338) target = $region12
    $region11: #{patch_gnp_forward.6} parent=5 // pred_region
      %s342 = ssub.s32 %s19, 1
      // Predicated region
      $region13: #{patch_gnp_forward.6} parent=11 // pred_check
        %p343 = pneg %p118
      $region14: #{patch_gnp_forward.6} parent=11 // pred_check_branch
        %345 = sbr.rel (%p343) target = $region16
      $region15: #{patch_gnp_forward.6} parent=11 // pred_region
        _
      $region16: #{patch_gnp_forward.6} parent=11 // pred_fallthru
        _
      // Predicated region
      $region17: #{patch_gnp_forward.6} parent=11 // pred_check
        %p346 = pneg %p139
      $region18: #{patch_gnp_forward.6} parent=11 // pred_check_branch
        %348 = sbr.rel (%p346) target = $region20
      $region19: #{patch_gnp_forward.6} parent=11 // pred_region
        _
      $region20: #{patch_gnp_forward.6} parent=11 // pred_fallthru
        _
      // Predicated region
      $region21: #{patch_gnp_forward.6} parent=11 // pred_check
        %p349 = pneg %p160
      $region22: #{patch_gnp_forward.6} parent=11 // pred_check_branch
        %351 = sbr.rel (%p349) target = $region24
      $region23: #{patch_gnp_forward.6} parent=11 // pred_region
        _
      $region24: #{patch_gnp_forward.6} parent=11 // pred_fallthru
        _
      // Predicated region
      $region25: #{patch_gnp_forward.6} parent=11 // pred_check
        %p352 = pneg %p181
      $region26: #{patch_gnp_forward.6} parent=11 // pred_check_branch
        %354 = sbr.rel (%p352) target = $region28
      $region27: #{patch_gnp_forward.6} parent=11 // pred_region
        _
      $region28: #{patch_gnp_forward.6} parent=11 // pred_fallthru
        _
      // Predicated region
      $region29: #{patch_gnp_forward.6} parent=11 // pred_check
        %p355 = pneg %p202
      $region30: #{patch_gnp_forward.6} parent=11 // pred_check_branch
        %357 = sbr.rel (%p355) target = $region32
      $region31: #{patch_gnp_forward.6} parent=11 // pred_region
        _
      $region32: #{patch_gnp_forward.6} parent=11 // pred_fallthru
        _
      // Predicated region
      $region33: #{patch_gnp_forward.6} parent=11 // pred_check
        %p358 = pneg %p223
      $region34: #{patch_gnp_forward.6} parent=11 // pred_check_branch
        %360 = sbr.rel (%p358) target = $region36
      $region35: #{patch_gnp_forward.6} parent=11 // pred_region
        _
      $region36: #{patch_gnp_forward.6} parent=11 // pred_fallthru
        _
      // Predicated region
      $region37: #{patch_gnp_forward.6} parent=11 // pred_check
        %p361 = pneg %p244
      $region38: #{patch_gnp_forward.6} parent=11 // pred_check_branch
        %363 = sbr.rel (%p361) target = $region40
      $region39: #{patch_gnp_forward.6} parent=11 // pred_region
        _
      $region40: #{patch_gnp_forward.6} parent=11 // pred_fallthru
        _
      // Predicated region
      $region41: #{patch_gnp_forward.6} parent=11 // pred_check
        %p364 = pneg %p265
      $region42: #{patch_gnp_forward.6} parent=11 // pred_check_branch
        %366 = sbr.rel (%p364) target = $region44
      $region43: #{patch_gnp_forward.6} parent=11 // pred_region
        _
      $region44: #{patch_gnp_forward.6} parent=11 // pred_fallthru
        _
      // Predicated region
      $region45: #{patch_gnp_forward.6} parent=11 // pred_check
        %p367 = pneg %p286
      $region46: #{patch_gnp_forward.6} parent=11 // pred_check_branch
        %369 = sbr.rel (%p367) target = $region48
      $region47: #{patch_gnp_forward.6} parent=11 // pred_region
        _
      $region48: #{patch_gnp_forward.6} parent=11 // pred_fallthru
        _
      // Predicated region
      $region49: #{patch_gnp_forward.6} parent=11 // pred_check
        %p370 = pneg %p307
      $region50: #{patch_gnp_forward.6} parent=11 // pred_check_branch
        %372 = sbr.rel (%p370) target = $region52
      $region51: #{patch_gnp_forward.6} parent=11 // pred_region
        _
      $region52: #{patch_gnp_forward.6} parent=11 // pred_fallthru
        _
    $region12: #{patch_gnp_forward.6} parent=5 // pred_fallthru
      _
    %p373 = scmp.lt.s32.totalorder %s19, 2
    // Predicated region
    $region53: #{patch_gnp_forward.6} parent=5 // pred_check
      %p374 = pneg %p373
    $region54: #{patch_gnp_forward.6} parent=5 // pred_check_branch
      %376 = sbr.rel (%p374) target = $region56
    $region55: #{patch_gnp_forward.6} parent=5 // pred_region
      // Predicated region
      $region57: #{patch_gnp_forward.6} parent=55 // pred_check
        %p377 = pneg %p39
      $region58: #{patch_gnp_forward.6} parent=55 // pred_check_branch
        %379 = sbr.rel (%p377) target = $region60
      $region59: #{patch_gnp_forward.6} parent=55 // pred_region
        %s380 = smul.u32 16, %s19
        %p381 = scmp.lt.s32.totalorder %s380, 31
        %s382 = scalar_select %p381, %s380, 31
        %s383 = smul.addr %s382, 8
        %s384 = scalar_lea.vmem %s0, %s383
        %s385 = smul.u32 16, %s19
      $region60: #{patch_gnp_forward.6} parent=55 // pred_fallthru
        _
      // Predicated region
      $region61: #{patch_gnp_forward.6} parent=55 // pred_check
        %p386 = pneg %p65
      $region62: #{patch_gnp_forward.6} parent=55 // pred_check_branch
        %388 = sbr.rel (%p386) target = $region64
      $region63: #{patch_gnp_forward.6} parent=55 // pred_region
        %p389 = scmp.lt.s32.totalorder %s19, 1
        %s390 = scalar_select %p389, %s19, 1
        %s391 = scalar_lea.vmem %s1, %s390
      $region64: #{patch_gnp_forward.6} parent=55 // pred_fallthru
        _
      // Predicated region
      $region65: #{patch_gnp_forward.6} parent=55 // pred_check
        %p392 = pneg %p91
      $region66: #{patch_gnp_forward.6} parent=55 // pred_check_branch
        %394 = sbr.rel (%p392) target = $region68
      $region67: #{patch_gnp_forward.6} parent=55 // pred_region
        %s395 = smul.u32 16, %s19
        %p396 = scmp.lt.s32.totalorder %s395, 31
        %s397 = scalar_select %p396, %s395, 31
        %s398 = smul.addr %s397, 8
        %s399 = scalar_lea.vmem %s2, %s398
        %s400 = smul.u32 16, %s19
      $region68: #{patch_gnp_forward.6} parent=55 // pred_fallthru
        _
    $region56: #{patch_gnp_forward.6} parent=5 // pred_fallthru
      _
    %p401 = scmp.le.s32.totalorder 1, %s19
    %p402 = scmp.lt.s32.totalorder %s19, 3
    %p403 = pnand %p401, %p402
    %p404 = pneg %p403
    // Predicated region
    $region69: #{patch_gnp_forward.6} parent=5 // pred_check
      _
    $region70: #{patch_gnp_forward.6} parent=5 // pred_check_branch
      %406 = sbr.rel (%p403) target = $region72
    $region71: #{patch_gnp_forward.6} parent=5 // pred_region
      %s407 = ssub.s32 %s19, 1
      %s408 = smul.u32 16, %s24
      %p409 = scmp.lt.s32.totalorder %s408, 31
      %s410 = scalar_select %p409, %s408, 31
      %s411 = smul.addr %s410, 8
      %s412 = scalar_lea.vmem %s0, %s411
      %p413 = pneg %p45
      %p414 = pneg %p42
      %p415 = scmp.lt.s32.totalorder %s24, 1
      %s416 = scalar_select %p415, %s24, 1
      %s417 = scalar_lea.vmem %s1, %s416
      %p418 = pneg %p71
      %p419 = pneg %p68
      %s420 = smul.u32 16, %s24
      %p421 = scmp.lt.s32.totalorder %s420, 31
      %s422 = scalar_select %p421, %s420, 31
      %s423 = smul.addr %s422, 8
      %s424 = scalar_lea.vmem %s2, %s423
      %p425 = pneg %p97
      %p426 = pneg %p94
      %p427 = pneg %p118
      %p428 = pneg %p115
      %p429 = pneg %p139
      %p430 = pneg %p136
      %p431 = pneg %p160
      %p432 = pneg %p157
      %p433 = pneg %p181
      %p434 = pneg %p178
      %p435 = pneg %p202
      %p436 = pneg %p199
      %p437 = pneg %p223
      %p438 = pneg %p220
      %p439 = pneg %p244
      %p440 = pneg %p241
      %p441 = pneg %p265
      %p442 = pneg %p262
      %p443 = pneg %p286
      %p444 = pneg %p283
      %p445 = pneg %p307
      %p446 = pneg %p304
      %p447 = pneg %p328
      %p448 = pneg %p325
      %s449 = smul.u32 16, %s24
      %p450 = scmp.lt.s32.totalorder %s449, 31
      %s451 = scalar_select %p450, %s449, 31
      %s452 = smul.addr %s451, 8
      %s453 = scalar_lea.vmem %s0, %s452
      %s454 = smul.u32 16, %s24
      %p455 = scmp.lt.s32.totalorder %s24, 1
      %s456 = scalar_select %p455, %s24, 1
      %s457 = scalar_lea.vmem %s1, %s456
      %s458 = smul.u32 16, %s24
      %p459 = scmp.lt.s32.totalorder %s458, 31
      %s460 = scalar_select %p459, %s458, 31
      %s461 = smul.addr %s460, 8
      %s462 = scalar_lea.vmem %s2, %s461
      %s463 = smul.u32 16, %s24
      %p464 = scmp.eq.s32.totalorder %s24, 0
      // Predicated region
      $region73: #{patch_gnp_forward.6} parent=71 // pred_check
        %p465 = pneg %p464
      $region74: #{patch_gnp_forward.6} parent=71 // pred_check_branch
        %467 = sbr.rel (%p465) target = $region76
      $region75: #{patch_gnp_forward.6} parent=71 // pred_region
        %vm468 = vcmask 261120
        %469 = vst.msk [vmem:[%s13] sm:$0xff] %vm468, 0.0
        %470 = vst.msk [vmem:[%s13 + $0x8] sm:$0xff] %vm468, 0.0
        %471 = vst.msk [vmem:[%s13 + $0x10] sm:$0xff] %vm468, 0.0
        %472 = vst.msk [vmem:[%s13 + $0x18] sm:$0xff] %vm468, 0.0
        %473 = vst.msk [vmem:[%s13 + $0x20] sm:$0xff] %vm468, 0.0
        %474 = vst.msk [vmem:[%s13 + $0x28] sm:$0xff] %vm468, 0.0
        %475 = vst.msk [vmem:[%s13 + $0x30] sm:$0xff] %vm468, 0.0
        %476 = vst.msk [vmem:[%s13 + $0x38] sm:$0xff] %vm468, 0.0
      $region76: #{patch_gnp_forward.6} parent=71 // pred_fallthru
        _
      %v477 = vld [vmem:[%s3] sm:$0xff]
      %v478 = vld [vmem:[%s3 + $0x8] sm:$0xff]
      %v479 = vld [vmem:[%s3 + $0x10] sm:$0xff]
      %v480 = vld [vmem:[%s3 + $0x18] sm:$0xff]
      %v481 = vld [vmem:[%s3 + $0x20] sm:$0xff]
      %v482 = vld [vmem:[%s3 + $0x28] sm:$0xff]
      %v483 = vld [vmem:[%s3 + $0x30] sm:$0xff]
      %v484 = vld [vmem:[%s3 + $0x38] sm:$0xff]
      %v485 = vlaneseq
      %v486 = vand.u32 %v485, 127
      %v487 = vld [vmem:[%s453] sm:$0xff]
      %v488 = vld [vmem:[%s453 + $0x8] sm:$0xff]
      %v489 = vld [vmem:[%s453 + $0x10] sm:$0xff]
      %v490 = vld [vmem:[%s453 + $0x18] sm:$0xff]
      %v491 = vld [vmem:[%s453 + $0x20] sm:$0xff]
      %v492 = vld [vmem:[%s453 + $0x28] sm:$0xff]
      %v493 = vld [vmem:[%s453 + $0x30] sm:$0xff]
      %v494 = vld [vmem:[%s453 + $0x38] sm:$0xff]
      %v495 = vld [vmem:[%s453 + $0x40] sm:$0xff]
      %v496 = vld [vmem:[%s453 + $0x48] sm:$0xff]
      %v497 = vld [vmem:[%s453 + $0x50] sm:$0xff]
      %v498 = vld [vmem:[%s453 + $0x58] sm:$0xff]
      %v499 = vld [vmem:[%s453 + $0x60] sm:$0xff]
      %v500 = vld [vmem:[%s453 + $0x68] sm:$0xff]
      %v501 = vld [vmem:[%s453 + $0x70] sm:$0xff]
      %v502 = vld [vmem:[%s453 + $0x78] sm:$0xff]
      %503 = vset.pattern.permute.xlu0 0
      %504 = vperm.xlu0 %503, %v487
      %v505 = vpop.permute.xlu0 %504
      %506 = vset.pattern.permute.xlu0 0
      %507 = vperm.xlu0 %506, %v488
      %v508 = vpop.permute.xlu0 %507
      %509 = vset.pattern.permute.xlu0 0
      %510 = vperm.xlu0 %509, %v489
      %v511 = vpop.permute.xlu0 %510
      %512 = vset.pattern.permute.xlu0 0
      %513 = vperm.xlu0 %512, %v490
      %v514 = vpop.permute.xlu0 %513
      %515 = vset.pattern.permute.xlu0 0
      %516 = vperm.xlu0 %515, %v491
      %v517 = vpop.permute.xlu0 %516
      %518 = vset.pattern.permute.xlu0 0
      %519 = vperm.xlu0 %518, %v492
      %v520 = vpop.permute.xlu0 %519
      %521 = vset.pattern.permute.xlu0 0
      %522 = vperm.xlu0 %521, %v493
      %v523 = vpop.permute.xlu0 %522
      %524 = vset.pattern.permute.xlu0 0
      %525 = vperm.xlu0 %524, %v494
      %v526 = vpop.permute.xlu0 %525
      %527 = vset.pattern.permute.xlu0 0
      %528 = vperm.xlu0 %527, %v495
      %v529 = vpop.permute.xlu0 %528
      %530 = vset.pattern.permute.xlu0 0
      %531 = vperm.xlu0 %530, %v496
      %v532 = vpop.permute.xlu0 %531
      %533 = vset.pattern.permute.xlu0 0
      %534 = vperm.xlu0 %533, %v497
      %v535 = vpop.permute.xlu0 %534
      %536 = vset.pattern.permute.xlu0 0
      %537 = vperm.xlu0 %536, %v498
      %v538 = vpop.permute.xlu0 %537
      %539 = vset.pattern.permute.xlu0 0
      %540 = vperm.xlu0 %539, %v499
      %v541 = vpop.permute.xlu0 %540
      %542 = vset.pattern.permute.xlu0 0
      %543 = vperm.xlu0 %542, %v500
      %v544 = vpop.permute.xlu0 %543
      %545 = vset.pattern.permute.xlu0 0
      %546 = vperm.xlu0 %545, %v501
      %v547 = vpop.permute.xlu0 %546
      %548 = vset.pattern.permute.xlu0 0
      %549 = vperm.xlu0 %548, %v502
      %v550 = vpop.permute.xlu0 %549
      %vm551 = vcmp.eq.s32.totalorder %v486, %v505
      %vm552 = vcmp.eq.s32.totalorder %v486, %v508
      %vm553 = vcmp.eq.s32.totalorder %v486, %v511
      %vm554 = vcmp.eq.s32.totalorder %v486, %v514
      %vm555 = vcmp.eq.s32.totalorder %v486, %v517
      %vm556 = vcmp.eq.s32.totalorder %v486, %v520
      %vm557 = vcmp.eq.s32.totalorder %v486, %v523
      %vm558 = vcmp.eq.s32.totalorder %v486, %v526
      %vm559 = vcmp.eq.s32.totalorder %v486, %v529
      %vm560 = vcmp.eq.s32.totalorder %v486, %v532
      %vm561 = vcmp.eq.s32.totalorder %v486, %v535
      %vm562 = vcmp.eq.s32.totalorder %v486, %v538
      %vm563 = vcmp.eq.s32.totalorder %v486, %v541
      %vm564 = vcmp.eq.s32.totalorder %v486, %v544
      %vm565 = vcmp.eq.s32.totalorder %v486, %v547
      %vm566 = vcmp.eq.s32.totalorder %v486, %v550
      %v567 = vsel %vm551, 1, 0
      %v568 = vsel %vm552, 1, 0
      %v569 = vsel %vm553, 1, 0
      %v570 = vsel %vm554, 1, 0
      %v571 = vsel %vm555, 1, 0
      %v572 = vsel %vm556, 1, 0
      %v573 = vsel %vm557, 1, 0
      %v574 = vsel %vm558, 1, 0
      %v575 = vsel %vm559, 1, 0
      %v576 = vsel %vm560, 1, 0
      %v577 = vsel %vm561, 1, 0
      %v578 = vsel %vm562, 1, 0
      %v579 = vsel %vm563, 1, 0
      %v580 = vsel %vm564, 1, 0
      %v581 = vsel %vm565, 1, 0
      %v582 = vsel %vm566, 1, 0
      %v583 = vcvt.s32.f32 %v567
      %v584 = vcvt.s32.f32 %v568
      %v585 = vcvt.s32.f32 %v569
      %v586 = vcvt.s32.f32 %v570
      %v587 = vcvt.s32.f32 %v571
      %v588 = vcvt.s32.f32 %v572
      %v589 = vcvt.s32.f32 %v573
      %v590 = vcvt.s32.f32 %v574
      %v591 = vcvt.s32.f32 %v575
      %v592 = vcvt.s32.f32 %v576
      %v593 = vcvt.s32.f32 %v577
      %v594 = vcvt.s32.f32 %v578
      %v595 = vcvt.s32.f32 %v579
      %v596 = vcvt.s32.f32 %v580
      %v597 = vcvt.s32.f32 %v581
      %v598 = vcvt.s32.f32 %v582
      %vm599 = vcmask 523264
      %v601 = vsel %vm599, %v583, 0
      %v604 = vsel %vm599, %v584, 0
      %v607 = vsel %vm599, %v585, 0
      %v610 = vsel %vm599, %v586, 0
      %v613 = vsel %vm599, %v587, 0
      %v616 = vsel %vm599, %v588, 0
      %v619 = vsel %vm599, %v589, 0
      %v622 = vsel %vm599, %v590, 0
      %v625 = vsel %vm599, %v591, 0
      %v628 = vsel %vm599, %v592, 0
      %v631 = vsel %vm599, %v593, 0
      %v634 = vsel %vm599, %v594, 0
      %v637 = vsel %vm599, %v595, 0
      %v640 = vsel %vm599, %v596, 0
      %v643 = vsel %vm599, %v597, 0
      %v646 = vsel %vm599, %v598, 0
      %648 = vmatprep.subr.mxu0 0.0
      %649 = vmatpush1.msra.mxu0 %v477
      %650 = vmatprep.subr.mxu0 0.0
      %651 = vmatpush1.msra.mxu0 %v478
      %652 = vmatprep.subr.mxu0 0.0
      %653 = vmatpush1.msra.mxu0 %v479
      %654 = vmatprep.subr.mxu0 0.0
      %655 = vmatpush1.msra.mxu0 %v480
      %656 = vmatprep.subr.mxu0 0.0
      %657 = vmatpush1.msra.mxu0 %v481
      %658 = vmatprep.subr.mxu0 0.0
      %659 = vmatpush1.msra.mxu0 %v482
      %660 = vmatprep.subr.mxu0 0.0
      %661 = vmatpush1.msra.mxu0 %v483
      %662 = vmatprep.subr.mxu0 0.0
      %663 = vmatpush1.msra.mxu0 %v484
      %664 = vmatprep.subr.mxu0 0.0
      %665 = vmatpush1.msra.mxu0 0.0
      %666 = vmatprep.subr.mxu0 0.0
      %667 = vmatpush1.msra.mxu0 0.0
      %668 = vmatprep.subr.mxu0 0.0
      %669 = vmatpush1.msra.mxu0 0.0
      %670 = vmatprep.subr.mxu0 0.0
      %671 = vmatpush1.msra.mxu0 0.0
      %672 = vmatprep.subr.mxu0 0.0
      %673 = vmatpush1.msra.mxu0 0.0
      %674 = vmatprep.subr.mxu0 0.0
      %675 = vmatpush1.msra.mxu0 0.0
      %676 = vmatprep.subr.mxu0 0.0
      %677 = vmatpush1.msra.mxu0 0.0
      %678 = vmatprep.subr.mxu0 0.0
      %679 = vmatpush1.msra.mxu0 0.0
      %680 = vmatprep.subr.mxu0 0.0
      %681 = vmatpush1.msra.mxu0 0.0
      %682 = vmatprep.subr.mxu0 0.0
      %683 = vmatpush1.msra.mxu0 0.0
      %684 = vmatprep.subr.mxu0 0.0
      %685 = vmatpush1.msra.mxu0 0.0
      %686 = vmatprep.subr.mxu0 0.0
      %687 = vmatpush1.msra.mxu0 0.0
      %688 = vmatprep.subr.mxu0 0.0
      %689 = vmatpush1.msra.mxu0 0.0
      %690 = vmatprep.subr.mxu0 0.0
      %691 = vmatpush1.msra.mxu0 0.0
      %692 = vmatprep.subr.mxu0 0.0
      %693 = vmatpush1.msra.mxu0 0.0
      %694 = vmatprep.subr.mxu0 0.0
      %695 = vmatpush1.msra.mxu0 0.0
      %696 = vmatprep.subr.mxu0 0.0
      %697 = vmatpush1.msra.mxu0 0.0
      %698 = vmatprep.subr.mxu0 0.0
      %699 = vmatpush1.msra.mxu0 0.0
      %700 = vmatprep.subr.mxu0 0.0
      %701 = vmatpush1.msra.mxu0 0.0
      %702 = vmatprep.subr.mxu0 0.0
      %703 = vmatpush1.msra.mxu0 0.0
      %704 = vmatprep.subr.mxu0 0.0
      %705 = vmatpush1.msra.mxu0 0.0
      %706 = vmatprep.subr.mxu0 0.0
      %707 = vmatpush1.msra.mxu0 0.0
      %708 = vmatprep.subr.mxu0 0.0
      %709 = vmatpush1.msra.mxu0 0.0
      %710 = vmatprep.subr.mxu0 0.0
      %711 = vmatpush1.msra.mxu0 0.0
      %712 = vmatprep.mubr.f32.mxu0 0.0
      %713 = vmatmul.mubr.f32.gmra.mrb[0].mxu0 %v601
      %v714 = vpop.f32.mrb[0].mxu0
      %v715 = vadd.f32 0.0, %v714
      %v716 = vpop.f32.mrb[0].mxu0
      %717 = vmatprep.mubr.f32.mxu0 0.0
      %718 = vmatmul.mubr.f32.gmra.mrb[0].mxu0 %v604
      %v719 = vpop.f32.mrb[0].mxu0
      %v720 = vadd.f32 0.0, %v719
      %v721 = vpop.f32.mrb[0].mxu0
      %722 = vmatprep.mubr.f32.mxu0 0.0
      %723 = vmatmul.mubr.f32.gmra.mrb[0].mxu0 %v607
      %v724 = vpop.f32.mrb[0].mxu0
      %v725 = vadd.f32 0.0, %v724
      %v726 = vpop.f32.mrb[0].mxu0
      %727 = vmatprep.mubr.f32.mxu0 0.0
      %728 = vmatmul.mubr.f32.gmra.mrb[0].mxu0 %v610
      %v729 = vpop.f32.mrb[0].mxu0
      %v730 = vadd.f32 0.0, %v729
      %v731 = vpop.f32.mrb[0].mxu0
      %732 = vmatprep.mubr.f32.mxu0 0.0
      %733 = vmatmul.mubr.f32.gmra.mrb[0].mxu0 %v613
      %v734 = vpop.f32.mrb[0].mxu0
      %v735 = vadd.f32 0.0, %v734
      %v736 = vpop.f32.mrb[0].mxu0
      %737 = vmatprep.mubr.f32.mxu0 0.0
      %738 = vmatmul.mubr.f32.gmra.mrb[0].mxu0 %v616
      %v739 = vpop.f32.mrb[0].mxu0
      %v740 = vadd.f32 0.0, %v739
      %v741 = vpop.f32.mrb[0].mxu0
      %742 = vmatprep.mubr.f32.mxu0 0.0
      %743 = vmatmul.mubr.f32.gmra.mrb[0].mxu0 %v619
      %v744 = vpop.f32.mrb[0].mxu0
      %v745 = vadd.f32 0.0, %v744
      %v746 = vpop.f32.mrb[0].mxu0
      %747 = vmatprep.mubr.f32.mxu0 0.0
      %748 = vmatmul.mubr.f32.gmra.mrb[0].mxu0 %v622
      %v749 = vpop.f32.mrb[0].mxu0
      %v750 = vadd.f32 0.0, %v749
      %v751 = vpop.f32.mrb[0].mxu0
      %752 = vmatprep.mubr.f32.mxu0 0.0
      %753 = vmatmul.mubr.f32.gmra.mrb[0].mxu0 %v625
      %v754 = vpop.f32.mrb[0].mxu0
      %v755 = vadd.f32 0.0, %v754
      %v756 = vpop.f32.mrb[0].mxu0
      %757 = vmatprep.mubr.f32.mxu0 0.0
      %758 = vmatmul.mubr.f32.gmra.mrb[0].mxu0 %v628
      %v759 = vpop.f32.mrb[0].mxu0
      %v760 = vadd.f32 0.0, %v759
      %v761 = vpop.f32.mrb[0].mxu0
      %762 = vmatprep.mubr.f32.mxu0 0.0
      %763 = vmatmul.mubr.f32.gmra.mrb[0].mxu0 %v631
      %v764 = vpop.f32.mrb[0].mxu0
      %v765 = vadd.f32 0.0, %v764
      %v766 = vpop.f32.mrb[0].mxu0
      %767 = vmatprep.mubr.f32.mxu0 0.0
      %768 = vmatmul.mubr.f32.gmra.mrb[0].mxu0 %v634
      %v769 = vpop.f32.mrb[0].mxu0
      %v770 = vadd.f32 0.0, %v769
      %v771 = vpop.f32.mrb[0].mxu0
      %772 = vmatprep.mubr.f32.mxu0 0.0
      %773 = vmatmul.mubr.f32.gmra.mrb[0].mxu0 %v637
      %v774 = vpop.f32.mrb[0].mxu0
      %v775 = vadd.f32 0.0, %v774
      %v776 = vpop.f32.mrb[0].mxu0
      %777 = vmatprep.mubr.f32.mxu0 0.0
      %778 = vmatmul.mubr.f32.gmra.mrb[0].mxu0 %v640
      %v779 = vpop.f32.mrb[0].mxu0
      %v780 = vadd.f32 0.0, %v779
      %v781 = vpop.f32.mrb[0].mxu0
      %782 = vmatprep.mubr.f32.mxu0 0.0
      %783 = vmatmul.mubr.f32.gmra.mrb[0].mxu0 %v643
      %v784 = vpop.f32.mrb[0].mxu0
      %v785 = vadd.f32 0.0, %v784
      %v786 = vpop.f32.mrb[0].mxu0
      %787 = vmatprep.mubr.f32.mxu0 0.0
      %788 = vmatmul.mubr.f32.gmra.mrb[0].mxu0 %v646
      %v789 = vpop.f32.mrb[0].mxu0
      %v790 = vadd.f32 0.0, %v789
      %v791 = vpop.f32.mrb[0].mxu0
      %792 = vdwg.mxu0
      %v793 = vld [vmem:[%s462] sm:$0xff]
      %v794 = vld [vmem:[%s462 + $0x8] sm:$0xff]
      %v795 = vld [vmem:[%s462 + $0x10] sm:$0xff]
      %v796 = vld [vmem:[%s462 + $0x18] sm:$0xff]
      %v797 = vld [vmem:[%s462 + $0x20] sm:$0xff]
      %v798 = vld [vmem:[%s462 + $0x28] sm:$0xff]
      %v799 = vld [vmem:[%s462 + $0x30] sm:$0xff]
      %v800 = vld [vmem:[%s462 + $0x38] sm:$0xff]
      %v801 = vld [vmem:[%s462 + $0x40] sm:$0xff]
      %v802 = vld [vmem:[%s462 + $0x48] sm:$0xff]
      %v803 = vld [vmem:[%s462 + $0x50] sm:$0xff]
      %v804 = vld [vmem:[%s462 + $0x58] sm:$0xff]
      %v805 = vld [vmem:[%s462 + $0x60] sm:$0xff]
      %v806 = vld [vmem:[%s462 + $0x68] sm:$0xff]
      %v807 = vld [vmem:[%s462 + $0x70] sm:$0xff]
      %v808 = vld [vmem:[%s462 + $0x78] sm:$0xff]
      %v809 = vld [vmem:[%s4] sm:$0xf]
      %v810 = vld [vmem:[%s5] sm:$0x1]
      %v812 = vlaneseq
      %v813 = vshrl.u32 %v812, 7
      %v814 = vsub.s32 0, %v813
      %v815 = vrot.slane %v810, %v814
      %vm817 = vcmask 31744
      %v819 = vsel %vm817, %v793, 0
      %v822 = vsel %vm817, %v794, 0
      %v825 = vsel %vm817, %v795, 0
      %v828 = vsel %vm817, %v796, 0
      %v831 = vsel %vm817, %v797, 0
      %v834 = vsel %vm817, %v798, 0
      %v837 = vsel %vm817, %v799, 0
      %v840 = vsel %vm817, %v800, 0
      %v843 = vsel %vm817, %v801, 0
      %v846 = vsel %vm817, %v802, 0
      %v849 = vsel %vm817, %v803, 0
      %v852 = vsel %vm817, %v804, 0
      %v855 = vsel %vm817, %v805, 0
      %v858 = vsel %vm817, %v806, 0
      %v861 = vsel %vm817, %v807, 0
      %v864 = vsel %vm817, %v808, 0
      %vm866 = vcmask 1043456
      %v868 = vsel %vm866, %v809, 0
      %870 = vmatprep.subr.mxu0 0.0
      %871 = vmatpush1.msra.mxu0 %v868
      %872 = vmatprep.subr.mxu0 0.0
      %873 = vmatpush1.msra.mxu0 0.0
      %874 = vmatprep.subr.mxu0 0.0
      %875 = vmatpush1.msra.mxu0 0.0
      %876 = vmatprep.subr.mxu0 0.0
      %877 = vmatpush1.msra.mxu0 0.0
      %878 = vmatprep.subr.mxu0 0.0
      %879 = vmatpush1.msra.mxu0 0.0
      %880 = vmatprep.subr.mxu0 0.0
      %881 = vmatpush1.msra.mxu0 0.0
      %882 = vmatprep.subr.mxu0 0.0
      %883 = vmatpush1.msra.mxu0 0.0
      %884 = vmatprep.subr.mxu0 0.0
      %885 = vmatpush1.msra.mxu0 0.0
      %886 = vmatprep.subr.mxu0 0.0
      %887 = vmatpush1.msra.mxu0 0.0
      %888 = vmatprep.subr.mxu0 0.0
      %889 = vmatpush1.msra.mxu0 0.0
      %890 = vmatprep.subr.mxu0 0.0
      %891 = vmatpush1.msra.mxu0 0.0
      %892 = vmatprep.subr.mxu0 0.0
      %893 = vmatpush1.msra.mxu0 0.0
      %894 = vmatprep.subr.mxu0 0.0
      %895 = vmatpush1.msra.mxu0 0.0
      %896 = vmatprep.subr.mxu0 0.0
      %897 = vmatpush1.msra.mxu0 0.0
      %898 = vmatprep.subr.mxu0 0.0
      %899 = vmatpush1.msra.mxu0 0.0
      %900 = vmatprep.subr.mxu0 0.0
      %901 = vmatpush1.msra.mxu0 0.0
      %902 = vmatprep.subr.mxu0 0.0
      %903 = vmatpush1.msra.mxu0 0.0
      %904 = vmatprep.subr.mxu0 0.0
      %905 = vmatpush1.msra.mxu0 0.0
      %906 = vmatprep.subr.mxu0 0.0
      %907 = vmatpush1.msra.mxu0 0.0
      %908 = vmatprep.subr.mxu0 0.0
      %909 = vmatpush1.msra.mxu0 0.0
      %910 = vmatprep.subr.mxu0 0.0
      %911 = vmatpush1.msra.mxu0 0.0
      %912 = vmatprep.subr.mxu0 0.0
      %913 = vmatpush1.msra.mxu0 0.0
      %914 = vmatprep.subr.mxu0 0.0
      %915 = vmatpush1.msra.mxu0 0.0
      %916 = vmatprep.subr.mxu0 0.0
      %917 = vmatpush1.msra.mxu0 0.0
      %918 = vmatprep.subr.mxu0 0.0
      %919 = vmatpush1.msra.mxu0 0.0
      %920 = vmatprep.subr.mxu0 0.0
      %921 = vmatpush1.msra.mxu0 0.0
      %922 = vmatprep.subr.mxu0 0.0
      %923 = vmatpush1.msra.mxu0 0.0
      %924 = vmatprep.subr.mxu0 0.0
      %925 = vmatpush1.msra.mxu0 0.0
      %926 = vmatprep.subr.mxu0 0.0
      %927 = vmatpush1.msra.mxu0 0.0
      %928 = vmatprep.subr.mxu0 0.0
      %929 = vmatpush1.msra.mxu0 0.0
      %930 = vmatprep.subr.mxu0 0.0
      %931 = vmatpush1.msra.mxu0 0.0
      %932 = vmatprep.subr.mxu0 0.0
      %933 = vmatpush1.msra.mxu0 0.0
      %934 = vmatprep.mubr.f32.mxu0 0.0
      %935 = vmatmul.mubr.f32.gmra.mrb[0].mxu0 %v819
      %v936 = vpop.f32.mrb[0].mxu0
      %v937 = vadd.f32 %v815, %v936
      %v938 = vpop.f32.mrb[0].mxu0
      %939 = vmatprep.mubr.f32.mxu0 0.0
      %940 = vmatmul.mubr.f32.gmra.mrb[0].mxu0 %v822
      %v941 = vpop.f32.mrb[0].mxu0
      %v942 = vadd.f32 %v815, %v941
      %v943 = vpop.f32.mrb[0].mxu0
      %944 = vmatprep.mubr.f32.mxu0 0.0
      %945 = vmatmul.mubr.f32.gmra.mrb[0].mxu0 %v825
      %v946 = vpop.f32.mrb[0].mxu0
      %v947 = vadd.f32 %v815, %v946
      %v948 = vpop.f32.mrb[0].mxu0
      %949 = vmatprep.mubr.f32.mxu0 0.0
      %950 = vmatmul.mubr.f32.gmra.mrb[0].mxu0 %v828
      %v951 = vpop.f32.mrb[0].mxu0
      %v952 = vadd.f32 %v815, %v951
      %v953 = vpop.f32.mrb[0].mxu0
      %954 = vmatprep.mubr.f32.mxu0 0.0
      %955 = vmatmul.mubr.f32.gmra.mrb[0].mxu0 %v831
      %v956 = vpop.f32.mrb[0].mxu0
      %v957 = vadd.f32 %v815, %v956
      %v958 = vpop.f32.mrb[0].mxu0
      %959 = vmatprep.mubr.f32.mxu0 0.0
      %960 = vmatmul.mubr.f32.gmra.mrb[0].mxu0 %v834
      %v961 = vpop.f32.mrb[0].mxu0
      %v962 = vadd.f32 %v815, %v961
      %v963 = vpop.f32.mrb[0].mxu0
      %964 = vmatprep.mubr.f32.mxu0 0.0
      %965 = vmatmul.mubr.f32.gmra.mrb[0].mxu0 %v837
      %v966 = vpop.f32.mrb[0].mxu0
      %v967 = vadd.f32 %v815, %v966
      %v968 = vpop.f32.mrb[0].mxu0
      %969 = vmatprep.mubr.f32.mxu0 0.0
      %970 = vmatmul.mubr.f32.gmra.mrb[0].mxu0 %v840
      %v971 = vpop.f32.mrb[0].mxu0
      %v972 = vadd.f32 %v815, %v971
      %v973 = vpop.f32.mrb[0].mxu0
      %974 = vmatprep.mubr.f32.mxu0 0.0
      %975 = vmatmul.mubr.f32.gmra.mrb[0].mxu0 %v843
      %v976 = vpop.f32.mrb[0].mxu0
      %v977 = vadd.f32 %v815, %v976
      %v978 = vpop.f32.mrb[0].mxu0
      %979 = vmatprep.mubr.f32.mxu0 0.0
      %980 = vmatmul.mubr.f32.gmra.mrb[0].mxu0 %v846
      %v981 = vpop.f32.mrb[0].mxu0
      %v982 = vadd.f32 %v815, %v981
      %v983 = vpop.f32.mrb[0].mxu0
      %984 = vmatprep.mubr.f32.mxu0 0.0
      %985 = vmatmul.mubr.f32.gmra.mrb[0].mxu0 %v849
      %v986 = vpop.f32.mrb[0].mxu0
      %v987 = vadd.f32 %v815, %v986
      %v988 = vpop.f32.mrb[0].mxu0
      %989 = vmatprep.mubr.f32.mxu0 0.0
      %990 = vmatmul.mubr.f32.gmra.mrb[0].mxu0 %v852
      %v991 = vpop.f32.mrb[0].mxu0
      %v992 = vadd.f32 %v815, %v991
      %v993 = vpop.f32.mrb[0].mxu0
      %994 = vmatprep.mubr.f32.mxu0 0.0
      %995 = vmatmul.mubr.f32.gmra.mrb[0].mxu0 %v855
      %v996 = vpop.f32.mrb[0].mxu0
      %v997 = vadd.f32 %v815, %v996
      %v998 = vpop.f32.mrb[0].mxu0
      %999 = vmatprep.mubr.f32.mxu0 0.0
      %1000 = vmatmul.mubr.f32.gmra.mrb[0].mxu0 %v858
      %v1001 = vpop.f32.mrb[0].mxu0
      %v1002 = vadd.f32 %v815, %v1001
      %v1003 = vpop.f32.mrb[0].mxu0
      %1004 = vmatprep.mubr.f32.mxu0 0.0
      %1005 = vmatmul.mubr.f32.gmra.mrb[0].mxu0 %v861
      %v1006 = vpop.f32.mrb[0].mxu0
      %v1007 = vadd.f32 %v815, %v1006
      %v1008 = vpop.f32.mrb[0].mxu0
      %1009 = vmatprep.mubr.f32.mxu0 0.0
      %1010 = vmatmul.mubr.f32.gmra.mrb[0].mxu0 %v864
      %v1011 = vpop.f32.mrb[0].mxu0
      %v1012 = vadd.f32 %v815, %v1011
      %v1013 = vpop.f32.mrb[0].mxu0
      %1014 = vdwg.mxu0
      %v1015 = vmax.f32 %v937, 0.0
      %v1016 = vmax.f32 %v942, 0.0
      %v1017 = vmax.f32 %v947, 0.0
      %v1018 = vmax.f32 %v952, 0.0
      %v1019 = vmax.f32 %v957, 0.0
      %v1020 = vmax.f32 %v962, 0.0
      %v1021 = vmax.f32 %v967, 0.0
      %v1022 = vmax.f32 %v972, 0.0
      %v1023 = vmax.f32 %v977, 0.0
      %v1024 = vmax.f32 %v982, 0.0
      %v1025 = vmax.f32 %v987, 0.0
      %v1026 = vmax.f32 %v992, 0.0
      %v1027 = vmax.f32 %v997, 0.0
      %v1028 = vmax.f32 %v1002, 0.0
      %v1029 = vmax.f32 %v1007, 0.0
      %v1030 = vmax.f32 %v1012, 0.0
      %v1031 = vld [vmem:[%s6] sm:$0xff]
      %v1032 = vld [vmem:[%s6 + $0x8] sm:$0xff]
      %v1033 = vld [vmem:[%s6 + $0x10] sm:$0xff]
      %v1034 = vld [vmem:[%s6 + $0x18] sm:$0xff]
      %v1035 = vld [vmem:[%s6 + $0x20] sm:$0xff]
      %v1036 = vld [vmem:[%s6 + $0x28] sm:$0xff]
      %v1037 = vld [vmem:[%s6 + $0x30] sm:$0xff]
      %v1038 = vld [vmem:[%s6 + $0x38] sm:$0xff]
      %v1039 = vld [vmem:[%s6 + $0x40] sm:$0xff]
      %v1040 = vld [vmem:[%s6 + $0x48] sm:$0xff]
      %v1041 = vld [vmem:[%s6 + $0x50] sm:$0xff]
      %v1042 = vld [vmem:[%s6 + $0x58] sm:$0xff]
      %v1043 = vld [vmem:[%s6 + $0x60] sm:$0xff]
      %v1044 = vld [vmem:[%s6 + $0x68] sm:$0xff]
      %v1045 = vld [vmem:[%s6 + $0x70] sm:$0xff]
      %v1046 = vld [vmem:[%s6 + $0x78] sm:$0xff]
      %v1047 = vld [vmem:[%s6 + $0x80] sm:$0xff]
      %v1048 = vld [vmem:[%s6 + $0x88] sm:$0xff]
      %v1049 = vld [vmem:[%s6 + $0x90] sm:$0xff]
      %v1050 = vld [vmem:[%s6 + $0x98] sm:$0xff]
      %v1051 = vld [vmem:[%s6 + $0xa0] sm:$0xff]
      %v1052 = vld [vmem:[%s6 + $0xa8] sm:$0xff]
      %v1053 = vld [vmem:[%s6 + $0xb0] sm:$0xff]
      %v1054 = vld [vmem:[%s6 + $0xb8] sm:$0xff]
      %v1055 = vld [vmem:[%s6 + $0xc0] sm:$0xff]
      %v1056 = vld [vmem:[%s6 + $0xc8] sm:$0xff]
      %v1057 = vld [vmem:[%s6 + $0xd0] sm:$0xff]
      %v1058 = vld [vmem:[%s6 + $0xd8] sm:$0xff]
      %v1059 = vld [vmem:[%s6 + $0xe0] sm:$0xff]
      %v1060 = vld [vmem:[%s6 + $0xe8] sm:$0xff]
      %v1061 = vld [vmem:[%s6 + $0xf0] sm:$0xff]
      %v1062 = vld [vmem:[%s6 + $0xf8] sm:$0xff]
      %v1063 = vld [vmem:[%s7] sm:$0x3]
      %v1065 = vlaneseq
      %v1066 = vshrl.u32 %v1065, 7
      %v1067 = vsub.s32 0, %v1066
      %v1068 = vrot.slane %v1063, %v1067
      %v1069 = vlaneseq
      %v1070 = vshrl.u32 %v1069, 7
      %v1071 = vsub.s32 1, %v1070
      %v1072 = vrot.slane %v1063, %v1071
      %1075 = vmatprep.subr.mxu0 %v1032
      %1076 = vmatpush1.msra.mxu0 %v1031
      %1077 = vmatprep.subr.mxu0 %v1034
      %1078 = vmatpush1.msra.mxu0 %v1033
      %1079 = vmatprep.subr.mxu0 %v1036
      %1080 = vmatpush1.msra.mxu0 %v1035
      %1081 = vmatprep.subr.mxu0 %v1038
      %1082 = vmatpush1.msra.mxu0 %v1037
      %1083 = vmatprep.subr.mxu0 %v1040
      %1084 = vmatpush1.msra.mxu0 %v1039
      %1085 = vmatprep.subr.mxu0 %v1042
      %1086 = vmatpush1.msra.mxu0 %v1041
      %1087 = vmatprep.subr.mxu0 %v1044
      %1088 = vmatpush1.msra.mxu0 %v1043
      %1089 = vmatprep.subr.mxu0 %v1046
      %1090 = vmatpush1.msra.mxu0 %v1045
      %1091 = vmatprep.subr.mxu0 %v1048
      %1092 = vmatpush1.msra.mxu0 %v1047
      %1093 = vmatprep.subr.mxu0 %v1050
      %1094 = vmatpush1.msra.mxu0 %v1049
      %1095 = vmatprep.subr.mxu0 %v1052
      %1096 = vmatpush1.msra.mxu0 %v1051
      %1097 = vmatprep.subr.mxu0 %v1054
      %1098 = vmatpush1.msra.mxu0 %v1053
      %1099 = vmatprep.subr.mxu0 %v1056
      %1100 = vmatpush1.msra.mxu0 %v1055
      %1101 = vmatprep.subr.mxu0 %v1058
      %1102 = vmatpush1.msra.mxu0 %v1057
      %1103 = vmatprep.subr.mxu0 %v1060
      %1104 = vmatpush1.msra.mxu0 %v1059
      %1105 = vmatprep.subr.mxu0 %v1062
      %1106 = vmatpush1.msra.mxu0 %v1061
      %1107 = vmatprep.subr.mxu0 0.0
      %1108 = vmatpush1.msra.mxu0 0.0
      %1109 = vmatprep.subr.mxu0 0.0
      %1110 = vmatpush1.msra.mxu0 0.0
      %1111 = vmatprep.subr.mxu0 0.0
      %1112 = vmatpush1.msra.mxu0 0.0
      %1113 = vmatprep.subr.mxu0 0.0
      %1114 = vmatpush1.msra.mxu0 0.0
      %1115 = vmatprep.subr.mxu0 0.0
      %1116 = vmatpush1.msra.mxu0 0.0
      %1117 = vmatprep.subr.mxu0 0.0
      %1118 = vmatpush1.msra.mxu0 0.0
      %1119 = vmatprep.subr.mxu0 0.0
      %1120 = vmatpush1.msra.mxu0 0.0
      %1121 = vmatprep.subr.mxu0 0.0
      %1122 = vmatpush1.msra.mxu0 0.0
      %1123 = vmatprep.subr.mxu0 0.0
      %1124 = vmatpush1.msra.mxu0 0.0
      %1125 = vmatprep.subr.mxu0 0.0
      %1126 = vmatpush1.msra.mxu0 0.0
      %1127 = vmatprep.subr.mxu0 0.0
      %1128 = vmatpush1.msra.mxu0 0.0
      %1129 = vmatprep.subr.mxu0 0.0
      %1130 = vmatpush1.msra.mxu0 0.0
      %1131 = vmatprep.subr.mxu0 0.0
      %1132 = vmatpush1.msra.mxu0 0.0
      %1133 = vmatprep.subr.mxu0 0.0
      %1134 = vmatpush1.msra.mxu0 0.0
      %1135 = vmatprep.subr.mxu0 0.0
      %1136 = vmatpush1.msra.mxu0 0.0
      %1137 = vmatprep.subr.mxu0 0.0
      %1138 = vmatpush1.msra.mxu0 0.0
      %1139 = vmatprep.mubr.f32.mxu0 0.0
      %1140 = vmatmul.mubr.f32.gmra.mrb[0].mxu0 %v1015
      %v1141 = vpop.f32.mrb[0].mxu0
      %v1142 = vadd.f32 %v1068, %v1141
      %v1143 = vpop.f32.mrb[0].mxu0
      %v1144 = vadd.f32 %v1072, %v1143
      %1145 = vmatprep.mubr.f32.mxu0 0.0
      %1146 = vmatmul.mubr.f32.gmra.mrb[0].mxu0 %v1016
      %v1147 = vpop.f32.mrb[0].mxu0
      %v1148 = vadd.f32 %v1068, %v1147
      %v1149 = vpop.f32.mrb[0].mxu0
      %v1150 = vadd.f32 %v1072, %v1149
      %1151 = vmatprep.mubr.f32.mxu0 0.0
      %1152 = vmatmul.mubr.f32.gmra.mrb[0].mxu0 %v1017
      %v1153 = vpop.f32.mrb[0].mxu0
      %v1154 = vadd.f32 %v1068, %v1153
      %v1155 = vpop.f32.mrb[0].mxu0
      %v1156 = vadd.f32 %v1072, %v1155
      %1157 = vmatprep.mubr.f32.mxu0 0.0
      %1158 = vmatmul.mubr.f32.gmra.mrb[0].mxu0 %v1018
      %v1159 = vpop.f32.mrb[0].mxu0
      %v1160 = vadd.f32 %v1068, %v1159
      %v1161 = vpop.f32.mrb[0].mxu0
      %v1162 = vadd.f32 %v1072, %v1161
      %1163 = vmatprep.mubr.f32.mxu0 0.0
      %1164 = vmatmul.mubr.f32.gmra.mrb[0].mxu0 %v1019
      %v1165 = vpop.f32.mrb[0].mxu0
      %v1166 = vadd.f32 %v1068, %v1165
      %v1167 = vpop.f32.mrb[0].mxu0
      %v1168 = vadd.f32 %v1072, %v1167
      %1169 = vmatprep.mubr.f32.mxu0 0.0
      %1170 = vmatmul.mubr.f32.gmra.mrb[0].mxu0 %v1020
      %v1171 = vpop.f32.mrb[0].mxu0
      %v1172 = vadd.f32 %v1068, %v1171
      %v1173 = vpop.f32.mrb[0].mxu0
      %v1174 = vadd.f32 %v1072, %v1173
      %1175 = vmatprep.mubr.f32.mxu0 0.0
      %1176 = vmatmul.mubr.f32.gmra.mrb[0].mxu0 %v1021
      %v1177 = vpop.f32.mrb[0].mxu0
      %v1178 = vadd.f32 %v1068, %v1177
      %v1179 = vpop.f32.mrb[0].mxu0
      %v1180 = vadd.f32 %v1072, %v1179
      %1181 = vmatprep.mubr.f32.mxu0 0.0
      %1182 = vmatmul.mubr.f32.gmra.mrb[0].mxu0 %v1022
      %v1183 = vpop.f32.mrb[0].mxu0
      %v1184 = vadd.f32 %v1068, %v1183
      %v1185 = vpop.f32.mrb[0].mxu0
      %v1186 = vadd.f32 %v1072, %v1185
      %1187 = vmatprep.mubr.f32.mxu0 0.0
      %1188 = vmatmul.mubr.f32.gmra.mrb[0].mxu0 %v1023
      %v1189 = vpop.f32.mrb[0].mxu0
      %v1190 = vadd.f32 %v1068, %v1189
      %v1191 = vpop.f32.mrb[0].mxu0
      %v1192 = vadd.f32 %v1072, %v1191
      %1193 = vmatprep.mubr.f32.mxu0 0.0
      %1194 = vmatmul.mubr.f32.gmra.mrb[0].mxu0 %v1024
      %v1195 = vpop.f32.mrb[0].mxu0
      %v1196 = vadd.f32 %v1068, %v1195
      %v1197 = vpop.f32.mrb[0].mxu0
      %v1198 = vadd.f32 %v1072, %v1197
      %1199 = vmatprep.mubr.f32.mxu0 0.0
      %1200 = vmatmul.mubr.f32.gmra.mrb[0].mxu0 %v1025
      %v1201 = vpop.f32.mrb[0].mxu0
      %v1202 = vadd.f32 %v1068, %v1201
      %v1203 = vpop.f32.mrb[0].mxu0
      %v1204 = vadd.f32 %v1072, %v1203
      %1205 = vmatprep.mubr.f32.mxu0 0.0
      %1206 = vmatmul.mubr.f32.gmra.mrb[0].mxu0 %v1026
      %v1207 = vpop.f32.mrb[0].mxu0
      %v1208 = vadd.f32 %v1068, %v1207
      %v1209 = vpop.f32.mrb[0].mxu0
      %v1210 = vadd.f32 %v1072, %v1209
      %1211 = vmatprep.mubr.f32.mxu0 0.0
      %1212 = vmatmul.mubr.f32.gmra.mrb[0].mxu0 %v1027
      %v1213 = vpop.f32.mrb[0].mxu0
      %v1214 = vadd.f32 %v1068, %v1213
      %v1215 = vpop.f32.mrb[0].mxu0
      %v1216 = vadd.f32 %v1072, %v1215
      %1217 = vmatprep.mubr.f32.mxu0 0.0
      %1218 = vmatmul.mubr.f32.gmra.mrb[0].mxu0 %v1028
      %v1219 = vpop.f32.mrb[0].mxu0
      %v1220 = vadd.f32 %v1068, %v1219
      %v1221 = vpop.f32.mrb[0].mxu0
      %v1222 = vadd.f32 %v1072, %v1221
      %1223 = vmatprep.mubr.f32.mxu0 0.0
      %1224 = vmatmul.mubr.f32.gmra.mrb[0].mxu0 %v1029
      %v1225 = vpop.f32.mrb[0].mxu0
      %v1226 = vadd.f32 %v1068, %v1225
      %v1227 = vpop.f32.mrb[0].mxu0
      %v1228 = vadd.f32 %v1072, %v1227
      %1229 = vmatprep.mubr.f32.mxu0 0.0
      %1230 = vmatmul.mubr.f32.gmra.mrb[0].mxu0 %v1030
      %v1231 = vpop.f32.mrb[0].mxu0
      %v1232 = vadd.f32 %v1068, %v1231
      %v1233 = vpop.f32.mrb[0].mxu0
      %v1234 = vadd.f32 %v1072, %v1233
      %1235 = vdwg.mxu0
      %v1236 = vld [vmem:[%s8] sm:$0xff]
      %v1237 = vld [vmem:[%s8 + $0x8] sm:$0xff]
      %v1238 = vld [vmem:[%s8 + $0x10] sm:$0xff]
      %v1239 = vld [vmem:[%s8 + $0x18] sm:$0xff]
      %v1240 = vld [vmem:[%s8 + $0x20] sm:$0xff]
      %v1241 = vld [vmem:[%s8 + $0x28] sm:$0xff]
      %v1242 = vld [vmem:[%s8 + $0x30] sm:$0xff]
      %v1243 = vld [vmem:[%s8 + $0x38] sm:$0xff]
      %vm1244 = vcmask 261120
      %v1246 = vsel %vm1244, %v715, 0
      %v1249 = vsel %vm1244, %v720, 0
      %v1252 = vsel %vm1244, %v725, 0
      %v1255 = vsel %vm1244, %v730, 0
      %v1258 = vsel %vm1244, %v735, 0
      %v1261 = vsel %vm1244, %v740, 0
      %v1264 = vsel %vm1244, %v745, 0
      %v1267 = vsel %vm1244, %v750, 0
      %v1270 = vsel %vm1244, %v755, 0
      %v1273 = vsel %vm1244, %v760, 0
      %v1276 = vsel %vm1244, %v765, 0
      %v1279 = vsel %vm1244, %v770, 0
      %v1282 = vsel %vm1244, %v775, 0
      %v1285 = vsel %vm1244, %v780, 0
      %v1288 = vsel %vm1244, %v785, 0
      %v1291 = vsel %vm1244, %v790, 0
      %1293 = vmatprep.subr.mxu0 %v1237
      %1294 = vmatpush1.msra.mxu0 %v1236
      %1295 = vmatprep.subr.mxu0 %v1239
      %1296 = vmatpush1.msra.mxu0 %v1238
      %1297 = vmatprep.subr.mxu0 %v1241
      %1298 = vmatpush1.msra.mxu0 %v1240
      %1299 = vmatprep.subr.mxu0 %v1243
      %1300 = vmatpush1.msra.mxu0 %v1242
      %1301 = vmatprep.subr.mxu0 0.0
      %1302 = vmatpush1.msra.mxu0 0.0
      %1303 = vmatprep.subr.mxu0 0.0
      %1304 = vmatpush1.msra.mxu0 0.0
      %1305 = vmatprep.subr.mxu0 0.0
      %1306 = vmatpush1.msra.mxu0 0.0
      %1307 = vmatprep.subr.mxu0 0.0
      %1308 = vmatpush1.msra.mxu0 0.0
      %1309 = vmatprep.subr.mxu0 0.0
      %1310 = vmatpush1.msra.mxu0 0.0
      %1311 = vmatprep.subr.mxu0 0.0
      %1312 = vmatpush1.msra.mxu0 0.0
      %1313 = vmatprep.subr.mxu0 0.0
      %1314 = vmatpush1.msra.mxu0 0.0
      %1315 = vmatprep.subr.mxu0 0.0
      %1316 = vmatpush1.msra.mxu0 0.0
      %1317 = vmatprep.subr.mxu0 0.0
      %1318 = vmatpush1.msra.mxu0 0.0
      %1319 = vmatprep.subr.mxu0 0.0
      %1320 = vmatpush1.msra.mxu0 0.0
      %1321 = vmatprep.subr.mxu0 0.0
      %1322 = vmatpush1.msra.mxu0 0.0
      %1323 = vmatprep.subr.mxu0 0.0
      %1324 = vmatpush1.msra.mxu0 0.0
      %1325 = vmatprep.subr.mxu0 0.0
      %1326 = vmatpush1.msra.mxu0 0.0
      %1327 = vmatprep.subr.mxu0 0.0
      %1328 = vmatpush1.msra.mxu0 0.0
      %1329 = vmatprep.subr.mxu0 0.0
      %1330 = vmatpush1.msra.mxu0 0.0
      %1331 = vmatprep.subr.mxu0 0.0
      %1332 = vmatpush1.msra.mxu0 0.0
      %1333 = vmatprep.subr.mxu0 0.0
      %1334 = vmatpush1.msra.mxu0 0.0
      %1335 = vmatprep.subr.mxu0 0.0
      %1336 = vmatpush1.msra.mxu0 0.0
      %1337 = vmatprep.subr.mxu0 0.0
      %1338 = vmatpush1.msra.mxu0 0.0
      %1339 = vmatprep.subr.mxu0 0.0
      %1340 = vmatpush1.msra.mxu0 0.0
      %1341 = vmatprep.subr.mxu0 0.0
      %1342 = vmatpush1.msra.mxu0 0.0
      %1343 = vmatprep.subr.mxu0 0.0
      %1344 = vmatpush1.msra.mxu0 0.0
      %1345 = vmatprep.subr.mxu0 0.0
      %1346 = vmatpush1.msra.mxu0 0.0
      %1347 = vmatprep.subr.mxu0 0.0
      %1348 = vmatpush1.msra.mxu0 0.0
      %1349 = vmatprep.subr.mxu0 0.0
      %1350 = vmatpush1.msra.mxu0 0.0
      %1351 = vmatprep.subr.mxu0 0.0
      %1352 = vmatpush1.msra.mxu0 0.0
      %1353 = vmatprep.subr.mxu0 0.0
      %1354 = vmatpush1.msra.mxu0 0.0
      %1355 = vmatprep.subr.mxu0 0.0
      %1356 = vmatpush1.msra.mxu0 0.0
      %1357 = vmatprep.mubr.f32.mxu0 0.0
      %1358 = vmatmul.mubr.f32.gmra.mrb[0].mxu0 %v1246
      %v1359 = vpop.f32.mrb[0].mxu0
      %v1360 = vadd.f32 0.0, %v1359
      %v1361 = vpop.f32.mrb[0].mxu0
      %v1362 = vadd.f32 0.0, %v1361
      %1363 = vmatprep.mubr.f32.mxu0 0.0
      %1364 = vmatmul.mubr.f32.gmra.mrb[0].mxu0 %v1249
      %v1365 = vpop.f32.mrb[0].mxu0
      %v1366 = vadd.f32 0.0, %v1365
      %v1367 = vpop.f32.mrb[0].mxu0
      %v1368 = vadd.f32 0.0, %v1367
      %1369 = vmatprep.mubr.f32.mxu0 0.0
      %1370 = vmatmul.mubr.f32.gmra.mrb[0].mxu0 %v1252
      %v1371 = vpop.f32.mrb[0].mxu0
      %v1372 = vadd.f32 0.0, %v1371
      %v1373 = vpop.f32.mrb[0].mxu0
      %v1374 = vadd.f32 0.0, %v1373
      %1375 = vmatprep.mubr.f32.mxu0 0.0
      %1376 = vmatmul.mubr.f32.gmra.mrb[0].mxu0 %v1255
      %v1377 = vpop.f32.mrb[0].mxu0
      %v1378 = vadd.f32 0.0, %v1377
      %v1379 = vpop.f32.mrb[0].mxu0
      %v1380 = vadd.f32 0.0, %v1379
      %1381 = vmatprep.mubr.f32.mxu0 0.0
      %1382 = vmatmul.mubr.f32.gmra.mrb[0].mxu0 %v1258
      %v1383 = vpop.f32.mrb[0].mxu0
      %v1384 = vadd.f32 0.0, %v1383
      %v1385 = vpop.f32.mrb[0].mxu0
      %v1386 = vadd.f32 0.0, %v1385
      %1387 = vmatprep.mubr.f32.mxu0 0.0
      %1388 = vmatmul.mubr.f32.gmra.mrb[0].mxu0 %v1261
      %v1389 = vpop.f32.mrb[0].mxu0
      %v1390 = vadd.f32 0.0, %v1389
      %v1391 = vpop.f32.mrb[0].mxu0
      %v1392 = vadd.f32 0.0, %v1391
      %1393 = vmatprep.mubr.f32.mxu0 0.0
      %1394 = vmatmul.mubr.f32.gmra.mrb[0].mxu0 %v1264
      %v1395 = vpop.f32.mrb[0].mxu0
      %v1396 = vadd.f32 0.0, %v1395
      %v1397 = vpop.f32.mrb[0].mxu0
      %v1398 = vadd.f32 0.0, %v1397
      %1399 = vmatprep.mubr.f32.mxu0 0.0
      %1400 = vmatmul.mubr.f32.gmra.mrb[0].mxu0 %v1267
      %v1401 = vpop.f32.mrb[0].mxu0
      %v1402 = vadd.f32 0.0, %v1401
      %v1403 = vpop.f32.mrb[0].mxu0
      %v1404 = vadd.f32 0.0, %v1403
      %1405 = vmatprep.mubr.f32.mxu0 0.0
      %1406 = vmatmul.mubr.f32.gmra.mrb[0].mxu0 %v1270
      %v1407 = vpop.f32.mrb[0].mxu0
      %v1408 = vadd.f32 0.0, %v1407
      %v1409 = vpop.f32.mrb[0].mxu0
      %v1410 = vadd.f32 0.0, %v1409
      %1411 = vmatprep.mubr.f32.mxu0 0.0
      %1412 = vmatmul.mubr.f32.gmra.mrb[0].mxu0 %v1273
      %v1413 = vpop.f32.mrb[0].mxu0
      %v1414 = vadd.f32 0.0, %v1413
      %v1415 = vpop.f32.mrb[0].mxu0
      %v1416 = vadd.f32 0.0, %v1415
      %1417 = vmatprep.mubr.f32.mxu0 0.0
      %1418 = vmatmul.mubr.f32.gmra.mrb[0].mxu0 %v1276
      %v1419 = vpop.f32.mrb[0].mxu0
      %v1420 = vadd.f32 0.0, %v1419
      %v1421 = vpop.f32.mrb[0].mxu0
      %v1422 = vadd.f32 0.0, %v1421
      %1423 = vmatprep.mubr.f32.mxu0 0.0
      %1424 = vmatmul.mubr.f32.gmra.mrb[0].mxu0 %v1279
      %v1425 = vpop.f32.mrb[0].mxu0
      %v1426 = vadd.f32 0.0, %v1425
      %v1427 = vpop.f32.mrb[0].mxu0
      %v1428 = vadd.f32 0.0, %v1427
      %1429 = vmatprep.mubr.f32.mxu0 0.0
      %1430 = vmatmul.mubr.f32.gmra.mrb[0].mxu0 %v1282
      %v1431 = vpop.f32.mrb[0].mxu0
      %v1432 = vadd.f32 0.0, %v1431
      %v1433 = vpop.f32.mrb[0].mxu0
      %v1434 = vadd.f32 0.0, %v1433
      %1435 = vmatprep.mubr.f32.mxu0 0.0
      %1436 = vmatmul.mubr.f32.gmra.mrb[0].mxu0 %v1285
      %v1437 = vpop.f32.mrb[0].mxu0
      %v1438 = vadd.f32 0.0, %v1437
      %v1439 = vpop.f32.mrb[0].mxu0
      %v1440 = vadd.f32 0.0, %v1439
      %1441 = vmatprep.mubr.f32.mxu0 0.0
      %1442 = vmatmul.mubr.f32.gmra.mrb[0].mxu0 %v1288
      %v1443 = vpop.f32.mrb[0].mxu0
      %v1444 = vadd.f32 0.0, %v1443
      %v1445 = vpop.f32.mrb[0].mxu0
      %v1446 = vadd.f32 0.0, %v1445
      %1447 = vmatprep.mubr.f32.mxu0 0.0
      %1448 = vmatmul.mubr.f32.gmra.mrb[0].mxu0 %v1291
      %v1449 = vpop.f32.mrb[0].mxu0
      %v1450 = vadd.f32 0.0, %v1449
      %v1451 = vpop.f32.mrb[0].mxu0
      %v1452 = vadd.f32 0.0, %v1451
      %1453 = vdwg.mxu0
      %v1454 = vmul.f32 %v1142, %v1360
      %v1455 = vmul.f32 %v1144, %v1362
      %v1456 = vmul.f32 %v1148, %v1366
      %v1457 = vmul.f32 %v1150, %v1368
      %v1458 = vmul.f32 %v1154, %v1372
      %v1459 = vmul.f32 %v1156, %v1374
      %v1460 = vmul.f32 %v1160, %v1378
      %v1461 = vmul.f32 %v1162, %v1380
      %v1462 = vmul.f32 %v1166, %v1384
      %v1463 = vmul.f32 %v1168, %v1386
      %v1464 = vmul.f32 %v1172, %v1390
      %v1465 = vmul.f32 %v1174, %v1392
      %v1466 = vmul.f32 %v1178, %v1396
      %v1467 = vmul.f32 %v1180, %v1398
      %v1468 = vmul.f32 %v1184, %v1402
      %v1469 = vmul.f32 %v1186, %v1404
      %v1470 = vmul.f32 %v1190, %v1408
      %v1471 = vmul.f32 %v1192, %v1410
      %v1472 = vmul.f32 %v1196, %v1414
      %v1473 = vmul.f32 %v1198, %v1416
      %v1474 = vmul.f32 %v1202, %v1420
      %v1475 = vmul.f32 %v1204, %v1422
      %v1476 = vmul.f32 %v1208, %v1426
      %v1477 = vmul.f32 %v1210, %v1428
      %v1478 = vmul.f32 %v1214, %v1432
      %v1479 = vmul.f32 %v1216, %v1434
      %v1480 = vmul.f32 %v1220, %v1438
      %v1481 = vmul.f32 %v1222, %v1440
      %v1482 = vmul.f32 %v1226, %v1444
      %v1483 = vmul.f32 %v1228, %v1446
      %v1484 = vmul.f32 %v1232, %v1450
      %v1485 = vmul.f32 %v1234, %v1452
      %v1486 = vld [vmem:[%s9] sm:$0xff]
      %v1487 = vld [vmem:[%s9 + $0x8] sm:$0xff]
      %v1488 = vld [vmem:[%s9 + $0x10] sm:$0xff]
      %v1489 = vld [vmem:[%s9 + $0x18] sm:$0xff]
      %v1490 = vld [vmem:[%s9 + $0x20] sm:$0xff]
      %v1491 = vld [vmem:[%s9 + $0x28] sm:$0xff]
      %v1492 = vld [vmem:[%s9 + $0x30] sm:$0xff]
      %v1493 = vld [vmem:[%s9 + $0x38] sm:$0xff]
      %v1494 = vld [vmem:[%s9 + $0x40] sm:$0xff]
      %v1495 = vld [vmem:[%s9 + $0x48] sm:$0xff]
      %v1496 = vld [vmem:[%s9 + $0x50] sm:$0xff]
      %v1497 = vld [vmem:[%s9 + $0x58] sm:$0xff]
      %v1498 = vld [vmem:[%s9 + $0x60] sm:$0xff]
      %v1499 = vld [vmem:[%s9 + $0x68] sm:$0xff]
      %v1500 = vld [vmem:[%s9 + $0x70] sm:$0xff]
      %v1501 = vld [vmem:[%s9 + $0x78] sm:$0xff]
      %v1502 = vld [vmem:[%s9 + $0x80] sm:$0xff]
      %v1503 = vld [vmem:[%s9 + $0x88] sm:$0xff]
      %v1504 = vld [vmem:[%s9 + $0x90] sm:$0xff]
      %v1505 = vld [vmem:[%s9 + $0x98] sm:$0xff]
      %v1506 = vld [vmem:[%s9 + $0xa0] sm:$0xff]
      %v1507 = vld [vmem:[%s9 + $0xa8] sm:$0xff]
      %v1508 = vld [vmem:[%s9 + $0xb0] sm:$0xff]
      %v1509 = vld [vmem:[%s9 + $0xb8] sm:$0xff]
      %v1510 = vld [vmem:[%s9 + $0xc0] sm:$0xff]
      %v1511 = vld [vmem:[%s9 + $0xc8] sm:$0xff]
      %v1512 = vld [vmem:[%s9 + $0xd0] sm:$0xff]
      %v1513 = vld [vmem:[%s9 + $0xd8] sm:$0xff]
      %v1514 = vld [vmem:[%s9 + $0xe0] sm:$0xff]
      %v1515 = vld [vmem:[%s9 + $0xe8] sm:$0xff]
      %v1516 = vld [vmem:[%s9 + $0xf0] sm:$0xff]
      %v1517 = vld [vmem:[%s9 + $0xf8] sm:$0xff]
      %1518 = vmatprep.subr.mxu0 0.0
      %1519 = vmatpush1.msra.mxu0 %v1486
      %1520 = vmatprep.subr.mxu0 0.0
      %1521 = vmatpush1.msra.mxu0 %v1487
      %1522 = vmatprep.subr.mxu0 0.0
      %1523 = vmatpush1.msra.mxu0 %v1488
      %1524 = vmatprep.subr.mxu0 0.0
      %1525 = vmatpush1.msra.mxu0 %v1489
      %1526 = vmatprep.subr.mxu0 0.0
      %1527 = vmatpush1.msra.mxu0 %v1490
      %1528 = vmatprep.subr.mxu0 0.0
      %1529 = vmatpush1.msra.mxu0 %v1491
      %1530 = vmatprep.subr.mxu0 0.0
      %1531 = vmatpush1.msra.mxu0 %v1492
      %1532 = vmatprep.subr.mxu0 0.0
      %1533 = vmatpush1.msra.mxu0 %v1493
      %1534 = vmatprep.subr.mxu0 0.0
      %1535 = vmatpush1.msra.mxu0 %v1494
      %1536 = vmatprep.subr.mxu0 0.0
      %1537 = vmatpush1.msra.mxu0 %v1495
      %1538 = vmatprep.subr.mxu0 0.0
      %1539 = vmatpush1.msra.mxu0 %v1496
      %1540 = vmatprep.subr.mxu0 0.0
      %1541 = vmatpush1.msra.mxu0 %v1497
      %1542 = vmatprep.subr.mxu0 0.0
      %1543 = vmatpush1.msra.mxu0 %v1498
      %1544 = vmatprep.subr.mxu0 0.0
      %1545 = vmatpush1.msra.mxu0 %v1499
      %1546 = vmatprep.subr.mxu0 0.0
      %1547 = vmatpush1.msra.mxu0 %v1500
      %1548 = vmatprep.subr.mxu0 0.0
      %1549 = vmatpush1.msra.mxu0 %v1501
      %1550 = vmatprep.subr.mxu0 0.0
      %1551 = vmatpush1.msra.mxu0 %v1502
      %1552 = vmatprep.subr.mxu0 0.0
      %1553 = vmatpush1.msra.mxu0 %v1503
      %1554 = vmatprep.subr.mxu0 0.0
      %1555 = vmatpush1.msra.mxu0 %v1504
      %1556 = vmatprep.subr.mxu0 0.0
      %1557 = vmatpush1.msra.mxu0 %v1505
      %1558 = vmatprep.subr.mxu0 0.0
      %1559 = vmatpush1.msra.mxu0 %v1506
      %1560 = vmatprep.subr.mxu0 0.0
      %1561 = vmatpush1.msra.mxu0 %v1507
      %1562 = vmatprep.subr.mxu0 0.0
      %1563 = vmatpush1.msra.mxu0 %v1508
      %1564 = vmatprep.subr.mxu0 0.0
      %1565 = vmatpush1.msra.mxu0 %v1509
      %1566 = vmatprep.subr.mxu0 0.0
      %1567 = vmatpush1.msra.mxu0 %v1510
      %1568 = vmatprep.subr.mxu0 0.0
      %1569 = vmatpush1.msra.mxu0 %v1511
      %1570 = vmatprep.subr.mxu0 0.0
      %1571 = vmatpush1.msra.mxu0 %v1512
      %1572 = vmatprep.subr.mxu0 0.0
      %1573 = vmatpush1.msra.mxu0 %v1513
      %1574 = vmatprep.subr.mxu0 0.0
      %1575 = vmatpush1.msra.mxu0 %v1514
      %1576 = vmatprep.subr.mxu0 0.0
      %1577 = vmatpush1.msra.mxu0 %v1515
      %1578 = vmatprep.subr.mxu0 0.0
      %1579 = vmatpush1.msra.mxu0 %v1516
      %1580 = vmatprep.subr.mxu0 0.0
      %1581 = vmatpush1.msra.mxu0 %v1517
      %1582 = vmatprep.mubr.f32.mxu0 %v1455
      %1583 = vmatmul.mubr.f32.gmra.mrb[0].mxu0 %v1454
      %v1584 = vpop.f32.mrb[0].mxu0
      %v1585 = vadd.f32 0.0, %v1584
      %v1586 = vpop.f32.mrb[0].mxu0
      %1587 = vmatprep.mubr.f32.mxu0 %v1457
      %1588 = vmatmul.mubr.f32.gmra.mrb[0].mxu0 %v1456
      %v1589 = vpop.f32.mrb[0].mxu0
      %v1590 = vadd.f32 0.0, %v1589
      %v1591 = vpop.f32.mrb[0].mxu0
      %1592 = vmatprep.mubr.f32.mxu0 %v1459
      %1593 = vmatmul.mubr.f32.gmra.mrb[0].mxu0 %v1458
      %v1594 = vpop.f32.mrb[0].mxu0
      %v1595 = vadd.f32 0.0, %v1594
      %v1596 = vpop.f32.mrb[0].mxu0
      %1597 = vmatprep.mubr.f32.mxu0 %v1461
      %1598 = vmatmul.mubr.f32.gmra.mrb[0].mxu0 %v1460
      %v1599 = vpop.f32.mrb[0].mxu0
      %v1600 = vadd.f32 0.0, %v1599
      %v1601 = vpop.f32.mrb[0].mxu0
      %1602 = vmatprep.mubr.f32.mxu0 %v1463
      %1603 = vmatmul.mubr.f32.gmra.mrb[0].mxu0 %v1462
      %v1604 = vpop.f32.mrb[0].mxu0
      %v1605 = vadd.f32 0.0, %v1604
      %v1606 = vpop.f32.mrb[0].mxu0
      %1607 = vmatprep.mubr.f32.mxu0 %v1465
      %1608 = vmatmul.mubr.f32.gmra.mrb[0].mxu0 %v1464
      %v1609 = vpop.f32.mrb[0].mxu0
      %v1610 = vadd.f32 0.0, %v1609
      %v1611 = vpop.f32.mrb[0].mxu0
      %1612 = vmatprep.mubr.f32.mxu0 %v1467
      %1613 = vmatmul.mubr.f32.gmra.mrb[0].mxu0 %v1466
      %v1614 = vpop.f32.mrb[0].mxu0
      %v1615 = vadd.f32 0.0, %v1614
      %v1616 = vpop.f32.mrb[0].mxu0
      %1617 = vmatprep.mubr.f32.mxu0 %v1469
      %1618 = vmatmul.mubr.f32.gmra.mrb[0].mxu0 %v1468
      %v1619 = vpop.f32.mrb[0].mxu0
      %v1620 = vadd.f32 0.0, %v1619
      %v1621 = vpop.f32.mrb[0].mxu0
      %1622 = vmatprep.mubr.f32.mxu0 %v1471
      %1623 = vmatmul.mubr.f32.gmra.mrb[0].mxu0 %v1470
      %v1624 = vpop.f32.mrb[0].mxu0
      %v1625 = vadd.f32 0.0, %v1624
      %v1626 = vpop.f32.mrb[0].mxu0
      %1627 = vmatprep.mubr.f32.mxu0 %v1473
      %1628 = vmatmul.mubr.f32.gmra.mrb[0].mxu0 %v1472
      %v1629 = vpop.f32.mrb[0].mxu0
      %v1630 = vadd.f32 0.0, %v1629
      %v1631 = vpop.f32.mrb[0].mxu0
      %1632 = vmatprep.mubr.f32.mxu0 %v1475
      %1633 = vmatmul.mubr.f32.gmra.mrb[0].mxu0 %v1474
      %v1634 = vpop.f32.mrb[0].mxu0
      %v1635 = vadd.f32 0.0, %v1634
      %v1636 = vpop.f32.mrb[0].mxu0
      %1637 = vmatprep.mubr.f32.mxu0 %v1477
      %1638 = vmatmul.mubr.f32.gmra.mrb[0].mxu0 %v1476
      %v1639 = vpop.f32.mrb[0].mxu0
      %v1640 = vadd.f32 0.0, %v1639
      %v1641 = vpop.f32.mrb[0].mxu0
      %1642 = vmatprep.mubr.f32.mxu0 %v1479
      %1643 = vmatmul.mubr.f32.gmra.mrb[0].mxu0 %v1478
      %v1644 = vpop.f32.mrb[0].mxu0
      %v1645 = vadd.f32 0.0, %v1644
      %v1646 = vpop.f32.mrb[0].mxu0
      %1647 = vmatprep.mubr.f32.mxu0 %v1481
      %1648 = vmatmul.mubr.f32.gmra.mrb[0].mxu0 %v1480
      %v1649 = vpop.f32.mrb[0].mxu0
      %v1650 = vadd.f32 0.0, %v1649
      %v1651 = vpop.f32.mrb[0].mxu0
      %1652 = vmatprep.mubr.f32.mxu0 %v1483
      %1653 = vmatmul.mubr.f32.gmra.mrb[0].mxu0 %v1482
      %v1654 = vpop.f32.mrb[0].mxu0
      %v1655 = vadd.f32 0.0, %v1654
      %v1656 = vpop.f32.mrb[0].mxu0
      %1657 = vmatprep.mubr.f32.mxu0 %v1485
      %1658 = vmatmul.mubr.f32.gmra.mrb[0].mxu0 %v1484
      %v1659 = vpop.f32.mrb[0].mxu0
      %v1660 = vadd.f32 0.0, %v1659
      %v1661 = vpop.f32.mrb[0].mxu0
      %1662 = vdwg.mxu0
      %v1663 = vlaneseq
      %v1664 = vshrl.u32 %v1663, 7
      %v1665 = vadd.s32 %v1664, 8
      %v1666 = vadd.s32 %v1664, 16
      %v1667 = vadd.s32 %v1664, 24
      %v1668 = vadd.s32 %v1664, 32
      %v1669 = vadd.s32 %v1664, 40
      %v1670 = vadd.s32 %v1664, 48
      %v1671 = vadd.s32 %v1664, 56
      %v1672 = vld [vmem:[%s457] sm:$0x1]
      %v1673 = vlaneseq
      %v1674 = vshrl.u32 %v1673, 7
      %v1675 = vsub.s32 0, %v1674
      %v1676 = vrot.slane %v1672, %v1675
      %vm1677 = vcmp.eq.s32.totalorder %v1664, %v1676
      %vm1678 = vcmp.eq.s32.totalorder %v1665, %v1676
      %vm1679 = vcmp.eq.s32.totalorder %v1666, %v1676
      %vm1680 = vcmp.eq.s32.totalorder %v1667, %v1676
      %vm1681 = vcmp.eq.s32.totalorder %v1668, %v1676
      %vm1682 = vcmp.eq.s32.totalorder %v1669, %v1676
      %vm1683 = vcmp.eq.s32.totalorder %v1670, %v1676
      %vm1684 = vcmp.eq.s32.totalorder %v1671, %v1676
      %v1685 = vsel %vm1677, 1, 0
      %v1686 = vsel %vm1678, 1, 0
      %v1687 = vsel %vm1679, 1, 0
      %v1688 = vsel %vm1680, 1, 0
      %v1689 = vsel %vm1681, 1, 0
      %v1690 = vsel %vm1682, 1, 0
      %v1691 = vsel %vm1683, 1, 0
      %v1692 = vsel %vm1684, 1, 0
      %v1693 = vcvt.s32.f32 %v1685
      %v1694 = vcvt.s32.f32 %v1686
      %v1695 = vcvt.s32.f32 %v1687
      %v1696 = vcvt.s32.f32 %v1688
      %v1697 = vcvt.s32.f32 %v1689
      %v1698 = vcvt.s32.f32 %v1690
      %v1699 = vcvt.s32.f32 %v1691
      %v1700 = vcvt.s32.f32 %v1692
      %v1701 = vld [vmem:[%s13] sm:$0xff]
      %v1702 = vld [vmem:[%s13 + $0x8] sm:$0xff]
      %v1703 = vld [vmem:[%s13 + $0x10] sm:$0xff]
      %v1704 = vld [vmem:[%s13 + $0x18] sm:$0xff]
      %v1705 = vld [vmem:[%s13 + $0x20] sm:$0xff]
      %v1706 = vld [vmem:[%s13 + $0x28] sm:$0xff]
      %v1707 = vld [vmem:[%s13 + $0x30] sm:$0xff]
      %v1708 = vld [vmem:[%s13 + $0x38] sm:$0xff]
      %1709 = vmatprep.subr.mxu0 0.0
      %1710 = vmatpush1.msra.mxu0 %v1585
      %1711 = vmatprep.subr.mxu0 0.0
      %1712 = vmatpush1.msra.mxu0 %v1590
      %1713 = vmatprep.subr.mxu0 0.0
      %1714 = vmatpush1.msra.mxu0 %v1595
      %1715 = vmatprep.subr.mxu0 0.0
      %1716 = vmatpush1.msra.mxu0 %v1600
      %1717 = vmatprep.subr.mxu0 0.0
      %1718 = vmatpush1.msra.mxu0 %v1605
      %1719 = vmatprep.subr.mxu0 0.0
      %1720 = vmatpush1.msra.mxu0 %v1610
      %1721 = vmatprep.subr.mxu0 0.0
      %1722 = vmatpush1.msra.mxu0 %v1615
      %1723 = vmatprep.subr.mxu0 0.0
      %1724 = vmatpush1.msra.mxu0 %v1620
      %1725 = vmatprep.subr.mxu0 0.0
      %1726 = vmatpush1.msra.mxu0 %v1625
      %1727 = vmatprep.subr.mxu0 0.0
      %1728 = vmatpush1.msra.mxu0 %v1630
      %1729 = vmatprep.subr.mxu0 0.0
      %1730 = vmatpush1.msra.mxu0 %v1635
      %1731 = vmatprep.subr.mxu0 0.0
      %1732 = vmatpush1.msra.mxu0 %v1640
      %1733 = vmatprep.subr.mxu0 0.0
      %1734 = vmatpush1.msra.mxu0 %v1645
      %1735 = vmatprep.subr.mxu0 0.0
      %1736 = vmatpush1.msra.mxu0 %v1650
      %1737 = vmatprep.subr.mxu0 0.0
      %1738 = vmatpush1.msra.mxu0 %v1655
      %1739 = vmatprep.subr.mxu0 0.0
      %1740 = vmatpush1.msra.mxu0 %v1660
      %1741 = vmatprep.subr.mxu0 0.0
      %1742 = vmatpush1.msra.mxu0 0.0
      %1743 = vmatprep.subr.mxu0 0.0
      %1744 = vmatpush1.msra.mxu0 0.0
      %1745 = vmatprep.subr.mxu0 0.0
      %1746 = vmatpush1.msra.mxu0 0.0
      %1747 = vmatprep.subr.mxu0 0.0
      %1748 = vmatpush1.msra.mxu0 0.0
      %1749 = vmatprep.subr.mxu0 0.0
      %1750 = vmatpush1.msra.mxu0 0.0
      %1751 = vmatprep.subr.mxu0 0.0
      %1752 = vmatpush1.msra.mxu0 0.0
      %1753 = vmatprep.subr.mxu0 0.0
      %1754 = vmatpush1.msra.mxu0 0.0
      %1755 = vmatprep.subr.mxu0 0.0
      %1756 = vmatpush1.msra.mxu0 0.0
      %1757 = vmatprep.subr.mxu0 0.0
      %1758 = vmatpush1.msra.mxu0 0.0
      %1759 = vmatprep.subr.mxu0 0.0
      %1760 = vmatpush1.msra.mxu0 0.0
      %1761 = vmatprep.subr.mxu0 0.0
      %1762 = vmatpush1.msra.mxu0 0.0
      %1763 = vmatprep.subr.mxu0 0.0
      %1764 = vmatpush1.msra.mxu0 0.0
      %1765 = vmatprep.subr.mxu0 0.0
      %1766 = vmatpush1.msra.mxu0 0.0
      %1767 = vmatprep.subr.mxu0 0.0
      %1768 = vmatpush1.msra.mxu0 0.0
      %1769 = vmatprep.subr.mxu0 0.0
      %1770 = vmatpush1.msra.mxu0 0.0
      %1771 = vmatprep.subr.mxu0 0.0
      %1772 = vmatpush1.msra.mxu0 0.0
      %1773 = vmatprep.mubr.f32.mxu0 0.0
      %1774 = vmatmul.mubr.f32.gmra.mrb[0].mxu0 %v1693
      %v1775 = vpop.f32.mrb[0].mxu0
      %v1776 = vadd.f32 0.0, %v1775
      %v1777 = vpop.f32.mrb[0].mxu0
      %1778 = vmatprep.mubr.f32.mxu0 0.0
      %1779 = vmatmul.mubr.f32.gmra.mrb[0].mxu0 %v1694
      %v1780 = vpop.f32.mrb[0].mxu0
      %v1781 = vadd.f32 0.0, %v1780
      %v1782 = vpop.f32.mrb[0].mxu0
      %1783 = vmatprep.mubr.f32.mxu0 0.0
      %1784 = vmatmul.mubr.f32.gmra.mrb[0].mxu0 %v1695
      %v1785 = vpop.f32.mrb[0].mxu0
      %v1786 = vadd.f32 0.0, %v1785
      %v1787 = vpop.f32.mrb[0].mxu0
      %1788 = vmatprep.mubr.f32.mxu0 0.0
      %1789 = vmatmul.mubr.f32.gmra.mrb[0].mxu0 %v1696
      %v1790 = vpop.f32.mrb[0].mxu0
      %v1791 = vadd.f32 0.0, %v1790
      %v1792 = vpop.f32.mrb[0].mxu0
      %1793 = vmatprep.mubr.f32.mxu0 0.0
      %1794 = vmatmul.mubr.f32.gmra.mrb[0].mxu0 %v1697
      %v1795 = vpop.f32.mrb[0].mxu0
      %v1796 = vadd.f32 0.0, %v1795
      %v1797 = vpop.f32.mrb[0].mxu0
      %1798 = vmatprep.mubr.f32.mxu0 0.0
      %1799 = vmatmul.mubr.f32.gmra.mrb[0].mxu0 %v1698
      %v1800 = vpop.f32.mrb[0].mxu0
      %v1801 = vadd.f32 0.0, %v1800
      %v1802 = vpop.f32.mrb[0].mxu0
      %1803 = vmatprep.mubr.f32.mxu0 0.0
      %1804 = vmatmul.mubr.f32.gmra.mrb[0].mxu0 %v1699
      %v1805 = vpop.f32.mrb[0].mxu0
      %v1806 = vadd.f32 0.0, %v1805
      %v1807 = vpop.f32.mrb[0].mxu0
      %1808 = vmatprep.mubr.f32.mxu0 0.0
      %1809 = vmatmul.mubr.f32.gmra.mrb[0].mxu0 %v1700
      %v1810 = vpop.f32.mrb[0].mxu0
      %v1811 = vadd.f32 0.0, %v1810
      %v1812 = vpop.f32.mrb[0].mxu0
      %1813 = vdwg.mxu0
      %v1814 = vadd.f32 %v1701, %v1776
      %v1815 = vadd.f32 %v1702, %v1781
      %v1816 = vadd.f32 %v1703, %v1786
      %v1817 = vadd.f32 %v1704, %v1791
      %v1818 = vadd.f32 %v1705, %v1796
      %v1819 = vadd.f32 %v1706, %v1801
      %v1820 = vadd.f32 %v1707, %v1806
      %v1821 = vadd.f32 %v1708, %v1811
      %1822 = vst.msk [vmem:[%s13] sm:$0xff] %vm1244, %v1814
      %1823 = vst.msk [vmem:[%s13 + $0x8] sm:$0xff] %vm1244, %v1815
      %1824 = vst.msk [vmem:[%s13 + $0x10] sm:$0xff] %vm1244, %v1816
      %1825 = vst.msk [vmem:[%s13 + $0x18] sm:$0xff] %vm1244, %v1817
      %1826 = vst.msk [vmem:[%s13 + $0x20] sm:$0xff] %vm1244, %v1818
      %1827 = vst.msk [vmem:[%s13 + $0x28] sm:$0xff] %vm1244, %v1819
      %1828 = vst.msk [vmem:[%s13 + $0x30] sm:$0xff] %vm1244, %v1820
      %1829 = vst.msk [vmem:[%s13 + $0x38] sm:$0xff] %vm1244, %v1821
      %p1830 = scmp.eq.s32.totalorder %s24, 1
      // Predicated region
      $region77: #{patch_gnp_forward.6} parent=71 // pred_check
        %p1831 = pneg %p1830
      $region78: #{patch_gnp_forward.6} parent=71 // pred_check_branch
        %1833 = sbr.rel (%p1831) target = $region80
      $region79: #{patch_gnp_forward.6} parent=71 // pred_region
        %v1834 = vld [vmem:[%s13] sm:$0xff]
        %v1835 = vld [vmem:[%s13 + $0x8] sm:$0xff]
        %v1836 = vld [vmem:[%s13 + $0x10] sm:$0xff]
        %v1837 = vld [vmem:[%s13 + $0x18] sm:$0xff]
        %v1838 = vld [vmem:[%s13 + $0x20] sm:$0xff]
        %v1839 = vld [vmem:[%s13 + $0x28] sm:$0xff]
        %v1840 = vld [vmem:[%s13 + $0x30] sm:$0xff]
        %v1841 = vld [vmem:[%s13 + $0x38] sm:$0xff]
        %v1842 = vld [vmem:[%s10] sm:$0xff]
        %v1843 = vld [vmem:[%s10 + $0x8] sm:$0xff]
        %v1844 = vld [vmem:[%s10 + $0x10] sm:$0xff]
        %v1845 = vld [vmem:[%s10 + $0x18] sm:$0xff]
        %v1846 = vld [vmem:[%s10 + $0x20] sm:$0xff]
        %v1847 = vld [vmem:[%s10 + $0x28] sm:$0xff]
        %v1848 = vld [vmem:[%s10 + $0x30] sm:$0xff]
        %v1849 = vld [vmem:[%s10 + $0x38] sm:$0xff]
        %1851 = vset.pattern.permute.xlu0 0
        %1852 = vperm.xlu0 %1851, %v1842
        %v1853 = vpop.permute.xlu0 %1852
        %1856 = vset.pattern.permute.xlu0 0
        %1857 = vperm.xlu0 %1856, %v1843
        %v1858 = vpop.permute.xlu0 %1857
        %1861 = vset.pattern.permute.xlu0 0
        %1862 = vperm.xlu0 %1861, %v1844
        %v1863 = vpop.permute.xlu0 %1862
        %1866 = vset.pattern.permute.xlu0 0
        %1867 = vperm.xlu0 %1866, %v1845
        %v1868 = vpop.permute.xlu0 %1867
        %1871 = vset.pattern.permute.xlu0 0
        %1872 = vperm.xlu0 %1871, %v1846
        %v1873 = vpop.permute.xlu0 %1872
        %1876 = vset.pattern.permute.xlu0 0
        %1877 = vperm.xlu0 %1876, %v1847
        %v1878 = vpop.permute.xlu0 %1877
        %1881 = vset.pattern.permute.xlu0 0
        %1882 = vperm.xlu0 %1881, %v1848
        %v1883 = vpop.permute.xlu0 %1882
        %1886 = vset.pattern.permute.xlu0 0
        %1887 = vperm.xlu0 %1886, %v1849
        %v1888 = vpop.permute.xlu0 %1887
        %v1890 = vmul.f32 %v1834, %v1853
        %v1891 = vmul.f32 %v1835, %v1858
        %v1892 = vmul.f32 %v1836, %v1863
        %v1893 = vmul.f32 %v1837, %v1868
        %v1894 = vmul.f32 %v1838, %v1873
        %v1895 = vmul.f32 %v1839, %v1878
        %v1896 = vmul.f32 %v1840, %v1883
        %v1897 = vmul.f32 %v1841, %v1888
        %v1898 = vld [vmem:[%s11] sm:$0xff]
        %v1899 = vld [vmem:[%s11 + $0x8] sm:$0xff]
        %v1900 = vld [vmem:[%s11 + $0x10] sm:$0xff]
        %v1901 = vld [vmem:[%s11 + $0x18] sm:$0xff]
        %v1902 = vld [vmem:[%s12] sm:$0x1]
        %v1904 = vlaneseq
        %v1905 = vshrl.u32 %v1904, 7
        %v1906 = vsub.s32 0, %v1905
        %v1907 = vrot.slane %v1902, %v1906
        %v1910 = vsel %vm1244, %v1890, 0
        %v1913 = vsel %vm1244, %v1891, 0
        %v1916 = vsel %vm1244, %v1892, 0
        %v1919 = vsel %vm1244, %v1893, 0
        %v1922 = vsel %vm1244, %v1894, 0
        %v1925 = vsel %vm1244, %v1895, 0
        %v1928 = vsel %vm1244, %v1896, 0
        %v1931 = vsel %vm1244, %v1897, 0
        %1933 = vmatprep.subr.mxu0 0.0
        %1934 = vmatpush1.msra.mxu0 %v1898
        %1935 = vmatprep.subr.mxu0 0.0
        %1936 = vmatpush1.msra.mxu0 %v1899
        %1937 = vmatprep.subr.mxu0 0.0
        %1938 = vmatpush1.msra.mxu0 %v1900
        %1939 = vmatprep.subr.mxu0 0.0
        %1940 = vmatpush1.msra.mxu0 %v1901
        %1941 = vmatprep.subr.mxu0 0.0
        %1942 = vmatpush1.msra.mxu0 0.0
        %1943 = vmatprep.subr.mxu0 0.0
        %1944 = vmatpush1.msra.mxu0 0.0
        %1945 = vmatprep.subr.mxu0 0.0
        %1946 = vmatpush1.msra.mxu0 0.0
        %1947 = vmatprep.subr.mxu0 0.0
        %1948 = vmatpush1.msra.mxu0 0.0
        %1949 = vmatprep.subr.mxu0 0.0
        %1950 = vmatpush1.msra.mxu0 0.0
        %1951 = vmatprep.subr.mxu0 0.0
        %1952 = vmatpush1.msra.mxu0 0.0
        %1953 = vmatprep.subr.mxu0 0.0
        %1954 = vmatpush1.msra.mxu0 0.0
        %1955 = vmatprep.subr.mxu0 0.0
        %1956 = vmatpush1.msra.mxu0 0.0
        %1957 = vmatprep.subr.mxu0 0.0
        %1958 = vmatpush1.msra.mxu0 0.0
        %1959 = vmatprep.subr.mxu0 0.0
        %1960 = vmatpush1.msra.mxu0 0.0
        %1961 = vmatprep.subr.mxu0 0.0
        %1962 = vmatpush1.msra.mxu0 0.0
        %1963 = vmatprep.subr.mxu0 0.0
        %1964 = vmatpush1.msra.mxu0 0.0
        %1965 = vmatprep.subr.mxu0 0.0
        %1966 = vmatpush1.msra.mxu0 0.0
        %1967 = vmatprep.subr.mxu0 0.0
        %1968 = vmatpush1.msra.mxu0 0.0
        %1969 = vmatprep.subr.mxu0 0.0
        %1970 = vmatpush1.msra.mxu0 0.0
        %1971 = vmatprep.subr.mxu0 0.0
        %1972 = vmatpush1.msra.mxu0 0.0
        %1973 = vmatprep.subr.mxu0 0.0
        %1974 = vmatpush1.msra.mxu0 0.0
        %1975 = vmatprep.subr.mxu0 0.0
        %1976 = vmatpush1.msra.mxu0 0.0
        %1977 = vmatprep.subr.mxu0 0.0
        %1978 = vmatpush1.msra.mxu0 0.0
        %1979 = vmatprep.subr.mxu0 0.0
        %1980 = vmatpush1.msra.mxu0 0.0
        %1981 = vmatprep.subr.mxu0 0.0
        %1982 = vmatpush1.msra.mxu0 0.0
        %1983 = vmatprep.subr.mxu0 0.0
        %1984 = vmatpush1.msra.mxu0 0.0
        %1985 = vmatprep.subr.mxu0 0.0
        %1986 = vmatpush1.msra.mxu0 0.0
        %1987 = vmatprep.subr.mxu0 0.0
        %1988 = vmatpush1.msra.mxu0 0.0
        %1989 = vmatprep.subr.mxu0 0.0
        %1990 = vmatpush1.msra.mxu0 0.0
        %1991 = vmatprep.subr.mxu0 0.0
        %1992 = vmatpush1.msra.mxu0 0.0
        %1993 = vmatprep.subr.mxu0 0.0
        %1994 = vmatpush1.msra.mxu0 0.0
        %1995 = vmatprep.subr.mxu0 0.0
        %1996 = vmatpush1.msra.mxu0 0.0
        %1997 = vmatprep.mubr.f32.mxu0 0.0
        %1998 = vmatmul.mubr.f32.gmra.mrb[0].mxu0 %v1910
        %v1999 = vpop.f32.mrb[0].mxu0
        %v2000 = vadd.f32 %v1907, %v1999
        %v2001 = vpop.f32.mrb[0].mxu0
        %2002 = vmatprep.mubr.f32.mxu0 0.0
        %2003 = vmatmul.mubr.f32.gmra.mrb[0].mxu0 %v1913
        %v2004 = vpop.f32.mrb[0].mxu0
        %v2005 = vadd.f32 %v1907, %v2004
        %v2006 = vpop.f32.mrb[0].mxu0
        %2007 = vmatprep.mubr.f32.mxu0 0.0
        %2008 = vmatmul.mubr.f32.gmra.mrb[0].mxu0 %v1916
        %v2009 = vpop.f32.mrb[0].mxu0
        %v2010 = vadd.f32 %v1907, %v2009
        %v2011 = vpop.f32.mrb[0].mxu0
        %2012 = vmatprep.mubr.f32.mxu0 0.0
        %2013 = vmatmul.mubr.f32.gmra.mrb[0].mxu0 %v1919
        %v2014 = vpop.f32.mrb[0].mxu0
        %v2015 = vadd.f32 %v1907, %v2014
        %v2016 = vpop.f32.mrb[0].mxu0
        %2017 = vmatprep.mubr.f32.mxu0 0.0
        %2018 = vmatmul.mubr.f32.gmra.mrb[0].mxu0 %v1922
        %v2019 = vpop.f32.mrb[0].mxu0
        %v2020 = vadd.f32 %v1907, %v2019
        %v2021 = vpop.f32.mrb[0].mxu0
        %2022 = vmatprep.mubr.f32.mxu0 0.0
        %2023 = vmatmul.mubr.f32.gmra.mrb[0].mxu0 %v1925
        %v2024 = vpop.f32.mrb[0].mxu0
        %v2025 = vadd.f32 %v1907, %v2024
        %v2026 = vpop.f32.mrb[0].mxu0
        %2027 = vmatprep.mubr.f32.mxu0 0.0
        %2028 = vmatmul.mubr.f32.gmra.mrb[0].mxu0 %v1928
        %v2029 = vpop.f32.mrb[0].mxu0
        %v2030 = vadd.f32 %v1907, %v2029
        %v2031 = vpop.f32.mrb[0].mxu0
        %2032 = vmatprep.mubr.f32.mxu0 0.0
        %2033 = vmatmul.mubr.f32.gmra.mrb[0].mxu0 %v1931
        %v2034 = vpop.f32.mrb[0].mxu0
        %v2035 = vadd.f32 %v1907, %v2034
        %v2036 = vpop.f32.mrb[0].mxu0
        %2037 = vdwg.mxu0
        %v2038 = vadd.f32 %v477, %v2000
        %v2039 = vadd.f32 %v478, %v2005
        %v2040 = vadd.f32 %v479, %v2010
        %v2041 = vadd.f32 %v480, %v2015
        %v2042 = vadd.f32 %v481, %v2020
        %v2043 = vadd.f32 %v482, %v2025
        %v2044 = vadd.f32 %v483, %v2030
        %v2045 = vadd.f32 %v484, %v2035
        %2046 = vst.msk [vmem:[%s13] sm:$0xff] %vm1244, %v2038
        %2047 = vst.msk [vmem:[%s13 + $0x8] sm:$0xff] %vm1244, %v2039
        %2048 = vst.msk [vmem:[%s13 + $0x10] sm:$0xff] %vm1244, %v2040
        %2049 = vst.msk [vmem:[%s13 + $0x18] sm:$0xff] %vm1244, %v2041
        %2050 = vst.msk [vmem:[%s13 + $0x20] sm:$0xff] %vm1244, %v2042
        %2051 = vst.msk [vmem:[%s13 + $0x28] sm:$0xff] %vm1244, %v2043
        %2052 = vst.msk [vmem:[%s13 + $0x30] sm:$0xff] %vm1244, %v2044
        %2053 = vst.msk [vmem:[%s13 + $0x38] sm:$0xff] %vm1244, %v2045
      $region80: #{patch_gnp_forward.6} parent=71 // pred_fallthru
        _
      // Predicated region
      $region81: #{patch_gnp_forward.6} parent=71 // pred_check
        %p2054 = pneg %p325
      $region82: #{patch_gnp_forward.6} parent=71 // pred_check_branch
        %2056 = sbr.rel (%p2054) target = $region84
      $region83: #{patch_gnp_forward.6} parent=71 // pred_region
        _
      $region84: #{patch_gnp_forward.6} parent=71 // pred_fallthru
        _
      // Predicated region
      $region85: #{patch_gnp_forward.6} parent=71 // pred_check
        %p2057 = pneg %p325
      $region86: #{patch_gnp_forward.6} parent=71 // pred_check_branch
        %2059 = sbr.rel (%p2057) target = $region88
      $region87: #{patch_gnp_forward.6} parent=71 // pred_region
        _
      $region88: #{patch_gnp_forward.6} parent=71 // pred_fallthru
        _
    $region72: #{patch_gnp_forward.6} parent=5 // pred_fallthru
      _
    %p2060 = scmp.le.s32.totalorder 2, %s19
    // Predicated region
    $region89: #{patch_gnp_forward.6} parent=5 // pred_check
      %p2061 = pneg %p2060
    $region90: #{patch_gnp_forward.6} parent=5 // pred_check_branch
      %2063 = sbr.rel (%p2061) target = $region92
    $region91: #{patch_gnp_forward.6} parent=5 // pred_region
      %s2064 = ssub.s32 %s19, 2
    $region92: #{patch_gnp_forward.6} parent=5 // pred_fallthru
      _
  $region6: #{patch_gnp_forward.6} parent=0 // loop_footer
    %s23 = sadd.s32 1, %s19
  $region7: #{patch_gnp_forward.6} parent=0 // loop_footer_branch
    %18 = sbr.rel target = $region3
  $region8: #{patch_gnp_forward.6} parent=0 // loop_exit
    _

</llo_original>
